<compile_context>
chip_gen: v7x
topology: tpu7x:2x2x1
jax: 0.10.0
libtpu: 0.0.40
codegen_flags: <defaults>
</compile_context>

<pallas_src>
import jax
import jax.numpy as jnp
from jax.experimental import pallas as pl
from jax.experimental.pallas import tpu as pltpu

# ---------------- config (small synthetic shapes) ----------------
B = 2              # batch
C_IN = 3           # image channels
H = W = 16         # image spatial size
P = 4              # patch size
HE = WE = H // P   # image-embedding spatial size (4 x 4)
S = HE * WE        # 16 image tokens
C = 32             # embedding dim
ENC_HID = 64       # encoder MLP hidden
DEC_HID = 64       # decoder MLP hidden
NUM_MASK_TOKENS = 4
C_UP1 = C // 2     # 16
C_UP2 = C // 4     # 8  (upscaled mask-embedding channels)
T = 8              # decoder tokens: iou + 4 mask + 2 box corners + 1 pad

assert ENC_HID == DEC_HID == 4 * C_UP1      # single width-64 weight slab
assert 4 * 4 * C_UP2 == 128                 # upscale output = one full lane tile


# ---------------- weight-slab row layouts (static, shared by init & kernel) --
def _layout(*sizes):
    offs, o = [], 0
    for s in sizes:
        offs.append(o)
        o += s
    return offs, o


def _pad8(n):
    return ((n + 7) // 8) * 8


(_w32_offs, _W32_ROWS) = _layout(
    P * P * C_IN, ENC_HID,
    C, C, C, C,          # sa  q k v o
    C, C, C, C,          # t2i q k v o
    C, C, C, C,          # i2t q k v o
    DEC_HID, C, S, 4, 4, 1)
(OFF_PATCH, OFF_ENC2,
 OFF_SA_Q, OFF_SA_K, OFF_SA_V, OFF_SA_O,
 OFF_T2I_Q, OFF_T2I_K, OFF_T2I_V, OFF_T2I_O,
 OFF_I2T_Q, OFF_I2T_K, OFF_I2T_V, OFF_I2T_O,
 OFF_DEC2, OFF_HYP1, OFF_PE, OFF_LN_G, OFF_LN_B, OFF_NOMASK) = _w32_offs
N32 = _pad8(_W32_ROWS)

(_w64_offs, _W64_ROWS) = _layout(C, C, C, 4 * C_UP1, 1, 1)
(OFF_ENC1, OFF_DEC1, OFF_UP1, OFF_AAVG, OFF_LNUP_G, OFF_LNUP_B) = _w64_offs
N64 = _pad8(_W64_ROWS)

(_w128_offs, _W128_ROWS) = _layout(4 * C_UP1, C, 4 * 4 * C_UP2)
(OFF_UP2BD, OFF_HYP2T, OFF_GSUM) = _w128_offs
N128 = _pad8(_W128_ROWS)


# ---------------- the single fused Pallas kernel ----------------
def _medsam_fused_kernel(xp_ref, tok_ref, w32_ref, w64_ref, w128_ref, out_ref):
    f32 = jnp.float32

    def dot(a, b):
        return jnp.dot(a, b, preferred_element_type=f32)

    def dot_nt(a, b):  # a @ b.T (contract last dim of both)
        return jnp.einsum("qd,kd->qk", a, b, preferred_element_type=f32)

    def layernorm(x, g, b, eps=1e-6):
        mu = jnp.mean(x, axis=-1, keepdims=True)
        xc = x - mu
        var = jnp.mean(xc * xc, axis=-1, keepdims=True)
        return xc * jax.lax.rsqrt(var + eps) * g + b

    # additive pad-key mask, built in-kernel (last of the T decoder tokens is pad)
    key_ids = jax.lax.broadcasted_iota(jnp.int32, (1, T), 1)
    kb = jnp.where(key_ids == T - 1, -1e30, 0.0).astype(f32)

    def attention(q, k, v, mask_pad_keys=False):
        # q is pre-scaled by 1/sqrt(d): the scale was folded into the Q weights.
        s = dot_nt(q, k)
        if mask_pad_keys:
            s = s + kb
        m = jnp.max(s, axis=-1, keepdims=True)
        p = jnp.exp(s - m)
        l = jnp.sum(p, axis=-1, keepdims=True)
        return dot(p, v) * pl.reciprocal(l, approx=True)

    w32 = lambda off, n: w32_ref[off:off + n, :]
    w64 = lambda off, n: w64_ref[off:off + n, :]
    w128 = lambda off, n: w128_ref[off:off + n, :]
    ln_g = lambda i: w32_ref[OFF_LN_G + i:OFF_LN_G + i + 1, :]
    ln_b = lambda i: w32_ref[OFF_LN_B + i:OFF_LN_B + i + 1, :]

    # ---- image encoder: patch embed + residual MLP ----
    t0 = dot(xp_ref[...], w32(OFF_PATCH, P * P * C_IN))            # (S, C)
    h = jax.nn.gelu(dot(t0, w64(OFF_ENC1, C)))                     # TODO(synk): tanh-approx gelu (PyTorch nn.GELU default is exact erf)
    h = dot(h, w32(OFF_ENC2, ENC_HID))
    src = t0 + h + w32(OFF_NOMASK, 1)                              # + dense no-mask prompt embed
    pos = w32(OFF_PE, S)                                           # (S, C) image positional enc.
    tokens = tok_ref[...]                                          # (T, C)

    # ---- token self-attention + residual + LN ----
    a = attention(dot(tokens, w32(OFF_SA_Q, C)),
                  dot(tokens, w32(OFF_SA_K, C)),
                  dot(tokens, w32(OFF_SA_V, C)), mask_pad_keys=True)
    tokens = layernorm(tokens + dot(a, w32(OFF_SA_O, C)), ln_g(0), ln_b(0))

    # ---- cross attention: tokens -> image ----
    a = attention(dot(tokens, w32(OFF_T2I_Q, C)),
                  dot(src + pos, w32(OFF_T2I_K, C)),
                  dot(src, w32(OFF_T2I_V, C)))
    tokens = layernorm(tokens + dot(a, w32(OFF_T2I_O, C)), ln_g(1), ln_b(1))

    # ---- token MLP ----
    m = dot(jax.nn.gelu(dot(tokens, w64(OFF_DEC1, C))), w32(OFF_DEC2, DEC_HID))
    tokens = layernorm(tokens + m, ln_g(2), ln_b(2))

    # ---- cross attention: image -> tokens ----
    a = attention(dot(src + pos, w32(OFF_I2T_Q, C)),
                  dot(tokens, w32(OFF_I2T_K, C)),
                  dot(tokens, w32(OFF_I2T_V, C)), mask_pad_keys=True)
    src = layernorm(src + dot(a, w32(OFF_I2T_O, C)), ln_g(3), ln_b(3))

    # ---- hypernetwork: mask token 0 only, output pre-tiled to 128 lanes ----
    mt0 = tokens[1:2, :]                                           # (1, C)
    hy = dot(jnp.maximum(dot(mt0, w32(OFF_HYP1, C)), 0.0),
             w128(OFF_HYP2T, C))                                   # (1, 128); lane l -> hyp[l % 8]

    # ---- output upscaling, fully vectorized (matmuls only) ----
    u1 = dot(src, w64(OFF_UP1, C))                                 # (S, 4*C_UP1) = (16, 64)
    a_avg = w64(OFF_AAVG, 4 * C_UP1)                               # block-diag group-averaging
    mu = dot(u1, a_avg)                                            # per-16-lane-group means
    e = u1 - mu
    var = dot(e * e, a_avg)                                        # per-group variances
    v1 = jax.nn.gelu(e * jax.lax.rsqrt(var + 1e-6)
                     * w64(OFF_LNUP_G, 1) + w64(OFF_LNUP_B, 1))    # grouped LN + gelu
    u2 = jax.nn.gelu(dot(v1, w128(OFF_UP2BD, 4 * C_UP1)))          # (S, 128) both 2x2 deconvs
    # per-(p1,p2) hypernetwork dot == broadcast multiply + group-sum matmul
    out_ref[...] = dot(u2 * hy, w128(OFF_GSUM, 4 * 4 * C_UP2))     # (S, 128); lanes 0..15 valid


# ---------------- JAX glue ----------------
def _pe_encoding(coords, gauss):
    """SAM PositionEmbeddingRandom: coords in [0,1], (...,2) -> (...,C)."""
    c = 2.0 * coords - 1.0
    c = c @ gauss
    c = 2.0 * jnp.pi * c
    return jnp.concatenate([jnp.sin(c), jnp.cos(c)], axis=-1)


def init_params(key):
    ks = jax.random.split(key, 20)
    f32 = jnp.float32

    def nrm(i, shape, scale=0.02):
        return scale * jax.random.normal(ks[i], shape, dtype=f32)

    # raw weights (all biases are zero in this synthetic model and are dropped)
    patch_w = nrm(0, (P * P * C_IN, C))
    enc1_w = nrm(1, (C, ENC_HID))
    enc2_w = nrm(2, (ENC_HID, C))
    pe_gauss = jax.random.normal(ks[3], (2, C // 2), dtype=f32)
    box_corner_embed = nrm(4, (2, C))
    no_mask_embed = nrm(5, (1, C))
    iou_token = nrm(6, (1, C))
    mask_tokens = nrm(7, (NUM_MASK_TOKENS, C))
    sa_qkv, sa_o = nrm(8, (C, 3 * C)), nrm(9, (C, C))
    t2i_qkv, t2i_o = nrm(10, (C, 3 * C)), nrm(11, (C, C))
    i2t_qkv, i2t_o = nrm(12, (C, 3 * C)), nrm(13, (C, C))
    dec1_w, dec2_w = nrm(14, (C, DEC_HID)), nrm(15, (DEC_HID, C))
    up1_w = nrm(16, (C, 4 * C_UP1))
    up2_w = nrm(17, (C_UP1, 4 * C_UP2))
    hyp1_w = nrm(18, (C, C))
    hyp2_w = nrm(19, (C, C_UP2))
    ln_g, ln_b = jnp.ones((4, C), f32), jnp.zeros((4, C), f32)
    lnup_g, lnup_b = jnp.ones((1, C_UP1), f32), jnp.zeros((1, C_UP1), f32)

    # dense positional encoding of the image-embedding grid (static -> slab)
    ys = (jnp.arange(HE, dtype=f32) + 0.5) / HE
    xs = (jnp.arange(WE, dtype=f32) + 0.5) / WE
    gx, gy = jnp.meshgrid(xs, ys)
    dense_pe = _pe_encoding(jnp.stack([gx, gy], -1), pe_gauss).reshape(S, C)

    # fold the 1/sqrt(d) attention scale into the Q projection weights
    sq = 1.0 / float(C) ** 0.5

    def qkv_split(w):
        return w[:, 0:C] * sq, w[:, C:2 * C], w[:, 2 * C:3 * C]

    sa_q, sa_k, sa_v = qkv_split(sa_qkv)
    t2i_q, t2i_k, t2i_v = qkv_split(t2i_qkv)
    i2t_q, i2t_k, i2t_v = qkv_split(i2t_qkv)

    def slab(parts, rows, cols):
        s = jnp.concatenate(parts, axis=0)
        return jnp.concatenate([s, jnp.zeros((rows - s.shape[0], cols), f32)], axis=0)

    # width-32 slab
    w32 = slab([patch_w, enc2_w,
                sa_q, sa_k, sa_v, sa_o,
                t2i_q, t2i_k, t2i_v, t2i_o,
                i2t_q, i2t_k, i2t_v, i2t_o,
                dec2_w, hyp1_w, dense_pe, ln_g, ln_b, no_mask_embed], N32, C)

    # width-64 slab (includes the constant block-diagonal group-averaging matrix)
    gi = jnp.arange(4 * C_UP1) // C_UP1
    a_avg = (gi[:, None] == gi[None, :]).astype(f32) / float(C_UP1)
    w64 = slab([enc1_w, dec1_w, up1_w, a_avg,
                jnp.tile(lnup_g, (1, 4)), jnp.tile(lnup_b, (1, 4))], N64, ENC_HID)

    # width-128 slab: block-diag 2nd deconv, lane-tiled hypernet head, group-sum matrix
    up2_bd = jnp.kron(jnp.eye(4, dtype=f32), up2_w)               # (64, 128)
    hyp2_t = jnp.tile(hyp2_w, (1, 4 * 4))                          # (C, 128)
    r = jnp.arange(4 * 4 * C_UP2)
    gsum = (r[:, None] // C_UP2 == r[None, :]).astype(f32)         # (128, 128), cols>=16 zero
    w128 = slab([up2_bd, hyp2_t, gsum], N128, 4 * 4 * C_UP2)

    return {"w32": w32, "w64": w64, "w128": w128,
            "pe_gauss": pe_gauss, "box_corner_embed": box_corner_embed,
            "iou_token": iou_token, "mask_tokens": mask_tokens}


def medsam_lite_forward(params, image, box):
    """image: (B, 3, H, W) NCHW float32; box: (B, 4) xyxy float32.
    Returns low_res_masks (B, 1, 4*HE, 4*WE) in NCHW, like the PyTorch module."""
    p = params
    Bn = image.shape[0]

    # patchify (image-encoder front end; pure layout, no compute)
    x = jnp.transpose(image, (0, 2, 3, 1))                        # NCHW -> NHWC
    x = x.reshape(Bn, HE, P, WE, P, C_IN)
    xpatch = jnp.transpose(x, (0, 1, 3, 2, 4, 5)).reshape(Bn * S, P * P * C_IN)

    # prompt-encoder glue (tiny sin/cos positional encodings for the box corners)
    coords = box.reshape(Bn, 2, 2) + 0.5
    coords = coords / jnp.array([W, H], jnp.float32)              # x/=W, y/=H
    sparse = _pe_encoding(coords, p["pe_gauss"]) + p["box_corner_embed"][None]   # (B,2,C)

    # decoder tokens: [iou, mask0..3, box corner 0, box corner 1, pad] -> T = 8
    out_tokens = jnp.concatenate([p["iou_token"], p["mask_tokens"]], axis=0)     # (5,C)
    tokens = jnp.concatenate(
        [jnp.broadcast_to(out_tokens[None], (Bn, 1 + NUM_MASK_TOKENS, C)),
         sparse,
         jnp.zeros((Bn, 1, C), jnp.float32)], axis=1).reshape(Bn * T, C)

    blk = pl.pallas_call(
        _medsam_fused_kernel,
        out_shape=jax.ShapeDtypeStruct((Bn * S, 4 * 4 * C_UP2), jnp.float32),
        grid_spec=pltpu.PrefetchScalarGridSpec(
            num_scalar_prefetch=0,
            grid=(Bn,),
            in_specs=[
                pl.BlockSpec((S, P * P * C_IN), lambda b: (b, 0)),   # per-batch patches
                pl.BlockSpec((T, C), lambda b: (b, 0)),              # per-batch tokens
                pl.BlockSpec((N32, C), lambda b: (0, 0)),            # resident weight slabs
                pl.BlockSpec((N64, ENC_HID), lambda b: (0, 0)),
                pl.BlockSpec((N128, 4 * 4 * C_UP2), lambda b: (0, 0)),
            ],
            out_specs=pl.BlockSpec((S, 4 * 4 * C_UP2), lambda b: (b, 0)),
        ),
        compiler_params=pltpu.CompilerParams(
            dimension_semantics=("parallel",)),
    )(xpatch, tokens, p["w32"], p["w64"], p["w128"])

    # lanes 0..15 carry the per-pixel 4x4 mask block; un-shuffle it (layout only)
    m = blk[:, :16].reshape(Bn, HE, WE, 2, 2, 2, 2)    # (b, h, w, dh1, dw1, dh2, dw2)
    m = jnp.transpose(m, (0, 1, 3, 5, 2, 4, 6))        # (b, h, dh1, dh2, w, dw1, dw2)
    low_res_masks = m.reshape(Bn, 1, 4 * HE, 4 * WE)   # y = 4h+2dh1+dh2, x = 4w+2dw1+dw2
    # TODO(synk): iou_prediction head omitted — MedSAM_Lite.forward only returns low_res_masks.
    # TODO(synk): postprocess_masks (bilinear F.interpolate) is not part of forward; not implemented.
    return low_res_masks


if __name__ == "__main__":
    key = jax.random.PRNGKey(0)
    k_img, k_par = jax.random.split(key, 2)
    params = init_params(k_par)

    image = jax.random.normal(k_img, (B, C_IN, H, W), jnp.float32)  # NCHW, like PyTorch
    box = jnp.stack([jnp.array([2.0, 3.0, 10.0, 12.0], jnp.float32),
                     jnp.array([1.0, 1.0, 14.0, 15.0], jnp.float32)])  # (B, 4) xyxy

    fwd = jax.jit(medsam_lite_forward)
    low_res_masks = fwd(params, image, box)
    jax.block_until_ready(low_res_masks)
    assert low_res_masks.shape == (B, 1, 4 * HE, 4 * WE), low_res_masks.shape
    assert low_res_masks.dtype == jnp.float32
    assert bool(jnp.all(jnp.isfinite(low_res_masks)))
    print("KERNEL_OK")
</pallas_src>

<mosaic_0001>
module attributes {stable_mosaic.version = 11 : i64} {
  func.func @_medsam_fused_kernel(%arg0: i32, %arg1: memref<16x48xf32, #tpu.memory_space<vmem>>, %arg2: memref<8x32xf32, #tpu.memory_space<vmem>>, %arg3: memref<624x32xf32, #tpu.memory_space<vmem>>, %arg4: memref<168x64xf32, #tpu.memory_space<vmem>>, %arg5: memref<224x128xf32, #tpu.memory_space<vmem>>, %arg6: memref<16x128xf32, #tpu.memory_space<vmem>>) attributes {dimension_semantics = [#tpu.dimension_semantics<parallel>], iteration_bounds = array<i64: 2>, scalar_prefetch = 0 : i64, scratch_operands = 0 : i64, tpu.core_type = #tpu.core_type<tc>, window_params = [{transform_indices = @transform_0, window_bounds = array<i64: 16, 48>}, {transform_indices = @transform_1, window_bounds = array<i64: 8, 32>}, {pipeline_mode = #tpu.pipeline_mode<synchronous>, transform_indices = @transform_2, window_bounds = array<i64: 624, 32>}, {pipeline_mode = #tpu.pipeline_mode<synchronous>, transform_indices = @transform_3, window_bounds = array<i64: 168, 64>}, {pipeline_mode = #tpu.pipeline_mode<synchronous>, transform_indices = @transform_4, window_bounds = array<i64: 224, 128>}, {transform_indices = @transform_5, window_bounds = array<i64: 16, 128>}]} {
    %0 = tpu.iota {dimensions = array<i32: 1>} : vector<1x8xi32>
    %c7_i32 = arith.constant 7 : i32
    %1 = vector.broadcast %c7_i32 : i32 to vector<1x8xi32>
    %2 = arith.cmpi eq, %0, %1 : vector<1x8xi32>
    %cst = arith.constant -1.000000e+30 : f32
    %cst_0 = arith.constant 0.000000e+00 : f32
    %3 = vector.broadcast %cst : f32 to vector<1x8xf32>
    %4 = vector.broadcast %cst_0 : f32 to vector<1x8xf32>
    %5 = arith.select %2, %3, %4 : vector<1x8xi1>, vector<1x8xf32>
    %c0 = arith.constant 0 : index
    %c0_1 = arith.constant 0 : index
    %6 = vector.load %arg1[%c0, %c0_1] : memref<16x48xf32, #tpu.memory_space<vmem>>, vector<16x48xf32>
    %c0_2 = arith.constant 0 : index
    %c0_3 = arith.constant 0 : index
    %7 = vector.load %arg3[%c0_2, %c0_3] : memref<624x32xf32, #tpu.memory_space<vmem>>, vector<48x32xf32>
    %cst_4 = arith.constant dense<0.000000e+00> : vector<16x32xf32>
    %8 = tpu.matmul %6, %7, %cst_4 {dimension_numbers = #tpu.dot_dimension_numbers<[1], [0], [0], [1], [0, 0, 1, 1], [], []>} : vector<16x48xf32>, vector<48x32xf32>, vector<16x32xf32> -> vector<16x32xf32>
    %c0_5 = arith.constant 0 : index
    %c0_6 = arith.constant 0 : index
    %9 = vector.load %arg4[%c0_5, %c0_6] : memref<168x64xf32, #tpu.memory_space<vmem>>, vector<32x64xf32>
    %cst_7 = arith.constant dense<0.000000e+00> : vector<16x64xf32>
    %10 = tpu.matmul %8, %9, %cst_7 {dimension_numbers = #tpu.dot_dimension_numbers<[1], [0], [0], [1], [0, 0, 1, 1], [], []>} : vector<16x32xf32>, vector<32x64xf32>, vector<16x64xf32> -> vector<16x64xf32>
    %11 = arith.mulf %10, %10 : vector<16x64xf32>
    %12 = arith.mulf %10, %11 : vector<16x64xf32>
    %cst_8 = arith.constant 4.471500e-02 : f32
    %13 = vector.broadcast %cst_8 : f32 to vector<16x64xf32>
    %14 = arith.mulf %13, %12 : vector<16x64xf32>
    %15 = arith.addf %10, %14 : vector<16x64xf32>
    %cst_9 = arith.constant 0.797884583 : f32
    %16 = vector.broadcast %cst_9 : f32 to vector<16x64xf32>
    %17 = arith.mulf %16, %15 : vector<16x64xf32>
    %18 = math.tanh %17 : vector<16x64xf32>
    %cst_10 = arith.constant 1.000000e+00 : f32
    %19 = vector.broadcast %cst_10 : f32 to vector<16x64xf32>
    %20 = arith.addf %19, %18 : vector<16x64xf32>
    %cst_11 = arith.constant 5.000000e-01 : f32
    %21 = vector.broadcast %cst_11 : f32 to vector<16x64xf32>
    %22 = arith.mulf %21, %20 : vector<16x64xf32>
    %23 = arith.mulf %10, %22 : vector<16x64xf32>
    %c48 = arith.constant 48 : index
    %c0_12 = arith.constant 0 : index
    %24 = vector.load %arg3[%c48, %c0_12] : memref<624x32xf32, #tpu.memory_space<vmem>>, vector<64x32xf32>
    %cst_13 = arith.constant dense<0.000000e+00> : vector<16x32xf32>
    %25 = tpu.matmul %23, %24, %cst_13 {dimension_numbers = #tpu.dot_dimension_numbers<[1], [0], [0], [1], [0, 0, 1, 1], [], []>} : vector<16x64xf32>, vector<64x32xf32>, vector<16x32xf32> -> vector<16x32xf32>
    %26 = arith.addf %8, %25 : vector<16x32xf32>
    %c616 = arith.constant 616 : index
    %c0_14 = arith.constant 0 : index
    %27 = vector.load %arg3[%c616, %c0_14] : memref<624x32xf32, #tpu.memory_space<vmem>>, vector<1x32xf32>
    %28 = vector.broadcast %27 : vector<1x32xf32> to vector<16x32xf32>
    %29 = arith.addf %26, %28 : vector<16x32xf32>
    %c592 = arith.constant 592 : index
    %c0_15 = arith.constant 0 : index
    %30 = vector.load %arg3[%c592, %c0_15] : memref<624x32xf32, #tpu.memory_space<vmem>>, vector<16x32xf32>
    %c0_16 = arith.constant 0 : index
    %c0_17 = arith.constant 0 : index
    %31 = vector.load %arg2[%c0_16, %c0_17] : memref<8x32xf32, #tpu.memory_space<vmem>>, vector<8x32xf32>
    %c112 = arith.constant 112 : index
    %c0_18 = arith.constant 0 : index
    %32 = vector.load %arg3[%c112, %c0_18] : memref<624x32xf32, #tpu.memory_space<vmem>>, vector<32x32xf32>
    %cst_19 = arith.constant dense<0.000000e+00> : vector<8x32xf32>
    %33 = tpu.matmul %31, %32, %cst_19 {dimension_numbers = #tpu.dot_dimension_numbers<[1], [0], [0], [1], [0, 0, 1, 1], [], []>} : vector<8x32xf32>, vector<32x32xf32>, vector<8x32xf32> -> vector<8x32xf32>
    %c144 = arith.constant 144 : index
    %c0_20 = arith.constant 0 : index
    %34 = vector.load %arg3[%c144, %c0_20] : memref<624x32xf32, #tpu.memory_space<vmem>>, vector<32x32xf32>
    %cst_21 = arith.constant dense<0.000000e+00> : vector<8x32xf32>
    %35 = tpu.matmul %31, %34, %cst_21 {dimension_numbers = #tpu.dot_dimension_numbers<[1], [0], [0], [1], [0, 0, 1, 1], [], []>} : vector<8x32xf32>, vector<32x32xf32>, vector<8x32xf32> -> vector<8x32xf32>
    %c176 = arith.constant 176 : index
    %c0_22 = arith.constant 0 : index
    %36 = vector.load %arg3[%c176, %c0_22] : memref<624x32xf32, #tpu.memory_space<vmem>>, vector<32x32xf32>
    %cst_23 = arith.constant dense<0.000000e+00> : vector<8x32xf32>
    %37 = tpu.matmul %31, %36, %cst_23 {dimension_numbers = #tpu.dot_dimension_numbers<[1], [0], [0], [1], [0, 0, 1, 1], [], []>} : vector<8x32xf32>, vector<32x32xf32>, vector<8x32xf32> -> vector<8x32xf32>
    "tpu.trace_start"() <{level = 10 : i32, message = "qd,kd->qk"}> : () -> ()
    %cst_24 = arith.constant dense<0.000000e+00> : vector<8x8xf32>
    %38 = tpu.matmul %33, %35, %cst_24 {dimension_numbers = #tpu.dot_dimension_numbers<[1], [1], [0], [0], [0, 0, 1, 0], [], []>} : vector<8x32xf32>, vector<8x32xf32>, vector<8x8xf32> -> vector<8x8xf32>
    "tpu.trace_stop"() : () -> ()
    %39 = vector.broadcast %5 : vector<1x8xf32> to vector<8x8xf32>
    %40 = arith.addf %38, %39 : vector<8x8xf32>
    %cst_25 = arith.constant dense<0xFF800000> : vector<8xf32>
    %41 = vector.multi_reduction <maximumf>, %40, %cst_25 [1] : vector<8x8xf32> to vector<8xf32>
    %42 = vector.shape_cast %41 : vector<8xf32> to vector<8x1xf32>
    %43 = vector.broadcast %42 : vector<8x1xf32> to vector<8x8xf32>
    %44 = arith.subf %40, %43 : vector<8x8xf32>
    %45 = math.exp %44 : vector<8x8xf32>
    %cst_26 = arith.constant dense<0.000000e+00> : vector<8xf32>
    %46 = vector.multi_reduction <add>, %45, %cst_26 [1] : vector<8x8xf32> to vector<8xf32>
    %47 = vector.shape_cast %46 : vector<8xf32> to vector<8x1xf32>
    %cst_27 = arith.constant dense<0.000000e+00> : vector<8x32xf32>
    %48 = tpu.matmul %45, %37, %cst_27 {dimension_numbers = #tpu.dot_dimension_numbers<[1], [0], [0], [1], [0, 0, 1, 1], [], []>} : vector<8x8xf32>, vector<8x32xf32>, vector<8x32xf32> -> vector<8x32xf32>
    %49 = tpu.reciprocal %47 {approx = true} : vector<8x1xf32> -> vector<8x1xf32>
    %50 = vector.broadcast %49 : vector<8x1xf32> to vector<8x32xf32>
    %51 = arith.mulf %48, %50 : vector<8x32xf32>
    %c208 = arith.constant 208 : index
    %c0_28 = arith.constant 0 : index
    %52 = vector.load %arg3[%c208, %c0_28] : memref<624x32xf32, #tpu.memory_space<vmem>>, vector<32x32xf32>
    %cst_29 = arith.constant dense<0.000000e+00> : vector<8x32xf32>
    %53 = tpu.matmul %51, %52, %cst_29 {dimension_numbers = #tpu.dot_dimension_numbers<[1], [0], [0], [1], [0, 0, 1, 1], [], []>} : vector<8x32xf32>, vector<32x32xf32>, vector<8x32xf32> -> vector<8x32xf32>
    %54 = arith.addf %31, %53 : vector<8x32xf32>
    %c608 = arith.constant 608 : index
    %c0_30 = arith.constant 0 : index
    %55 = vector.load %arg3[%c608, %c0_30] : memref<624x32xf32, #tpu.memory_space<vmem>>, vector<1x32xf32>
    %c612 = arith.constant 612 : index
    %c0_31 = arith.constant 0 : index
    %56 = vector.load %arg3[%c612, %c0_31] : memref<624x32xf32, #tpu.memory_space<vmem>>, vector<1x32xf32>
    %cst_32 = arith.constant dense<0.000000e+00> : vector<8xf32>
    %57 = vector.multi_reduction <add>, %54, %cst_32 [1] : vector<8x32xf32> to vector<8xf32>
    %58 = vector.shape_cast %57 : vector<8xf32> to vector<8x1xf32>
    %cst_33 = arith.constant 3.200000e+01 : f32
    %59 = vector.broadcast %cst_33 : f32 to vector<8x1xf32>
    %60 = arith.divf %58, %59 : vector<8x1xf32>
    %61 = vector.broadcast %60 : vector<8x1xf32> to vector<8x32xf32>
    %62 = arith.subf %54, %61 : vector<8x32xf32>
    %63 = arith.mulf %62, %62 : vector<8x32xf32>
    %cst_34 = arith.constant dense<0.000000e+00> : vector<8xf32>
    %64 = vector.multi_reduction <add>, %63, %cst_34 [1] : vector<8x32xf32> to vector<8xf32>
    %65 = vector.shape_cast %64 : vector<8xf32> to vector<8x1xf32>
    %cst_35 = arith.constant 3.200000e+01 : f32
    %66 = vector.broadcast %cst_35 : f32 to vector<8x1xf32>
    %67 = arith.divf %65, %66 : vector<8x1xf32>
    %cst_36 = arith.constant 9.99999997E-7 : f32
    %68 = vector.broadcast %cst_36 : f32 to vector<8x1xf32>
    %69 = arith.addf %67, %68 : vector<8x1xf32>
    %70 = math.rsqrt %69 : vector<8x1xf32>
    %71 = vector.broadcast %70 : vector<8x1xf32> to vector<8x32xf32>
    %72 = arith.mulf %62, %71 : vector<8x32xf32>
    %73 = vector.broadcast %55 : vector<1x32xf32> to vector<8x32xf32>
    %74 = arith.mulf %72, %73 : vector<8x32xf32>
    %75 = vector.broadcast %56 : vector<1x32xf32> to vector<8x32xf32>
    %76 = arith.addf %74, %75 : vector<8x32xf32>
    %c240 = arith.constant 240 : index
    %c0_37 = arith.constant 0 : index
    %77 = vector.load %arg3[%c240, %c0_37] : memref<624x32xf32, #tpu.memory_space<vmem>>, vector<32x32xf32>
    %cst_38 = arith.constant dense<0.000000e+00> : vector<8x32xf32>
    %78 = tpu.matmul %76, %77, %cst_38 {dimension_numbers = #tpu.dot_dimension_numbers<[1], [0], [0], [1], [0, 0, 1, 1], [], []>} : vector<8x32xf32>, vector<32x32xf32>, vector<8x32xf32> -> vector<8x32xf32>
    %79 = arith.addf %29, %30 : vector<16x32xf32>
    %c272 = arith.constant 272 : index
    %c0_39 = arith.constant 0 : index
    %80 = vector.load %arg3[%c272, %c0_39] : memref<624x32xf32, #tpu.memory_space<vmem>>, vector<32x32xf32>
    %cst_40 = arith.constant dense<0.000000e+00> : vector<16x32xf32>
    %81 = tpu.matmul %79, %80, %cst_40 {dimension_numbers = #tpu.dot_dimension_numbers<[1], [0], [0], [1], [0, 0, 1, 1], [], []>} : vector<16x32xf32>, vector<32x32xf32>, vector<16x32xf32> -> vector<16x32xf32>
    %c304 = arith.constant 304 : index
    %c0_41 = arith.constant 0 : index
    %82 = vector.load %arg3[%c304, %c0_41] : memref<624x32xf32, #tpu.memory_space<vmem>>, vector<32x32xf32>
    %cst_42 = arith.constant dense<0.000000e+00> : vector<16x32xf32>
    %83 = tpu.matmul %29, %82, %cst_42 {dimension_numbers = #tpu.dot_dimension_numbers<[1], [0], [0], [1], [0, 0, 1, 1], [], []>} : vector<16x32xf32>, vector<32x32xf32>, vector<16x32xf32> -> vector<16x32xf32>
    "tpu.trace_start"() <{level = 10 : i32, message = "qd,kd->qk"}> : () -> ()
    %cst_43 = arith.constant dense<0.000000e+00> : vector<8x16xf32>
    %84 = tpu.matmul %78, %81, %cst_43 {dimension_numbers = #tpu.dot_dimension_numbers<[1], [1], [0], [0], [0, 0, 1, 0], [], []>} : vector<8x32xf32>, vector<16x32xf32>, vector<8x16xf32> -> vector<8x16xf32>
    "tpu.trace_stop"() : () -> ()
    %cst_44 = arith.constant dense<0xFF800000> : vector<8xf32>
    %85 = vector.multi_reduction <maximumf>, %84, %cst_44 [1] : vector<8x16xf32> to vector<8xf32>
    %86 = vector.shape_cast %85 : vector<8xf32> to vector<8x1xf32>
    %87 = vector.broadcast %86 : vector<8x1xf32> to vector<8x16xf32>
    %88 = arith.subf %84, %87 : vector<8x16xf32>
    %89 = math.exp %88 : vector<8x16xf32>
    %cst_45 = arith.constant dense<0.000000e+00> : vector<8xf32>
    %90 = vector.multi_reduction <add>, %89, %cst_45 [1] : vector<8x16xf32> to vector<8xf32>
    %91 = vector.shape_cast %90 : vector<8xf32> to vector<8x1xf32>
    %cst_46 = arith.constant dense<0.000000e+00> : vector<8x32xf32>
    %92 = tpu.matmul %89, %83, %cst_46 {dimension_numbers = #tpu.dot_dimension_numbers<[1], [0], [0], [1], [0, 0, 1, 1], [], []>} : vector<8x16xf32>, vector<16x32xf32>, vector<8x32xf32> -> vector<8x32xf32>
    %93 = tpu.reciprocal %91 {approx = true} : vector<8x1xf32> -> vector<8x1xf32>
    %94 = vector.broadcast %93 : vector<8x1xf32> to vector<8x32xf32>
    %95 = arith.mulf %92, %94 : vector<8x32xf32>
    %c336 = arith.constant 336 : index
    %c0_47 = arith.constant 0 : index
    %96 = vector.load %arg3[%c336, %c0_47] : memref<624x32xf32, #tpu.memory_space<vmem>>, vector<32x32xf32>
    %cst_48 = arith.constant dense<0.000000e+00> : vector<8x32xf32>
    %97 = tpu.matmul %95, %96, %cst_48 {dimension_numbers = #tpu.dot_dimension_numbers<[1], [0], [0], [1], [0, 0, 1, 1], [], []>} : vector<8x32xf32>, vector<32x32xf32>, vector<8x32xf32> -> vector<8x32xf32>
    %98 = arith.addf %76, %97 : vector<8x32xf32>
    %c609 = arith.constant 609 : index
    %c0_49 = arith.constant 0 : index
    %99 = vector.load %arg3[%c609, %c0_49] : memref<624x32xf32, #tpu.memory_space<vmem>>, vector<1x32xf32>
    %c613 = arith.constant 613 : index
    %c0_50 = arith.constant 0 : index
    %100 = vector.load %arg3[%c613, %c0_50] : memref<624x32xf32, #tpu.memory_space<vmem>>, vector<1x32xf32>
    %cst_51 = arith.constant dense<0.000000e+00> : vector<8xf32>
    %101 = vector.multi_reduction <add>, %98, %cst_51 [1] : vector<8x32xf32> to vector<8xf32>
    %102 = vector.shape_cast %101 : vector<8xf32> to vector<8x1xf32>
    %cst_52 = arith.constant 3.200000e+01 : f32
    %103 = vector.broadcast %cst_52 : f32 to vector<8x1xf32>
    %104 = arith.divf %102, %103 : vector<8x1xf32>
    %105 = vector.broadcast %104 : vector<8x1xf32> to vector<8x32xf32>
    %106 = arith.subf %98, %105 : vector<8x32xf32>
    %107 = arith.mulf %106, %106 : vector<8x32xf32>
    %cst_53 = arith.constant dense<0.000000e+00> : vector<8xf32>
    %108 = vector.multi_reduction <add>, %107, %cst_53 [1] : vector<8x32xf32> to vector<8xf32>
    %109 = vector.shape_cast %108 : vector<8xf32> to vector<8x1xf32>
    %cst_54 = arith.constant 3.200000e+01 : f32
    %110 = vector.broadcast %cst_54 : f32 to vector<8x1xf32>
    %111 = arith.divf %109, %110 : vector<8x1xf32>
    %cst_55 = arith.constant 9.99999997E-7 : f32
    %112 = vector.broadcast %cst_55 : f32 to vector<8x1xf32>
    %113 = arith.addf %111, %112 : vector<8x1xf32>
    %114 = math.rsqrt %113 : vector<8x1xf32>
    %115 = vector.broadcast %114 : vector<8x1xf32> to vector<8x32xf32>
    %116 = arith.mulf %106, %115 : vector<8x32xf32>
    %117 = vector.broadcast %99 : vector<1x32xf32> to vector<8x32xf32>
    %118 = arith.mulf %116, %117 : vector<8x32xf32>
    %119 = vector.broadcast %100 : vector<1x32xf32> to vector<8x32xf32>
    %120 = arith.addf %118, %119 : vector<8x32xf32>
    %c32 = arith.constant 32 : index
    %c0_56 = arith.constant 0 : index
    %121 = vector.load %arg4[%c32, %c0_56] : memref<168x64xf32, #tpu.memory_space<vmem>>, vector<32x64xf32>
    %cst_57 = arith.constant dense<0.000000e+00> : vector<8x64xf32>
    %122 = tpu.matmul %120, %121, %cst_57 {dimension_numbers = #tpu.dot_dimension_numbers<[1], [0], [0], [1], [0, 0, 1, 1], [], []>} : vector<8x32xf32>, vector<32x64xf32>, vector<8x64xf32> -> vector<8x64xf32>
    %123 = arith.mulf %122, %122 : vector<8x64xf32>
    %124 = arith.mulf %122, %123 : vector<8x64xf32>
    %cst_58 = arith.constant 4.471500e-02 : f32
    %125 = vector.broadcast %cst_58 : f32 to vector<8x64xf32>
    %126 = arith.mulf %125, %124 : vector<8x64xf32>
    %127 = arith.addf %122, %126 : vector<8x64xf32>
    %cst_59 = arith.constant 0.797884583 : f32
    %128 = vector.broadcast %cst_59 : f32 to vector<8x64xf32>
    %129 = arith.mulf %128, %127 : vector<8x64xf32>
    %130 = math.tanh %129 : vector<8x64xf32>
    %cst_60 = arith.constant 1.000000e+00 : f32
    %131 = vector.broadcast %cst_60 : f32 to vector<8x64xf32>
    %132 = arith.addf %131, %130 : vector<8x64xf32>
    %cst_61 = arith.constant 5.000000e-01 : f32
    %133 = vector.broadcast %cst_61 : f32 to vector<8x64xf32>
    %134 = arith.mulf %133, %132 : vector<8x64xf32>
    %135 = arith.mulf %122, %134 : vector<8x64xf32>
    %c496 = arith.constant 496 : index
    %c0_62 = arith.constant 0 : index
    %136 = vector.load %arg3[%c496, %c0_62] : memref<624x32xf32, #tpu.memory_space<vmem>>, vector<64x32xf32>
    %cst_63 = arith.constant dense<0.000000e+00> : vector<8x32xf32>
    %137 = tpu.matmul %135, %136, %cst_63 {dimension_numbers = #tpu.dot_dimension_numbers<[1], [0], [0], [1], [0, 0, 1, 1], [], []>} : vector<8x64xf32>, vector<64x32xf32>, vector<8x32xf32> -> vector<8x32xf32>
    %138 = arith.addf %120, %137 : vector<8x32xf32>
    %c610 = arith.constant 610 : index
    %c0_64 = arith.constant 0 : index
    %139 = vector.load %arg3[%c610, %c0_64] : memref<624x32xf32, #tpu.memory_space<vmem>>, vector<1x32xf32>
    %c614 = arith.constant 614 : index
    %c0_65 = arith.constant 0 : index
    %140 = vector.load %arg3[%c614, %c0_65] : memref<624x32xf32, #tpu.memory_space<vmem>>, vector<1x32xf32>
    %cst_66 = arith.constant dense<0.000000e+00> : vector<8xf32>
    %141 = vector.multi_reduction <add>, %138, %cst_66 [1] : vector<8x32xf32> to vector<8xf32>
    %142 = vector.shape_cast %141 : vector<8xf32> to vector<8x1xf32>
    %cst_67 = arith.constant 3.200000e+01 : f32
    %143 = vector.broadcast %cst_67 : f32 to vector<8x1xf32>
    %144 = arith.divf %142, %143 : vector<8x1xf32>
    %145 = vector.broadcast %144 : vector<8x1xf32> to vector<8x32xf32>
    %146 = arith.subf %138, %145 : vector<8x32xf32>
    %147 = arith.mulf %146, %146 : vector<8x32xf32>
    %cst_68 = arith.constant dense<0.000000e+00> : vector<8xf32>
    %148 = vector.multi_reduction <add>, %147, %cst_68 [1] : vector<8x32xf32> to vector<8xf32>
    %149 = vector.shape_cast %148 : vector<8xf32> to vector<8x1xf32>
    %cst_69 = arith.constant 3.200000e+01 : f32
    %150 = vector.broadcast %cst_69 : f32 to vector<8x1xf32>
    %151 = arith.divf %149, %150 : vector<8x1xf32>
    %cst_70 = arith.constant 9.99999997E-7 : f32
    %152 = vector.broadcast %cst_70 : f32 to vector<8x1xf32>
    %153 = arith.addf %151, %152 : vector<8x1xf32>
    %154 = math.rsqrt %153 : vector<8x1xf32>
    %155 = vector.broadcast %154 : vector<8x1xf32> to vector<8x32xf32>
    %156 = arith.mulf %146, %155 : vector<8x32xf32>
    %157 = vector.broadcast %139 : vector<1x32xf32> to vector<8x32xf32>
    %158 = arith.mulf %156, %157 : vector<8x32xf32>
    %159 = vector.broadcast %140 : vector<1x32xf32> to vector<8x32xf32>
    %160 = arith.addf %158, %159 : vector<8x32xf32>
    %161 = arith.addf %29, %30 : vector<16x32xf32>
    %c368 = arith.constant 368 : index
    %c0_71 = arith.constant 0 : index
    %162 = vector.load %arg3[%c368, %c0_71] : memref<624x32xf32, #tpu.memory_space<vmem>>, vector<32x32xf32>
    %cst_72 = arith.constant dense<0.000000e+00> : vector<16x32xf32>
    %163 = tpu.matmul %161, %162, %cst_72 {dimension_numbers = #tpu.dot_dimension_numbers<[1], [0], [0], [1], [0, 0, 1, 1], [], []>} : vector<16x32xf32>, vector<32x32xf32>, vector<16x32xf32> -> vector<16x32xf32>
    %c400 = arith.constant 400 : index
    %c0_73 = arith.constant 0 : index
    %164 = vector.load %arg3[%c400, %c0_73] : memref<624x32xf32, #tpu.memory_space<vmem>>, vector<32x32xf32>
    %cst_74 = arith.constant dense<0.000000e+00> : vector<8x32xf32>
    %165 = tpu.matmul %160, %164, %cst_74 {dimension_numbers = #tpu.dot_dimension_numbers<[1], [0], [0], [1], [0, 0, 1, 1], [], []>} : vector<8x32xf32>, vector<32x32xf32>, vector<8x32xf32> -> vector<8x32xf32>
    %c432 = arith.constant 432 : index
    %c0_75 = arith.constant 0 : index
    %166 = vector.load %arg3[%c432, %c0_75] : memref<624x32xf32, #tpu.memory_space<vmem>>, vector<32x32xf32>
    %cst_76 = arith.constant dense<0.000000e+00> : vector<8x32xf32>
    %167 = tpu.matmul %160, %166, %cst_76 {dimension_numbers = #tpu.dot_dimension_numbers<[1], [0], [0], [1], [0, 0, 1, 1], [], []>} : vector<8x32xf32>, vector<32x32xf32>, vector<8x32xf32> -> vector<8x32xf32>
    "tpu.trace_start"() <{level = 10 : i32, message = "qd,kd->qk"}> : () -> ()
    %cst_77 = arith.constant dense<0.000000e+00> : vector<16x8xf32>
    %168 = tpu.matmul %163, %165, %cst_77 {dimension_numbers = #tpu.dot_dimension_numbers<[1], [1], [0], [0], [0, 0, 1, 0], [], []>} : vector<16x32xf32>, vector<8x32xf32>, vector<16x8xf32> -> vector<16x8xf32>
    "tpu.trace_stop"() : () -> ()
    %169 = vector.broadcast %5 : vector<1x8xf32> to vector<16x8xf32>
    %170 = arith.addf %168, %169 : vector<16x8xf32>
    %cst_78 = arith.constant dense<0xFF800000> : vector<16xf32>
    %171 = vector.multi_reduction <maximumf>, %170, %cst_78 [1] : vector<16x8xf32> to vector<16xf32>
    %172 = vector.shape_cast %171 : vector<16xf32> to vector<16x1xf32>
    %173 = vector.broadcast %172 : vector<16x1xf32> to vector<16x8xf32>
    %174 = arith.subf %170, %173 : vector<16x8xf32>
    %175 = math.exp %174 : vector<16x8xf32>
    %cst_79 = arith.constant dense<0.000000e+00> : vector<16xf32>
    %176 = vector.multi_reduction <add>, %175, %cst_79 [1] : vector<16x8xf32> to vector<16xf32>
    %177 = vector.shape_cast %176 : vector<16xf32> to vector<16x1xf32>
    %cst_80 = arith.constant dense<0.000000e+00> : vector<16x32xf32>
    %178 = tpu.matmul %175, %167, %cst_80 {dimension_numbers = #tpu.dot_dimension_numbers<[1], [0], [0], [1], [0, 0, 1, 1], [], []>} : vector<16x8xf32>, vector<8x32xf32>, vector<16x32xf32> -> vector<16x32xf32>
    %179 = tpu.reciprocal %177 {approx = true} : vector<16x1xf32> -> vector<16x1xf32>
    %180 = vector.broadcast %179 : vector<16x1xf32> to vector<16x32xf32>
    %181 = arith.mulf %178, %180 : vector<16x32xf32>
    %c464 = arith.constant 464 : index
    %c0_81 = arith.constant 0 : index
    %182 = vector.load %arg3[%c464, %c0_81] : memref<624x32xf32, #tpu.memory_space<vmem>>, vector<32x32xf32>
    %cst_82 = arith.constant dense<0.000000e+00> : vector<16x32xf32>
    %183 = tpu.matmul %181, %182, %cst_82 {dimension_numbers = #tpu.dot_dimension_numbers<[1], [0], [0], [1], [0, 0, 1, 1], [], []>} : vector<16x32xf32>, vector<32x32xf32>, vector<16x32xf32> -> vector<16x32xf32>
    %184 = arith.addf %29, %183 : vector<16x32xf32>
    %c611 = arith.constant 611 : index
    %c0_83 = arith.constant 0 : index
    %185 = vector.load %arg3[%c611, %c0_83] : memref<624x32xf32, #tpu.memory_space<vmem>>, vector<1x32xf32>
    %c615 = arith.constant 615 : index
    %c0_84 = arith.constant 0 : index
    %186 = vector.load %arg3[%c615, %c0_84] : memref<624x32xf32, #tpu.memory_space<vmem>>, vector<1x32xf32>
    %cst_85 = arith.constant dense<0.000000e+00> : vector<16xf32>
    %187 = vector.multi_reduction <add>, %184, %cst_85 [1] : vector<16x32xf32> to vector<16xf32>
    %188 = vector.shape_cast %187 : vector<16xf32> to vector<16x1xf32>
    %cst_86 = arith.constant 3.200000e+01 : f32
    %189 = vector.broadcast %cst_86 : f32 to vector<16x1xf32>
    %190 = arith.divf %188, %189 : vector<16x1xf32>
    %191 = vector.broadcast %190 : vector<16x1xf32> to vector<16x32xf32>
    %192 = arith.subf %184, %191 : vector<16x32xf32>
    %193 = arith.mulf %192, %192 : vector<16x32xf32>
    %cst_87 = arith.constant dense<0.000000e+00> : vector<16xf32>
    %194 = vector.multi_reduction <add>, %193, %cst_87 [1] : vector<16x32xf32> to vector<16xf32>
    %195 = vector.shape_cast %194 : vector<16xf32> to vector<16x1xf32>
    %cst_88 = arith.constant 3.200000e+01 : f32
    %196 = vector.broadcast %cst_88 : f32 to vector<16x1xf32>
    %197 = arith.divf %195, %196 : vector<16x1xf32>
    %cst_89 = arith.constant 9.99999997E-7 : f32
    %198 = vector.broadcast %cst_89 : f32 to vector<16x1xf32>
    %199 = arith.addf %197, %198 : vector<16x1xf32>
    %200 = math.rsqrt %199 : vector<16x1xf32>
    %201 = vector.broadcast %200 : vector<16x1xf32> to vector<16x32xf32>
    %202 = arith.mulf %192, %201 : vector<16x32xf32>
    %203 = vector.broadcast %185 : vector<1x32xf32> to vector<16x32xf32>
    %204 = arith.mulf %202, %203 : vector<16x32xf32>
    %205 = vector.broadcast %186 : vector<1x32xf32> to vector<16x32xf32>
    %206 = arith.addf %204, %205 : vector<16x32xf32>
    %207 = vector.extract_strided_slice %160 {offsets = [1, 0], sizes = [1, 32], strides = [1, 1]} : vector<8x32xf32> to vector<1x32xf32>
    %c560 = arith.constant 560 : index
    %c0_90 = arith.constant 0 : index
    %208 = vector.load %arg3[%c560, %c0_90] : memref<624x32xf32, #tpu.memory_space<vmem>>, vector<32x32xf32>
    %cst_91 = arith.constant dense<0.000000e+00> : vector<1x32xf32>
    %209 = tpu.matmul %207, %208, %cst_91 {dimension_numbers = #tpu.dot_dimension_numbers<[1], [0], [0], [1], [0, 0, 1, 1], [], []>} : vector<1x32xf32>, vector<32x32xf32>, vector<1x32xf32> -> vector<1x32xf32>
    %cst_92 = arith.constant 0.000000e+00 : f32
    %210 = vector.broadcast %cst_92 : f32 to vector<1x32xf32>
    %211 = arith.maximumf %209, %210 : vector<1x32xf32>
    %c64 = arith.constant 64 : index
    %c0_93 = arith.constant 0 : index
    %212 = vector.load %arg5[%c64, %c0_93] : memref<224x128xf32, #tpu.memory_space<vmem>>, vector<32x128xf32>
    %cst_94 = arith.constant dense<0.000000e+00> : vector<1x128xf32>
    %213 = tpu.matmul %211, %212, %cst_94 {dimension_numbers = #tpu.dot_dimension_numbers<[1], [0], [0], [1], [0, 0, 1, 1], [], []>} : vector<1x32xf32>, vector<32x128xf32>, vector<1x128xf32> -> vector<1x128xf32>
    %c64_95 = arith.constant 64 : index
    %c0_96 = arith.constant 0 : index
    %214 = vector.load %arg4[%c64_95, %c0_96] : memref<168x64xf32, #tpu.memory_space<vmem>>, vector<32x64xf32>
    %cst_97 = arith.constant dense<0.000000e+00> : vector<16x64xf32>
    %215 = tpu.matmul %206, %214, %cst_97 {dimension_numbers = #tpu.dot_dimension_numbers<[1], [0], [0], [1], [0, 0, 1, 1], [], []>} : vector<16x32xf32>, vector<32x64xf32>, vector<16x64xf32> -> vector<16x64xf32>
    %c96 = arith.constant 96 : index
    %c0_98 = arith.constant 0 : index
    %216 = vector.load %arg4[%c96, %c0_98] : memref<168x64xf32, #tpu.memory_space<vmem>>, vector<64x64xf32>
    %cst_99 = arith.constant dense<0.000000e+00> : vector<16x64xf32>
    %217 = tpu.matmul %215, %216, %cst_99 {dimension_numbers = #tpu.dot_dimension_numbers<[1], [0], [0], [1], [0, 0, 1, 1], [], []>} : vector<16x64xf32>, vector<64x64xf32>, vector<16x64xf32> -> vector<16x64xf32>
    %218 = arith.subf %215, %217 : vector<16x64xf32>
    %219 = arith.mulf %218, %218 : vector<16x64xf32>
    %cst_100 = arith.constant dense<0.000000e+00> : vector<16x64xf32>
    %220 = tpu.matmul %219, %216, %cst_100 {dimension_numbers = #tpu.dot_dimension_numbers<[1], [0], [0], [1], [0, 0, 1, 1], [], []>} : vector<16x64xf32>, vector<64x64xf32>, vector<16x64xf32> -> vector<16x64xf32>
    %cst_101 = arith.constant 9.99999997E-7 : f32
    %221 = vector.broadcast %cst_101 : f32 to vector<16x64xf32>
    %222 = arith.addf %220, %221 : vector<16x64xf32>
    %223 = math.rsqrt %222 : vector<16x64xf32>
    %224 = arith.mulf %218, %223 : vector<16x64xf32>
    %c160 = arith.constant 160 : index
    %c0_102 = arith.constant 0 : index
    %225 = vector.load %arg4[%c160, %c0_102] : memref<168x64xf32, #tpu.memory_space<vmem>>, vector<1x64xf32>
    %226 = vector.broadcast %225 : vector<1x64xf32> to vector<16x64xf32>
    %227 = arith.mulf %224, %226 : vector<16x64xf32>
    %c161 = arith.constant 161 : index
    %c0_103 = arith.constant 0 : index
    %228 = vector.load %arg4[%c161, %c0_103] : memref<168x64xf32, #tpu.memory_space<vmem>>, vector<1x64xf32>
    %229 = vector.broadcast %228 : vector<1x64xf32> to vector<16x64xf32>
    %230 = arith.addf %227, %229 : vector<16x64xf32>
    %231 = arith.mulf %230, %230 : vector<16x64xf32>
    %232 = arith.mulf %230, %231 : vector<16x64xf32>
    %cst_104 = arith.constant 4.471500e-02 : f32
    %233 = vector.broadcast %cst_104 : f32 to vector<16x64xf32>
    %234 = arith.mulf %233, %232 : vector<16x64xf32>
    %235 = arith.addf %230, %234 : vector<16x64xf32>
    %cst_105 = arith.constant 0.797884583 : f32
    %236 = vector.broadcast %cst_105 : f32 to vector<16x64xf32>
    %237 = arith.mulf %236, %235 : vector<16x64xf32>
    %238 = math.tanh %237 : vector<16x64xf32>
    %cst_106 = arith.constant 1.000000e+00 : f32
    %239 = vector.broadcast %cst_106 : f32 to vector<16x64xf32>
    %240 = arith.addf %239, %238 : vector<16x64xf32>
    %cst_107 = arith.constant 5.000000e-01 : f32
    %241 = vector.broadcast %cst_107 : f32 to vector<16x64xf32>
    %242 = arith.mulf %241, %240 : vector<16x64xf32>
    %243 = arith.mulf %230, %242 : vector<16x64xf32>
    %c0_108 = arith.constant 0 : index
    %c0_109 = arith.constant 0 : index
    %244 = vector.load %arg5[%c0_108, %c0_109] : memref<224x128xf32, #tpu.memory_space<vmem>>, vector<64x128xf32>
    %cst_110 = arith.constant dense<0.000000e+00> : vector<16x128xf32>
    %245 = tpu.matmul %243, %244, %cst_110 {dimension_numbers = #tpu.dot_dimension_numbers<[1], [0], [0], [1], [0, 0, 1, 1], [], []>} : vector<16x64xf32>, vector<64x128xf32>, vector<16x128xf32> -> vector<16x128xf32>
    %246 = arith.mulf %245, %245 : vector<16x128xf32>
    %247 = arith.mulf %245, %246 : vector<16x128xf32>
    %cst_111 = arith.constant 4.471500e-02 : f32
    %248 = vector.broadcast %cst_111 : f32 to vector<16x128xf32>
    %249 = arith.mulf %248, %247 : vector<16x128xf32>
    %250 = arith.addf %245, %249 : vector<16x128xf32>
    %cst_112 = arith.constant 0.797884583 : f32
    %251 = vector.broadcast %cst_112 : f32 to vector<16x128xf32>
    %252 = arith.mulf %251, %250 : vector<16x128xf32>
    %253 = math.tanh %252 : vector<16x128xf32>
    %cst_113 = arith.constant 1.000000e+00 : f32
    %254 = vector.broadcast %cst_113 : f32 to vector<16x128xf32>
    %255 = arith.addf %254, %253 : vector<16x128xf32>
    %cst_114 = arith.constant 5.000000e-01 : f32
    %256 = vector.broadcast %cst_114 : f32 to vector<16x128xf32>
    %257 = arith.mulf %256, %255 : vector<16x128xf32>
    %258 = arith.mulf %245, %257 : vector<16x128xf32>
    %259 = vector.broadcast %213 : vector<1x128xf32> to vector<16x128xf32>
    %260 = arith.mulf %258, %259 : vector<16x128xf32>
    %c96_115 = arith.constant 96 : index
    %c0_116 = arith.constant 0 : index
    %261 = vector.load %arg5[%c96_115, %c0_116] : memref<224x128xf32, #tpu.memory_space<vmem>>, vector<128x128xf32>
    %cst_117 = arith.constant dense<0.000000e+00> : vector<16x128xf32>
    %262 = tpu.matmul %260, %261, %cst_117 {dimension_numbers = #tpu.dot_dimension_numbers<[1], [0], [0], [1], [0, 0, 1, 1], [], []>} : vector<16x128xf32>, vector<128x128xf32>, vector<16x128xf32> -> vector<16x128xf32>
    %c0_118 = arith.constant 0 : index
    %c0_119 = arith.constant 0 : index
    %263 = vector.load %arg6[%c0_118, %c0_119] : memref<16x128xf32, #tpu.memory_space<vmem>>, vector<16x128xf32>
    tpu.vector_store %arg6[%c0_118, %c0_119], %262 {strides = array<i32>} : memref<16x128xf32, #tpu.memory_space<vmem>>, vector<16x128xf32>,
    return
  }
  func.func @transform_0(%arg0: i32) -> (i32, i32) {
    %c0_i32 = arith.constant 0 : i32
    %c0_i32_0 = arith.constant 0 : i32
    return %arg0, %c0_i32 : i32, i32
  }
  func.func @transform_1(%arg0: i32) -> (i32, i32) {
    %c0_i32 = arith.constant 0 : i32
    %c0_i32_0 = arith.constant 0 : i32
    return %arg0, %c0_i32 : i32, i32
  }
  func.func @transform_2(%arg0: i32) -> (i32, i32) {
    %c0_i32 = arith.constant 0 : i32
    %c0_i32_0 = arith.constant 0 : i32
    %c0_i32_1 = arith.constant 0 : i32
    return %c0_i32, %c0_i32_0 : i32, i32
  }
  func.func @transform_3(%arg0: i32) -> (i32, i32) {
    %c0_i32 = arith.constant 0 : i32
    %c0_i32_0 = arith.constant 0 : i32
    %c0_i32_1 = arith.constant 0 : i32
    return %c0_i32, %c0_i32_0 : i32, i32
  }
  func.func @transform_4(%arg0: i32) -> (i32, i32) {
    %c0_i32 = arith.constant 0 : i32
    %c0_i32_0 = arith.constant 0 : i32
    %c0_i32_1 = arith.constant 0 : i32
    return %c0_i32, %c0_i32_0 : i32, i32
  }
  func.func @transform_5(%arg0: i32) -> (i32, i32) {
    %c0_i32 = arith.constant 0 : i32
    %c0_i32_0 = arith.constant 0 : i32
    return %arg0, %c0_i32 : i32, i32
  }
}

</mosaic_0001>

<llo_original>
// kernel: medsam_lite_forward.1
$region0: #{medsam_lite_forward.1}
  #allocation0 [shape = 'u32[]', space=smem, size = 0x4, offset = 0x4, fixed_abs, tag = 'smem constant byte address 0x4 - core index']
  #allocation1 [shape = 'u32[144,128]{1,0:T(1,128)}', space=vmem, size = 0x12000, scoped, tag = 'internal scratch']
  %s0 = inlined_call_operand.vmem [shape: f32[32,48], index: 0, kind: input, shape index: {}]
  %s1 = inlined_call_operand.vmem [shape: f32[16,32], index: 1, kind: input, shape index: {}]
  %s2 = inlined_call_operand.vmem [shape: f32[624,32], index: 2, kind: input, shape index: {}]
  %s3 = inlined_call_operand.vmem [shape: f32[168,64], index: 3, kind: input, shape index: {}]
  %s4 = inlined_call_operand.vmem [shape: f32[224,128], index: 4, kind: input, shape index: {}]
  %s5 = inlined_call_operand.vmem [shape: f32[32,128], index: 5, kind: output, shape index: {}]
  %s6 = sld [smem:[#allocation0]]
  $region53: #{medsam_lite_forward.1} parent=0
    _
  %s8 = ssub.s32 1, %s6
  %s9 = scalar_select 0, %s8, %s6
  loop: start=0, step=1, limit=4
  $region2: #{medsam_lite_forward.1} parent=0 // loop_pre_header
    _
  $region3: #{medsam_lite_forward.1} parent=0 // loop_header
    %s11 = sphi 0, %s15
    %p12 = scmp.ge.s32.totalorder %s11, 4
    %s21 = sphi 0, %s23
    %s24 = sphi 0, %s21
    %s25 = sphi 0, %s24
    %s41 = sphi 0, %s25
    %s47 = sphi 0, %s49
    %s50 = sphi 0, %s47
    %s51 = sphi 0, %s50
    %s67 = sphi 0, %s51
    %s71 = sphi 0, %s71
    %s73 = sphi 0, %s71
    %s74 = sphi 0, %s73
    %s88 = sphi 0, %s74
    %s92 = sphi 0, %s92
    %s94 = sphi 0, %s92
    %s95 = sphi 0, %s94
    %s109 = sphi 0, %s95
    %s113 = sphi 0, %s113
    %s115 = sphi 0, %s113
    %s116 = sphi 0, %s115
    %s130 = sphi 0, %s116
    %s136 = sphi 0, %s138
    %s139 = sphi 0, %s136
    %s140 = sphi 0, %s139
    %s156 = sphi 0, %s140
  $region4: #{medsam_lite_forward.1} parent=0 // loop_header_branch
    %14 = sbr.rel (%p12) target = $region8
  $region5: #{medsam_lite_forward.1} parent=0 // loop_body
    %s16 = ssub.s32 %s11, 1
    %s17 = ssub.s32 %s11, 2
    %s18 = sadd.s32 %s11, 1
    %s19 = ssub.s32 %s11, %s18
    %p20 = scmp.eq.s32.totalorder %s19, 0
    %s22 = sadd.s32 %s21, 1
    %s23 = scalar_select %p20, %s21, %s22
    %p26 = pneg %p20
    %p27 = scmp.eq.s32.totalorder %s11, 1
    %p28 = por %p26, %p27
    %p29 = scmp.ne.s32.totalorder %s21, %s24
    %p30 = scmp.eq.s32.totalorder %s11, 0
    %p31 = por %p29, %p30
    %p32 = scmp.ne.s32.totalorder %s21, %s24
    %p33 = scmp.eq.s32.totalorder %s16, 1
    %p34 = por %p32, %p33
    %p35 = scmp.ne.s32.totalorder %s24, %s25
    %p36 = scmp.eq.s32.totalorder %s16, 0
    %p37 = por %p35, %p36
    %p38 = scmp.ne.s32.totalorder %s24, %s25
    %p39 = scmp.eq.s32.totalorder %s17, 1
    %p40 = por %p38, %p39
    %p42 = scmp.ne.s32.totalorder %s25, %s41
    %p43 = scmp.eq.s32.totalorder %s17, 0
    %p44 = por %p42, %p43
    %s45 = ssub.s32 %s11, %s18
    %p46 = scmp.eq.s32.totalorder %s45, 0
    %s48 = sadd.s32 %s47, 1
    %s49 = scalar_select %p46, %s47, %s48
    %p52 = pneg %p46
    %p53 = scmp.eq.s32.totalorder %s11, 1
    %p54 = por %p52, %p53
    %p55 = scmp.ne.s32.totalorder %s47, %s50
    %p56 = scmp.eq.s32.totalorder %s11, 0
    %p57 = por %p55, %p56
    %p58 = scmp.ne.s32.totalorder %s47, %s50
    %p59 = scmp.eq.s32.totalorder %s16, 1
    %p60 = por %p58, %p59
    %p61 = scmp.ne.s32.totalorder %s50, %s51
    %p62 = scmp.eq.s32.totalorder %s16, 0
    %p63 = por %p61, %p62
    %p64 = scmp.ne.s32.totalorder %s50, %s51
    %p65 = scmp.eq.s32.totalorder %s17, 1
    %p66 = por %p64, %p65
    %p68 = scmp.ne.s32.totalorder %s51, %s67
    %p69 = scmp.eq.s32.totalorder %s17, 0
    %p70 = por %p68, %p69
    %s72 = sadd.s32 %s71, 1
    %p75 = scmp.eq.s32.totalorder %s11, 1
    %p76 = scmp.ne.s32.totalorder %s71, %s73
    %p77 = scmp.eq.s32.totalorder %s11, 0
    %p78 = por %p76, %p77
    %p79 = scmp.ne.s32.totalorder %s71, %s73
    %p80 = scmp.eq.s32.totalorder %s16, 1
    %p81 = por %p79, %p80
    %p82 = scmp.ne.s32.totalorder %s73, %s74
    %p83 = scmp.eq.s32.totalorder %s16, 0
    %p84 = por %p82, %p83
    %p85 = scmp.ne.s32.totalorder %s73, %s74
    %p86 = scmp.eq.s32.totalorder %s17, 1
    %p87 = por %p85, %p86
    %p89 = scmp.ne.s32.totalorder %s74, %s88
    %p90 = scmp.eq.s32.totalorder %s17, 0
    %p91 = por %p89, %p90
    %s93 = sadd.s32 %s92, 1
    %p96 = scmp.eq.s32.totalorder %s11, 1
    %p97 = scmp.ne.s32.totalorder %s92, %s94
    %p98 = scmp.eq.s32.totalorder %s11, 0
    %p99 = por %p97, %p98
    %p100 = scmp.ne.s32.totalorder %s92, %s94
    %p101 = scmp.eq.s32.totalorder %s16, 1
    %p102 = por %p100, %p101
    %p103 = scmp.ne.s32.totalorder %s94, %s95
    %p104 = scmp.eq.s32.totalorder %s16, 0
    %p105 = por %p103, %p104
    %p106 = scmp.ne.s32.totalorder %s94, %s95
    %p107 = scmp.eq.s32.totalorder %s17, 1
    %p108 = por %p106, %p107
    %p110 = scmp.ne.s32.totalorder %s95, %s109
    %p111 = scmp.eq.s32.totalorder %s17, 0
    %p112 = por %p110, %p111
    %s114 = sadd.s32 %s113, 1
    %p117 = scmp.eq.s32.totalorder %s11, 1
    %p118 = scmp.ne.s32.totalorder %s113, %s115
    %p119 = scmp.eq.s32.totalorder %s11, 0
    %p120 = por %p118, %p119
    %p121 = scmp.ne.s32.totalorder %s113, %s115
    %p122 = scmp.eq.s32.totalorder %s16, 1
    %p123 = por %p121, %p122
    %p124 = scmp.ne.s32.totalorder %s115, %s116
    %p125 = scmp.eq.s32.totalorder %s16, 0
    %p126 = por %p124, %p125
    %p127 = scmp.ne.s32.totalorder %s115, %s116
    %p128 = scmp.eq.s32.totalorder %s17, 1
    %p129 = por %p127, %p128
    %p131 = scmp.ne.s32.totalorder %s116, %s130
    %p132 = scmp.eq.s32.totalorder %s17, 0
    %p133 = por %p131, %p132
    %s134 = ssub.s32 %s11, %s18
    %p135 = scmp.eq.s32.totalorder %s134, 0
    %s137 = sadd.s32 %s136, 1
    %s138 = scalar_select %p135, %s136, %s137
    %p141 = pneg %p135
    %p142 = scmp.eq.s32.totalorder %s11, 1
    %p143 = por %p141, %p142
    %p144 = scmp.ne.s32.totalorder %s136, %s139
    %p145 = scmp.eq.s32.totalorder %s11, 0
    %p146 = por %p144, %p145
    %p147 = scmp.ne.s32.totalorder %s136, %s139
    %p148 = scmp.eq.s32.totalorder %s16, 1
    %p149 = por %p147, %p148
    %p150 = scmp.ne.s32.totalorder %s139, %s140
    %p151 = scmp.eq.s32.totalorder %s16, 0
    %p152 = por %p150, %p151
    %p153 = scmp.ne.s32.totalorder %s139, %s140
    %p154 = scmp.eq.s32.totalorder %s17, 1
    %p155 = por %p153, %p154
    %p157 = scmp.ne.s32.totalorder %s140, %s156
    %p158 = scmp.eq.s32.totalorder %s17, 0
    %p159 = por %p157, %p158
    %p160 = scmp.le.s32.totalorder 1, %s11
    %p161 = scmp.lt.s32.totalorder %s11, 3
    %p162 = pnand %p160, %p161
    %p163 = pneg %p162
    // Predicated region
    $region9: #{medsam_lite_forward.1} parent=5 // pred_check
      _
    $region10: #{medsam_lite_forward.1} parent=5 // pred_check_branch
      %165 = sbr.rel (%p162) target = $region12
    $region11: #{medsam_lite_forward.1} parent=5 // pred_region
      %s166 = ssub.s32 %s11, 1
      // Predicated region
      $region13: #{medsam_lite_forward.1} parent=11 // pred_check
        %p167 = pneg %p84
      $region14: #{medsam_lite_forward.1} parent=11 // pred_check_branch
        %169 = sbr.rel (%p167) target = $region16
      $region15: #{medsam_lite_forward.1} parent=11 // pred_region
        _
      $region16: #{medsam_lite_forward.1} parent=11 // pred_fallthru
        _
      // Predicated region
      $region17: #{medsam_lite_forward.1} parent=11 // pred_check
        %p170 = pneg %p105
      $region18: #{medsam_lite_forward.1} parent=11 // pred_check_branch
        %172 = sbr.rel (%p170) target = $region20
      $region19: #{medsam_lite_forward.1} parent=11 // pred_region
        _
      $region20: #{medsam_lite_forward.1} parent=11 // pred_fallthru
        _
      // Predicated region
      $region21: #{medsam_lite_forward.1} parent=11 // pred_check
        %p173 = pneg %p126
      $region22: #{medsam_lite_forward.1} parent=11 // pred_check_branch
        %175 = sbr.rel (%p173) target = $region24
      $region23: #{medsam_lite_forward.1} parent=11 // pred_region
        _
      $region24: #{medsam_lite_forward.1} parent=11 // pred_fallthru
        _
    $region12: #{medsam_lite_forward.1} parent=5 // pred_fallthru
      _
    %p176 = scmp.lt.s32.totalorder %s11, 2
    // Predicated region
    $region25: #{medsam_lite_forward.1} parent=5 // pred_check
      %p177 = pneg %p176
    $region26: #{medsam_lite_forward.1} parent=5 // pred_check_branch
      %179 = sbr.rel (%p177) target = $region28
    $region27: #{medsam_lite_forward.1} parent=5 // pred_region
      // Predicated region
      $region29: #{medsam_lite_forward.1} parent=27 // pred_check
        %p180 = pneg %p31
      $region30: #{medsam_lite_forward.1} parent=27 // pred_check_branch
        %182 = sbr.rel (%p180) target = $region32
      $region31: #{medsam_lite_forward.1} parent=27 // pred_region
        %s183 = smul.u32 2, %s11
        %p184 = scmp.lt.s32.totalorder %s183, 3
        %s185 = scalar_select %p184, %s183, 3
        %s186 = smul.addr %s185, 8
        %s187 = scalar_lea.vmem %s0, %s186
        %s188 = smul.u32 2, %s11
      $region32: #{medsam_lite_forward.1} parent=27 // pred_fallthru
        _
      // Predicated region
      $region33: #{medsam_lite_forward.1} parent=27 // pred_check
        %p189 = pneg %p57
      $region34: #{medsam_lite_forward.1} parent=27 // pred_check_branch
        %191 = sbr.rel (%p189) target = $region36
      $region35: #{medsam_lite_forward.1} parent=27 // pred_region
        %p192 = scmp.lt.s32.totalorder %s11, 1
        %s193 = scalar_select %p192, %s11, 1
        %s194 = smul.addr %s193, 8
        %s195 = scalar_lea.vmem %s1, %s194
      $region36: #{medsam_lite_forward.1} parent=27 // pred_fallthru
        _
    $region28: #{medsam_lite_forward.1} parent=5 // pred_fallthru
      _
    %p196 = scmp.le.s32.totalorder 1, %s11
    %p197 = scmp.lt.s32.totalorder %s11, 3
    %p198 = pnand %p196, %p197
    %p199 = pneg %p198
    // Predicated region
    $region37: #{medsam_lite_forward.1} parent=5 // pred_check
      _
    $region38: #{medsam_lite_forward.1} parent=5 // pred_check_branch
      %201 = sbr.rel (%p198) target = $region40
    $region39: #{medsam_lite_forward.1} parent=5 // pred_region
      %s202 = ssub.s32 %s11, 1
      %s203 = smul.u32 2, %s16
      %p204 = scmp.lt.s32.totalorder %s203, 3
      %s205 = scalar_select %p204, %s203, 3
      %s206 = smul.addr %s205, 8
      %s207 = scalar_lea.vmem %s0, %s206
      %p208 = pneg %p37
      %p209 = pneg %p34
      %p210 = scmp.lt.s32.totalorder %s16, 1
      %s211 = scalar_select %p210, %s16, 1
      %s212 = smul.addr %s211, 8
      %s213 = scalar_lea.vmem %s1, %s212
      %p214 = pneg %p63
      %p215 = pneg %p60
      %p216 = pneg %p84
      %p217 = pneg %p81
      %p218 = pneg %p105
      %p219 = pneg %p102
      %p220 = pneg %p126
      %p221 = pneg %p123
      %p222 = pneg %p152
      %p223 = pneg %p149
      %s224 = smul.u32 2, %s16
      %p225 = scmp.lt.s32.totalorder %s224, 3
      %s226 = scalar_select %p225, %s224, 3
      %s227 = smul.addr %s226, 8
      %s228 = scalar_lea.vmem %s5, %s227
      %s229 = smul.u32 2, %s16
      %p230 = scmp.lt.s32.totalorder %s229, 3
      %s231 = scalar_select %p230, %s229, 3
      %s232 = smul.addr %s231, 8
      %s233 = scalar_lea.vmem %s0, %s232
      %s234 = smul.u32 2, %s16
      %p235 = scmp.lt.s32.totalorder %s16, 1
      %s236 = scalar_select %p235, %s16, 1
      %s237 = smul.addr %s236, 8
      %s238 = scalar_lea.vmem %s1, %s237
      %s239 = smul.u32 2, %s16
      %p240 = scmp.lt.s32.totalorder %s239, 3
      %s241 = scalar_select %p240, %s239, 3
      %s242 = smul.addr %s241, 8
      %s243 = scalar_lea.vmem %s5, %s242
      %s244 = smul.u32 2, %s16
      %v245 = vlaneseq
      %v246 = vand.u32 %v245, 127
      %vm247 = vcmp.eq.s32.totalorder %v246, 7
      %v248 = vsel %vm247, -1e+30, 0.0
      %v249 = vld [vmem:[%s233] sm:$0xff]
      %v250 = vld [vmem:[%s233 + $0x8] sm:$0xff]
      %v251 = vld [vmem:[%s2] sm:$0xff]
      %v252 = vld [vmem:[%s2 + $0x8] sm:$0xff]
      %v253 = vld [vmem:[%s2 + $0x10] sm:$0xff]
      %v254 = vld [vmem:[%s2 + $0x18] sm:$0xff]
      %v255 = vld [vmem:[%s2 + $0x20] sm:$0xff]
      %v256 = vld [vmem:[%s2 + $0x28] sm:$0xff]
      %vm257 = vcmask 392192
      %v259 = vsel %vm257, %v249, 0
      %v262 = vsel %vm257, %v250, 0
      %264 = vmatprep.subr.mxu0 0.0
      %265 = vmatpush1.msra.mxu0 %v251
      %266 = vmatprep.subr.mxu0 0.0
      %267 = vmatpush1.msra.mxu0 %v252
      %268 = vmatprep.subr.mxu0 0.0
      %269 = vmatpush1.msra.mxu0 %v253
      %270 = vmatprep.subr.mxu0 0.0
      %271 = vmatpush1.msra.mxu0 %v254
      %272 = vmatprep.subr.mxu0 0.0
      %273 = vmatpush1.msra.mxu0 %v255
      %274 = vmatprep.subr.mxu0 0.0
      %275 = vmatpush1.msra.mxu0 %v256
      %276 = vmatprep.subr.mxu0 0.0
      %277 = vmatpush1.msra.mxu0 0.0
      %278 = vmatprep.subr.mxu0 0.0
      %279 = vmatpush1.msra.mxu0 0.0
      %280 = vmatprep.subr.mxu0 0.0
      %281 = vmatpush1.msra.mxu0 0.0
      %282 = vmatprep.subr.mxu0 0.0
      %283 = vmatpush1.msra.mxu0 0.0
      %284 = vmatprep.subr.mxu0 0.0
      %285 = vmatpush1.msra.mxu0 0.0
      %286 = vmatprep.subr.mxu0 0.0
      %287 = vmatpush1.msra.mxu0 0.0
      %288 = vmatprep.subr.mxu0 0.0
      %289 = vmatpush1.msra.mxu0 0.0
      %290 = vmatprep.subr.mxu0 0.0
      %291 = vmatpush1.msra.mxu0 0.0
      %292 = vmatprep.subr.mxu0 0.0
      %293 = vmatpush1.msra.mxu0 0.0
      %294 = vmatprep.subr.mxu0 0.0
      %295 = vmatpush1.msra.mxu0 0.0
      %296 = vmatprep.subr.mxu0 0.0
      %297 = vmatpush1.msra.mxu0 0.0
      %298 = vmatprep.subr.mxu0 0.0
      %299 = vmatpush1.msra.mxu0 0.0
      %300 = vmatprep.subr.mxu0 0.0
      %301 = vmatpush1.msra.mxu0 0.0
      %302 = vmatprep.subr.mxu0 0.0
      %303 = vmatpush1.msra.mxu0 0.0
      %304 = vmatprep.subr.mxu0 0.0
      %305 = vmatpush1.msra.mxu0 0.0
      %306 = vmatprep.subr.mxu0 0.0
      %307 = vmatpush1.msra.mxu0 0.0
      %308 = vmatprep.subr.mxu0 0.0
      %309 = vmatpush1.msra.mxu0 0.0
      %310 = vmatprep.subr.mxu0 0.0
      %311 = vmatpush1.msra.mxu0 0.0
      %312 = vmatprep.subr.mxu0 0.0
      %313 = vmatpush1.msra.mxu0 0.0
      %314 = vmatprep.subr.mxu0 0.0
      %315 = vmatpush1.msra.mxu0 0.0
      %316 = vmatprep.subr.mxu0 0.0
      %317 = vmatpush1.msra.mxu0 0.0
      %318 = vmatprep.subr.mxu0 0.0
      %319 = vmatpush1.msra.mxu0 0.0
      %320 = vmatprep.subr.mxu0 0.0
      %321 = vmatpush1.msra.mxu0 0.0
      %322 = vmatprep.subr.mxu0 0.0
      %323 = vmatpush1.msra.mxu0 0.0
      %324 = vmatprep.subr.mxu0 0.0
      %325 = vmatpush1.msra.mxu0 0.0
      %326 = vmatprep.subr.mxu0 0.0
      %327 = vmatpush1.msra.mxu0 0.0
      %328 = vmatprep.mubr.f32.mxu0 0.0
      %329 = vmatmul.mubr.f32.gmra.mrb[0].mxu0 %v259
      %v330 = vpop.f32.mrb[0].mxu0
      %v331 = vadd.f32 0.0, %v330
      %v332 = vpop.f32.mrb[0].mxu0
      %333 = vmatprep.mubr.f32.mxu0 0.0
      %334 = vmatmul.mubr.f32.gmra.mrb[0].mxu0 %v262
      %v335 = vpop.f32.mrb[0].mxu0
      %v336 = vadd.f32 0.0, %v335
      %v337 = vpop.f32.mrb[0].mxu0
      %338 = vdwg.mxu0
      %v339 = vld [vmem:[%s3] sm:$0xff]
      %v340 = vld [vmem:[%s3 + $0x8] sm:$0xff]
      %v341 = vld [vmem:[%s3 + $0x10] sm:$0xff]
      %v342 = vld [vmem:[%s3 + $0x18] sm:$0xff]
      %vm343 = vcmask 261120
      %v345 = vsel %vm343, %v331, 0
      %v348 = vsel %vm343, %v336, 0
      %350 = vmatprep.subr.mxu0 0.0
      %351 = vmatpush1.msra.mxu0 %v339
      %352 = vmatprep.subr.mxu0 0.0
      %353 = vmatpush1.msra.mxu0 %v340
      %354 = vmatprep.subr.mxu0 0.0
      %355 = vmatpush1.msra.mxu0 %v341
      %356 = vmatprep.subr.mxu0 0.0
      %357 = vmatpush1.msra.mxu0 %v342
      %358 = vmatprep.subr.mxu0 0.0
      %359 = vmatpush1.msra.mxu0 0.0
      %360 = vmatprep.subr.mxu0 0.0
      %361 = vmatpush1.msra.mxu0 0.0
      %362 = vmatprep.subr.mxu0 0.0
      %363 = vmatpush1.msra.mxu0 0.0
      %364 = vmatprep.subr.mxu0 0.0
      %365 = vmatpush1.msra.mxu0 0.0
      %366 = vmatprep.subr.mxu0 0.0
      %367 = vmatpush1.msra.mxu0 0.0
      %368 = vmatprep.subr.mxu0 0.0
      %369 = vmatpush1.msra.mxu0 0.0
      %370 = vmatprep.subr.mxu0 0.0
      %371 = vmatpush1.msra.mxu0 0.0
      %372 = vmatprep.subr.mxu0 0.0
      %373 = vmatpush1.msra.mxu0 0.0
      %374 = vmatprep.subr.mxu0 0.0
      %375 = vmatpush1.msra.mxu0 0.0
      %376 = vmatprep.subr.mxu0 0.0
      %377 = vmatpush1.msra.mxu0 0.0
      %378 = vmatprep.subr.mxu0 0.0
      %379 = vmatpush1.msra.mxu0 0.0
      %380 = vmatprep.subr.mxu0 0.0
      %381 = vmatpush1.msra.mxu0 0.0
      %382 = vmatprep.subr.mxu0 0.0
      %383 = vmatpush1.msra.mxu0 0.0
      %384 = vmatprep.subr.mxu0 0.0
      %385 = vmatpush1.msra.mxu0 0.0
      %386 = vmatprep.subr.mxu0 0.0
      %387 = vmatpush1.msra.mxu0 0.0
      %388 = vmatprep.subr.mxu0 0.0
      %389 = vmatpush1.msra.mxu0 0.0
      %390 = vmatprep.subr.mxu0 0.0
      %391 = vmatpush1.msra.mxu0 0.0
      %392 = vmatprep.subr.mxu0 0.0
      %393 = vmatpush1.msra.mxu0 0.0
      %394 = vmatprep.subr.mxu0 0.0
      %395 = vmatpush1.msra.mxu0 0.0
      %396 = vmatprep.subr.mxu0 0.0
      %397 = vmatpush1.msra.mxu0 0.0
      %398 = vmatprep.subr.mxu0 0.0
      %399 = vmatpush1.msra.mxu0 0.0
      %400 = vmatprep.subr.mxu0 0.0
      %401 = vmatpush1.msra.mxu0 0.0
      %402 = vmatprep.subr.mxu0 0.0
      %403 = vmatpush1.msra.mxu0 0.0
      %404 = vmatprep.subr.mxu0 0.0
      %405 = vmatpush1.msra.mxu0 0.0
      %406 = vmatprep.subr.mxu0 0.0
      %407 = vmatpush1.msra.mxu0 0.0
      %408 = vmatprep.subr.mxu0 0.0
      %409 = vmatpush1.msra.mxu0 0.0
      %410 = vmatprep.subr.mxu0 0.0
      %411 = vmatpush1.msra.mxu0 0.0
      %412 = vmatprep.subr.mxu0 0.0
      %413 = vmatpush1.msra.mxu0 0.0
      %414 = vmatprep.mubr.f32.mxu0 0.0
      %415 = vmatmul.mubr.f32.gmra.mrb[0].mxu0 %v345
      %v416 = vpop.f32.mrb[0].mxu0
      %v417 = vadd.f32 0.0, %v416
      %v418 = vpop.f32.mrb[0].mxu0
      %419 = vmatprep.mubr.f32.mxu0 0.0
      %420 = vmatmul.mubr.f32.gmra.mrb[0].mxu0 %v348
      %v421 = vpop.f32.mrb[0].mxu0
      %v422 = vadd.f32 0.0, %v421
      %v423 = vpop.f32.mrb[0].mxu0
      %424 = vdwg.mxu0
      %v425 = vmul.f32 %v417, %v417
      %v426 = vmul.f32 %v422, %v422
      %v427 = vmul.f32 %v417, %v425
      %v428 = vmul.f32 %v422, %v426
      %v429 = vmul.f32 %v427, 0.044715
      %v430 = vmul.f32 %v428, 0.044715
      %v431 = vadd.f32 %v417, %v429
      %v432 = vadd.f32 %v422, %v430
      %v433 = vmul.f32 %v431, 0.7978846
      %v434 = vmul.f32 %v432, 0.7978846
      %v435 = vtanh.pop %v433
      %v436 = vtanh.pop %v434
      %v437 = vadd.f32 %v435, 1.0
      %v438 = vadd.f32 %v436, 1.0
      %v439 = vmul.f32 %v437, 0.5
      %v440 = vmul.f32 %v438, 0.5
      %v441 = vmul.f32 %v417, %v439
      %v442 = vmul.f32 %v422, %v440
      %v443 = vld [vmem:[%s2 + $0x30] sm:$0xff]
      %v444 = vld [vmem:[%s2 + $0x38] sm:$0xff]
      %v445 = vld [vmem:[%s2 + $0x40] sm:$0xff]
      %v446 = vld [vmem:[%s2 + $0x48] sm:$0xff]
      %v447 = vld [vmem:[%s2 + $0x50] sm:$0xff]
      %v448 = vld [vmem:[%s2 + $0x58] sm:$0xff]
      %v449 = vld [vmem:[%s2 + $0x60] sm:$0xff]
      %v450 = vld [vmem:[%s2 + $0x68] sm:$0xff]
      %vm451 = vcmask 523264
      %v453 = vsel %vm451, %v441, 0
      %v456 = vsel %vm451, %v442, 0
      %458 = vmatprep.subr.mxu0 0.0
      %459 = vmatpush1.msra.mxu0 %v443
      %460 = vmatprep.subr.mxu0 0.0
      %461 = vmatpush1.msra.mxu0 %v444
      %462 = vmatprep.subr.mxu0 0.0
      %463 = vmatpush1.msra.mxu0 %v445
      %464 = vmatprep.subr.mxu0 0.0
      %465 = vmatpush1.msra.mxu0 %v446
      %466 = vmatprep.subr.mxu0 0.0
      %467 = vmatpush1.msra.mxu0 %v447
      %468 = vmatprep.subr.mxu0 0.0
      %469 = vmatpush1.msra.mxu0 %v448
      %470 = vmatprep.subr.mxu0 0.0
      %471 = vmatpush1.msra.mxu0 %v449
      %472 = vmatprep.subr.mxu0 0.0
      %473 = vmatpush1.msra.mxu0 %v450
      %474 = vmatprep.subr.mxu0 0.0
      %475 = vmatpush1.msra.mxu0 0.0
      %476 = vmatprep.subr.mxu0 0.0
      %477 = vmatpush1.msra.mxu0 0.0
      %478 = vmatprep.subr.mxu0 0.0
      %479 = vmatpush1.msra.mxu0 0.0
      %480 = vmatprep.subr.mxu0 0.0
      %481 = vmatpush1.msra.mxu0 0.0
      %482 = vmatprep.subr.mxu0 0.0
      %483 = vmatpush1.msra.mxu0 0.0
      %484 = vmatprep.subr.mxu0 0.0
      %485 = vmatpush1.msra.mxu0 0.0
      %486 = vmatprep.subr.mxu0 0.0
      %487 = vmatpush1.msra.mxu0 0.0
      %488 = vmatprep.subr.mxu0 0.0
      %489 = vmatpush1.msra.mxu0 0.0
      %490 = vmatprep.subr.mxu0 0.0
      %491 = vmatpush1.msra.mxu0 0.0
      %492 = vmatprep.subr.mxu0 0.0
      %493 = vmatpush1.msra.mxu0 0.0
      %494 = vmatprep.subr.mxu0 0.0
      %495 = vmatpush1.msra.mxu0 0.0
      %496 = vmatprep.subr.mxu0 0.0
      %497 = vmatpush1.msra.mxu0 0.0
      %498 = vmatprep.subr.mxu0 0.0
      %499 = vmatpush1.msra.mxu0 0.0
      %500 = vmatprep.subr.mxu0 0.0
      %501 = vmatpush1.msra.mxu0 0.0
      %502 = vmatprep.subr.mxu0 0.0
      %503 = vmatpush1.msra.mxu0 0.0
      %504 = vmatprep.subr.mxu0 0.0
      %505 = vmatpush1.msra.mxu0 0.0
      %506 = vmatprep.subr.mxu0 0.0
      %507 = vmatpush1.msra.mxu0 0.0
      %508 = vmatprep.subr.mxu0 0.0
      %509 = vmatpush1.msra.mxu0 0.0
      %510 = vmatprep.subr.mxu0 0.0
      %511 = vmatpush1.msra.mxu0 0.0
      %512 = vmatprep.subr.mxu0 0.0
      %513 = vmatpush1.msra.mxu0 0.0
      %514 = vmatprep.subr.mxu0 0.0
      %515 = vmatpush1.msra.mxu0 0.0
      %516 = vmatprep.subr.mxu0 0.0
      %517 = vmatpush1.msra.mxu0 0.0
      %518 = vmatprep.subr.mxu0 0.0
      %519 = vmatpush1.msra.mxu0 0.0
      %520 = vmatprep.subr.mxu0 0.0
      %521 = vmatpush1.msra.mxu0 0.0
      %522 = vmatprep.mubr.f32.mxu0 0.0
      %523 = vmatmul.mubr.f32.gmra.mrb[0].mxu0 %v453
      %v524 = vpop.f32.mrb[0].mxu0
      %v525 = vadd.f32 0.0, %v524
      %v526 = vpop.f32.mrb[0].mxu0
      %527 = vmatprep.mubr.f32.mxu0 0.0
      %528 = vmatmul.mubr.f32.gmra.mrb[0].mxu0 %v456
      %v529 = vpop.f32.mrb[0].mxu0
      %v530 = vadd.f32 0.0, %v529
      %v531 = vpop.f32.mrb[0].mxu0
      %532 = vdwg.mxu0
      %v533 = vadd.f32 %v331, %v525
      %v534 = vadd.f32 %v336, %v530
      %v535 = vld [vmem:[%s2 + $0x268] sm:$0x1]
      %v536 = vlaneseq
      %v537 = vshrl.u32 %v536, 7
      %v538 = vsub.s32 0, %v537
      %v539 = vrot.slane %v535, %v538
      %v540 = vadd.f32 %v533, %v539
      %v541 = vadd.f32 %v534, %v539
      %v542 = vld [vmem:[%s2 + $0x250] sm:$0xff]
      %v543 = vld [vmem:[%s2 + $0x258] sm:$0xff]
      %v544 = vld [vmem:[%s238] sm:$0xff]
      %v545 = vld [vmem:[%s2 + $0x70] sm:$0xff]
      %v546 = vld [vmem:[%s2 + $0x78] sm:$0xff]
      %v547 = vld [vmem:[%s2 + $0x80] sm:$0xff]
      %v548 = vld [vmem:[%s2 + $0x88] sm:$0xff]
      %v550 = vsel %vm343, %v544, 0
      %552 = vmatprep.subr.mxu0 0.0
      %553 = vmatpush1.msra.mxu0 %v545
      %554 = vmatprep.subr.mxu0 0.0
      %555 = vmatpush1.msra.mxu0 %v546
      %556 = vmatprep.subr.mxu0 0.0
      %557 = vmatpush1.msra.mxu0 %v547
      %558 = vmatprep.subr.mxu0 0.0
      %559 = vmatpush1.msra.mxu0 %v548
      %560 = vmatprep.subr.mxu0 0.0
      %561 = vmatpush1.msra.mxu0 0.0
      %562 = vmatprep.subr.mxu0 0.0
      %563 = vmatpush1.msra.mxu0 0.0
      %564 = vmatprep.subr.mxu0 0.0
      %565 = vmatpush1.msra.mxu0 0.0
      %566 = vmatprep.subr.mxu0 0.0
      %567 = vmatpush1.msra.mxu0 0.0
      %568 = vmatprep.subr.mxu0 0.0
      %569 = vmatpush1.msra.mxu0 0.0
      %570 = vmatprep.subr.mxu0 0.0
      %571 = vmatpush1.msra.mxu0 0.0
      %572 = vmatprep.subr.mxu0 0.0
      %573 = vmatpush1.msra.mxu0 0.0
      %574 = vmatprep.subr.mxu0 0.0
      %575 = vmatpush1.msra.mxu0 0.0
      %576 = vmatprep.subr.mxu0 0.0
      %577 = vmatpush1.msra.mxu0 0.0
      %578 = vmatprep.subr.mxu0 0.0
      %579 = vmatpush1.msra.mxu0 0.0
      %580 = vmatprep.subr.mxu0 0.0
      %581 = vmatpush1.msra.mxu0 0.0
      %582 = vmatprep.subr.mxu0 0.0
      %583 = vmatpush1.msra.mxu0 0.0
      %584 = vmatprep.subr.mxu0 0.0
      %585 = vmatpush1.msra.mxu0 0.0
      %586 = vmatprep.subr.mxu0 0.0
      %587 = vmatpush1.msra.mxu0 0.0
      %588 = vmatprep.subr.mxu0 0.0
      %589 = vmatpush1.msra.mxu0 0.0
      %590 = vmatprep.subr.mxu0 0.0
      %591 = vmatpush1.msra.mxu0 0.0
      %592 = vmatprep.subr.mxu0 0.0
      %593 = vmatpush1.msra.mxu0 0.0
      %594 = vmatprep.subr.mxu0 0.0
      %595 = vmatpush1.msra.mxu0 0.0
      %596 = vmatprep.subr.mxu0 0.0
      %597 = vmatpush1.msra.mxu0 0.0
      %598 = vmatprep.subr.mxu0 0.0
      %599 = vmatpush1.msra.mxu0 0.0
      %600 = vmatprep.subr.mxu0 0.0
      %601 = vmatpush1.msra.mxu0 0.0
      %602 = vmatprep.subr.mxu0 0.0
      %603 = vmatpush1.msra.mxu0 0.0
      %604 = vmatprep.subr.mxu0 0.0
      %605 = vmatpush1.msra.mxu0 0.0
      %606 = vmatprep.subr.mxu0 0.0
      %607 = vmatpush1.msra.mxu0 0.0
      %608 = vmatprep.subr.mxu0 0.0
      %609 = vmatpush1.msra.mxu0 0.0
      %610 = vmatprep.subr.mxu0 0.0
      %611 = vmatpush1.msra.mxu0 0.0
      %612 = vmatprep.subr.mxu0 0.0
      %613 = vmatpush1.msra.mxu0 0.0
      %614 = vmatprep.subr.mxu0 0.0
      %615 = vmatpush1.msra.mxu0 0.0
      %616 = vmatprep.mubr.f32.mxu0 0.0
      %617 = vmatmul.mubr.f32.gmra.mrb[0].mxu0 %v550
      %v618 = vpop.f32.mrb[0].mxu0
      %v619 = vadd.f32 0.0, %v618
      %v620 = vpop.f32.mrb[0].mxu0
      %621 = vdwg.mxu0
      %v622 = vld [vmem:[%s2 + $0x90] sm:$0xff]
      %v623 = vld [vmem:[%s2 + $0x98] sm:$0xff]
      %v624 = vld [vmem:[%s2 + $0xa0] sm:$0xff]
      %v625 = vld [vmem:[%s2 + $0xa8] sm:$0xff]
      %626 = vmatprep.subr.mxu0 0.0
      %627 = vmatpush1.msra.mxu0 %v622
      %628 = vmatprep.subr.mxu0 0.0
      %629 = vmatpush1.msra.mxu0 %v623
      %630 = vmatprep.subr.mxu0 0.0
      %631 = vmatpush1.msra.mxu0 %v624
      %632 = vmatprep.subr.mxu0 0.0
      %633 = vmatpush1.msra.mxu0 %v625
      %634 = vmatprep.subr.mxu0 0.0
      %635 = vmatpush1.msra.mxu0 0.0
      %636 = vmatprep.subr.mxu0 0.0
      %637 = vmatpush1.msra.mxu0 0.0
      %638 = vmatprep.subr.mxu0 0.0
      %639 = vmatpush1.msra.mxu0 0.0
      %640 = vmatprep.subr.mxu0 0.0
      %641 = vmatpush1.msra.mxu0 0.0
      %642 = vmatprep.subr.mxu0 0.0
      %643 = vmatpush1.msra.mxu0 0.0
      %644 = vmatprep.subr.mxu0 0.0
      %645 = vmatpush1.msra.mxu0 0.0
      %646 = vmatprep.subr.mxu0 0.0
      %647 = vmatpush1.msra.mxu0 0.0
      %648 = vmatprep.subr.mxu0 0.0
      %649 = vmatpush1.msra.mxu0 0.0
      %650 = vmatprep.subr.mxu0 0.0
      %651 = vmatpush1.msra.mxu0 0.0
      %652 = vmatprep.subr.mxu0 0.0
      %653 = vmatpush1.msra.mxu0 0.0
      %654 = vmatprep.subr.mxu0 0.0
      %655 = vmatpush1.msra.mxu0 0.0
      %656 = vmatprep.subr.mxu0 0.0
      %657 = vmatpush1.msra.mxu0 0.0
      %658 = vmatprep.subr.mxu0 0.0
      %659 = vmatpush1.msra.mxu0 0.0
      %660 = vmatprep.subr.mxu0 0.0
      %661 = vmatpush1.msra.mxu0 0.0
      %662 = vmatprep.subr.mxu0 0.0
      %663 = vmatpush1.msra.mxu0 0.0
      %664 = vmatprep.subr.mxu0 0.0
      %665 = vmatpush1.msra.mxu0 0.0
      %666 = vmatprep.subr.mxu0 0.0
      %667 = vmatpush1.msra.mxu0 0.0
      %668 = vmatprep.subr.mxu0 0.0
      %669 = vmatpush1.msra.mxu0 0.0
      %670 = vmatprep.subr.mxu0 0.0
      %671 = vmatpush1.msra.mxu0 0.0
      %672 = vmatprep.subr.mxu0 0.0
      %673 = vmatpush1.msra.mxu0 0.0
      %674 = vmatprep.subr.mxu0 0.0
      %675 = vmatpush1.msra.mxu0 0.0
      %676 = vmatprep.subr.mxu0 0.0
      %677 = vmatpush1.msra.mxu0 0.0
      %678 = vmatprep.subr.mxu0 0.0
      %679 = vmatpush1.msra.mxu0 0.0
      %680 = vmatprep.subr.mxu0 0.0
      %681 = vmatpush1.msra.mxu0 0.0
      %682 = vmatprep.subr.mxu0 0.0
      %683 = vmatpush1.msra.mxu0 0.0
      %684 = vmatprep.subr.mxu0 0.0
      %685 = vmatpush1.msra.mxu0 0.0
      %686 = vmatprep.subr.mxu0 0.0
      %687 = vmatpush1.msra.mxu0 0.0
      %688 = vmatprep.subr.mxu0 0.0
      %689 = vmatpush1.msra.mxu0 0.0
      %690 = vmatprep.mubr.f32.mxu0 0.0
      %691 = vmatmul.mubr.f32.gmra.mrb[0].mxu0 %v550
      %v692 = vpop.f32.mrb[0].mxu0
      %v693 = vadd.f32 0.0, %v692
      %v694 = vpop.f32.mrb[0].mxu0
      %695 = vdwg.mxu0
      %v696 = vld [vmem:[%s2 + $0xb0] sm:$0xff]
      %v697 = vld [vmem:[%s2 + $0xb8] sm:$0xff]
      %v698 = vld [vmem:[%s2 + $0xc0] sm:$0xff]
      %v699 = vld [vmem:[%s2 + $0xc8] sm:$0xff]
      %700 = vmatprep.subr.mxu0 0.0
      %701 = vmatpush1.msra.mxu0 %v696
      %702 = vmatprep.subr.mxu0 0.0
      %703 = vmatpush1.msra.mxu0 %v697
      %704 = vmatprep.subr.mxu0 0.0
      %705 = vmatpush1.msra.mxu0 %v698
      %706 = vmatprep.subr.mxu0 0.0
      %707 = vmatpush1.msra.mxu0 %v699
      %708 = vmatprep.subr.mxu0 0.0
      %709 = vmatpush1.msra.mxu0 0.0
      %710 = vmatprep.subr.mxu0 0.0
      %711 = vmatpush1.msra.mxu0 0.0
      %712 = vmatprep.subr.mxu0 0.0
      %713 = vmatpush1.msra.mxu0 0.0
      %714 = vmatprep.subr.mxu0 0.0
      %715 = vmatpush1.msra.mxu0 0.0
      %716 = vmatprep.subr.mxu0 0.0
      %717 = vmatpush1.msra.mxu0 0.0
      %718 = vmatprep.subr.mxu0 0.0
      %719 = vmatpush1.msra.mxu0 0.0
      %720 = vmatprep.subr.mxu0 0.0
      %721 = vmatpush1.msra.mxu0 0.0
      %722 = vmatprep.subr.mxu0 0.0
      %723 = vmatpush1.msra.mxu0 0.0
      %724 = vmatprep.subr.mxu0 0.0
      %725 = vmatpush1.msra.mxu0 0.0
      %726 = vmatprep.subr.mxu0 0.0
      %727 = vmatpush1.msra.mxu0 0.0
      %728 = vmatprep.subr.mxu0 0.0
      %729 = vmatpush1.msra.mxu0 0.0
      %730 = vmatprep.subr.mxu0 0.0
      %731 = vmatpush1.msra.mxu0 0.0
      %732 = vmatprep.subr.mxu0 0.0
      %733 = vmatpush1.msra.mxu0 0.0
      %734 = vmatprep.subr.mxu0 0.0
      %735 = vmatpush1.msra.mxu0 0.0
      %736 = vmatprep.subr.mxu0 0.0
      %737 = vmatpush1.msra.mxu0 0.0
      %738 = vmatprep.subr.mxu0 0.0
      %739 = vmatpush1.msra.mxu0 0.0
      %740 = vmatprep.subr.mxu0 0.0
      %741 = vmatpush1.msra.mxu0 0.0
      %742 = vmatprep.subr.mxu0 0.0
      %743 = vmatpush1.msra.mxu0 0.0
      %744 = vmatprep.subr.mxu0 0.0
      %745 = vmatpush1.msra.mxu0 0.0
      %746 = vmatprep.subr.mxu0 0.0
      %747 = vmatpush1.msra.mxu0 0.0
      %748 = vmatprep.subr.mxu0 0.0
      %749 = vmatpush1.msra.mxu0 0.0
      %750 = vmatprep.subr.mxu0 0.0
      %751 = vmatpush1.msra.mxu0 0.0
      %752 = vmatprep.subr.mxu0 0.0
      %753 = vmatpush1.msra.mxu0 0.0
      %754 = vmatprep.subr.mxu0 0.0
      %755 = vmatpush1.msra.mxu0 0.0
      %756 = vmatprep.subr.mxu0 0.0
      %757 = vmatpush1.msra.mxu0 0.0
      %758 = vmatprep.subr.mxu0 0.0
      %759 = vmatpush1.msra.mxu0 0.0
      %760 = vmatprep.subr.mxu0 0.0
      %761 = vmatpush1.msra.mxu0 0.0
      %762 = vmatprep.subr.mxu0 0.0
      %763 = vmatpush1.msra.mxu0 0.0
      %764 = vmatprep.mubr.f32.mxu0 0.0
      %765 = vmatmul.mubr.f32.gmra.mrb[0].mxu0 %v550
      %v766 = vpop.f32.mrb[0].mxu0
      %v767 = vadd.f32 0.0, %v766
      %v768 = vpop.f32.mrb[0].mxu0
      %769 = vdwg.mxu0
      %v771 = vsel %vm343, %v619, 0
      %v774 = vsel %vm343, %v693, 0
      %776 = vmatprep.subr.mxu0 0.0
      %777 = vmatpush1.xpose.msra.mxu0 %v774
      %778 = vmatprep.subr.mxu0 0.0
      %779 = vmatpush1.xpose.msra.mxu0 0.0
      %780 = vmatprep.subr.mxu0 0.0
      %781 = vmatpush1.xpose.msra.mxu0 0.0
      %782 = vmatprep.subr.mxu0 0.0
      %783 = vmatpush1.xpose.msra.mxu0 0.0
      %784 = vmatprep.subr.mxu0 0.0
      %785 = vmatpush1.xpose.msra.mxu0 0.0
      %786 = vmatprep.subr.mxu0 0.0
      %787 = vmatpush1.xpose.msra.mxu0 0.0
      %788 = vmatprep.subr.mxu0 0.0
      %789 = vmatpush1.xpose.msra.mxu0 0.0
      %790 = vmatprep.subr.mxu0 0.0
      %791 = vmatpush1.xpose.msra.mxu0 0.0
      %792 = vmatprep.subr.mxu0 0.0
      %793 = vmatpush1.xpose.msra.mxu0 0.0
      %794 = vmatprep.subr.mxu0 0.0
      %795 = vmatpush1.xpose.msra.mxu0 0.0
      %796 = vmatprep.subr.mxu0 0.0
      %797 = vmatpush1.xpose.msra.mxu0 0.0
      %798 = vmatprep.subr.mxu0 0.0
      %799 = vmatpush1.xpose.msra.mxu0 0.0
      %800 = vmatprep.subr.mxu0 0.0
      %801 = vmatpush1.xpose.msra.mxu0 0.0
      %802 = vmatprep.subr.mxu0 0.0
      %803 = vmatpush1.xpose.msra.mxu0 0.0
      %804 = vmatprep.subr.mxu0 0.0
      %805 = vmatpush1.xpose.msra.mxu0 0.0
      %806 = vmatprep.subr.mxu0 0.0
      %807 = vmatpush1.xpose.msra.mxu0 0.0
      %808 = vmatprep.subr.mxu0 0.0
      %809 = vmatpush1.xpose.msra.mxu0 0.0
      %810 = vmatprep.subr.mxu0 0.0
      %811 = vmatpush1.xpose.msra.mxu0 0.0
      %812 = vmatprep.subr.mxu0 0.0
      %813 = vmatpush1.xpose.msra.mxu0 0.0
      %814 = vmatprep.subr.mxu0 0.0
      %815 = vmatpush1.xpose.msra.mxu0 0.0
      %816 = vmatprep.subr.mxu0 0.0
      %817 = vmatpush1.xpose.msra.mxu0 0.0
      %818 = vmatprep.subr.mxu0 0.0
      %819 = vmatpush1.xpose.msra.mxu0 0.0
      %820 = vmatprep.subr.mxu0 0.0
      %821 = vmatpush1.xpose.msra.mxu0 0.0
      %822 = vmatprep.subr.mxu0 0.0
      %823 = vmatpush1.xpose.msra.mxu0 0.0
      %824 = vmatprep.subr.mxu0 0.0
      %825 = vmatpush1.xpose.msra.mxu0 0.0
      %826 = vmatprep.subr.mxu0 0.0
      %827 = vmatpush1.xpose.msra.mxu0 0.0
      %828 = vmatprep.subr.mxu0 0.0
      %829 = vmatpush1.xpose.msra.mxu0 0.0
      %830 = vmatprep.subr.mxu0 0.0
      %831 = vmatpush1.xpose.msra.mxu0 0.0
      %832 = vmatprep.subr.mxu0 0.0
      %833 = vmatpush1.xpose.msra.mxu0 0.0
      %834 = vmatprep.subr.mxu0 0.0
      %835 = vmatpush1.xpose.msra.mxu0 0.0
      %836 = vmatprep.subr.mxu0 0.0
      %837 = vmatpush1.xpose.msra.mxu0 0.0
      %838 = vmatprep.subr.mxu0 0.0
      %839 = vmatpush1.xpose.msra.mxu0 0.0
      %840 = vmatprep.mubr.f32.mxu0 0.0
      %841 = vmatmul.mubr.f32.gmra.mrb[0].mxu0 %v771
      %v842 = vpop.f32.mrb[0].mxu0
      %v843 = vadd.f32 %v248, %v842
      %v844 = vpop.f32.mrb[0].mxu0
      %845 = vdwg.mxu0
      %vm846 = vcmask 64512
      %v847 = vsel %vm846, %v843, -inf
      %848 = vmax.xlane.f32.xlu0 %v847
      %v849 = vpop.xlane.xlu0 %848
      %v850 = vsub.f32 %v843, %v849
      %v851 = vmul.f32 %v850, 1.442695
      %v852 = vpow.pop %v851
      %v853 = vsel %vm846, %v852, 0.0
      %854 = vadd.xlane.f32.xlu0 %v853
      %v855 = vpop.xlane.xlu0 %854
      %v857 = vsel %vm846, %v852, 0
      %859 = vmatprep.subr.mxu0 0.0
      %860 = vmatpush1.msra.mxu0 %v767
      %861 = vmatprep.subr.mxu0 0.0
      %862 = vmatpush1.msra.mxu0 0.0
      %863 = vmatprep.subr.mxu0 0.0
      %864 = vmatpush1.msra.mxu0 0.0
      %865 = vmatprep.subr.mxu0 0.0
      %866 = vmatpush1.msra.mxu0 0.0
      %867 = vmatprep.subr.mxu0 0.0
      %868 = vmatpush1.msra.mxu0 0.0
      %869 = vmatprep.subr.mxu0 0.0
      %870 = vmatpush1.msra.mxu0 0.0
      %871 = vmatprep.subr.mxu0 0.0
      %872 = vmatpush1.msra.mxu0 0.0
      %873 = vmatprep.subr.mxu0 0.0
      %874 = vmatpush1.msra.mxu0 0.0
      %875 = vmatprep.subr.mxu0 0.0
      %876 = vmatpush1.msra.mxu0 0.0
      %877 = vmatprep.subr.mxu0 0.0
      %878 = vmatpush1.msra.mxu0 0.0
      %879 = vmatprep.subr.mxu0 0.0
      %880 = vmatpush1.msra.mxu0 0.0
      %881 = vmatprep.subr.mxu0 0.0
      %882 = vmatpush1.msra.mxu0 0.0
      %883 = vmatprep.subr.mxu0 0.0
      %884 = vmatpush1.msra.mxu0 0.0
      %885 = vmatprep.subr.mxu0 0.0
      %886 = vmatpush1.msra.mxu0 0.0
      %887 = vmatprep.subr.mxu0 0.0
      %888 = vmatpush1.msra.mxu0 0.0
      %889 = vmatprep.subr.mxu0 0.0
      %890 = vmatpush1.msra.mxu0 0.0
      %891 = vmatprep.subr.mxu0 0.0
      %892 = vmatpush1.msra.mxu0 0.0
      %893 = vmatprep.subr.mxu0 0.0
      %894 = vmatpush1.msra.mxu0 0.0
      %895 = vmatprep.subr.mxu0 0.0
      %896 = vmatpush1.msra.mxu0 0.0
      %897 = vmatprep.subr.mxu0 0.0
      %898 = vmatpush1.msra.mxu0 0.0
      %899 = vmatprep.subr.mxu0 0.0
      %900 = vmatpush1.msra.mxu0 0.0
      %901 = vmatprep.subr.mxu0 0.0
      %902 = vmatpush1.msra.mxu0 0.0
      %903 = vmatprep.subr.mxu0 0.0
      %904 = vmatpush1.msra.mxu0 0.0
      %905 = vmatprep.subr.mxu0 0.0
      %906 = vmatpush1.msra.mxu0 0.0
      %907 = vmatprep.subr.mxu0 0.0
      %908 = vmatpush1.msra.mxu0 0.0
      %909 = vmatprep.subr.mxu0 0.0
      %910 = vmatpush1.msra.mxu0 0.0
      %911 = vmatprep.subr.mxu0 0.0
      %912 = vmatpush1.msra.mxu0 0.0
      %913 = vmatprep.subr.mxu0 0.0
      %914 = vmatpush1.msra.mxu0 0.0
      %915 = vmatprep.subr.mxu0 0.0
      %916 = vmatpush1.msra.mxu0 0.0
      %917 = vmatprep.subr.mxu0 0.0
      %918 = vmatpush1.msra.mxu0 0.0
      %919 = vmatprep.subr.mxu0 0.0
      %920 = vmatpush1.msra.mxu0 0.0
      %921 = vmatprep.subr.mxu0 0.0
      %922 = vmatpush1.msra.mxu0 0.0
      %923 = vmatprep.mubr.f32.mxu0 0.0
      %924 = vmatmul.mubr.f32.gmra.mrb[0].mxu0 %v857
      %v925 = vpop.f32.mrb[0].mxu0
      %v926 = vadd.f32 0.0, %v925
      %v927 = vpop.f32.mrb[0].mxu0
      %928 = vdwg.mxu0
      %v929 = vrcp.pop %v855
      %v930 = vmul.f32 %v926, %v929
      %v931 = vld [vmem:[%s2 + $0xd0] sm:$0xff]
      %v932 = vld [vmem:[%s2 + $0xd8] sm:$0xff]
      %v933 = vld [vmem:[%s2 + $0xe0] sm:$0xff]
      %v934 = vld [vmem:[%s2 + $0xe8] sm:$0xff]
      %v936 = vsel %vm343, %v930, 0
      %938 = vmatprep.subr.mxu0 0.0
      %939 = vmatpush1.msra.mxu0 %v931
      %940 = vmatprep.subr.mxu0 0.0
      %941 = vmatpush1.msra.mxu0 %v932
      %942 = vmatprep.subr.mxu0 0.0
      %943 = vmatpush1.msra.mxu0 %v933
      %944 = vmatprep.subr.mxu0 0.0
      %945 = vmatpush1.msra.mxu0 %v934
      %946 = vmatprep.subr.mxu0 0.0
      %947 = vmatpush1.msra.mxu0 0.0
      %948 = vmatprep.subr.mxu0 0.0
      %949 = vmatpush1.msra.mxu0 0.0
      %950 = vmatprep.subr.mxu0 0.0
      %951 = vmatpush1.msra.mxu0 0.0
      %952 = vmatprep.subr.mxu0 0.0
      %953 = vmatpush1.msra.mxu0 0.0
      %954 = vmatprep.subr.mxu0 0.0
      %955 = vmatpush1.msra.mxu0 0.0
      %956 = vmatprep.subr.mxu0 0.0
      %957 = vmatpush1.msra.mxu0 0.0
      %958 = vmatprep.subr.mxu0 0.0
      %959 = vmatpush1.msra.mxu0 0.0
      %960 = vmatprep.subr.mxu0 0.0
      %961 = vmatpush1.msra.mxu0 0.0
      %962 = vmatprep.subr.mxu0 0.0
      %963 = vmatpush1.msra.mxu0 0.0
      %964 = vmatprep.subr.mxu0 0.0
      %965 = vmatpush1.msra.mxu0 0.0
      %966 = vmatprep.subr.mxu0 0.0
      %967 = vmatpush1.msra.mxu0 0.0
      %968 = vmatprep.subr.mxu0 0.0
      %969 = vmatpush1.msra.mxu0 0.0
      %970 = vmatprep.subr.mxu0 0.0
      %971 = vmatpush1.msra.mxu0 0.0
      %972 = vmatprep.subr.mxu0 0.0
      %973 = vmatpush1.msra.mxu0 0.0
      %974 = vmatprep.subr.mxu0 0.0
      %975 = vmatpush1.msra.mxu0 0.0
      %976 = vmatprep.subr.mxu0 0.0
      %977 = vmatpush1.msra.mxu0 0.0
      %978 = vmatprep.subr.mxu0 0.0
      %979 = vmatpush1.msra.mxu0 0.0
      %980 = vmatprep.subr.mxu0 0.0
      %981 = vmatpush1.msra.mxu0 0.0
      %982 = vmatprep.subr.mxu0 0.0
      %983 = vmatpush1.msra.mxu0 0.0
      %984 = vmatprep.subr.mxu0 0.0
      %985 = vmatpush1.msra.mxu0 0.0
      %986 = vmatprep.subr.mxu0 0.0
      %987 = vmatpush1.msra.mxu0 0.0
      %988 = vmatprep.subr.mxu0 0.0
      %989 = vmatpush1.msra.mxu0 0.0
      %990 = vmatprep.subr.mxu0 0.0
      %991 = vmatpush1.msra.mxu0 0.0
      %992 = vmatprep.subr.mxu0 0.0
      %993 = vmatpush1.msra.mxu0 0.0
      %994 = vmatprep.subr.mxu0 0.0
      %995 = vmatpush1.msra.mxu0 0.0
      %996 = vmatprep.subr.mxu0 0.0
      %997 = vmatpush1.msra.mxu0 0.0
      %998 = vmatprep.subr.mxu0 0.0
      %999 = vmatpush1.msra.mxu0 0.0
      %1000 = vmatprep.subr.mxu0 0.0
      %1001 = vmatpush1.msra.mxu0 0.0
      %1002 = vmatprep.mubr.f32.mxu0 0.0
      %1003 = vmatmul.mubr.f32.gmra.mrb[0].mxu0 %v936
      %v1004 = vpop.f32.mrb[0].mxu0
      %v1005 = vadd.f32 0.0, %v1004
      %v1006 = vpop.f32.mrb[0].mxu0
      %1007 = vdwg.mxu0
      %v1008 = vadd.f32 %v544, %v1005
      %v1009 = vld [vmem:[%s2 + $0x260] sm:$0x1]
      %v1010 = vld [vmem:[%s2 + $0x264] sm:$0x1]
      %v1011 = vsel %vm343, %v1008, 0.0
      %1012 = vadd.xlane.f32.xlu0 %v1011
      %v1013 = vpop.xlane.xlu0 %1012
      %v1014 = vrcp.pop 32.0
      %v1015 = vmul.f32 %v1013, %v1014
      %v1016 = vsub.f32 %v1008, %v1015
      %v1017 = vmul.f32 %v1016, %v1016
      %v1018 = vsel %vm343, %v1017, 0.0
      %1019 = vadd.xlane.f32.xlu0 %v1018
      %v1020 = vpop.xlane.xlu0 %1019
      %v1021 = vmul.f32 %v1020, %v1014
      %v1022 = vadd.f32 %v1021, 1e-06
      %v1023 = vrsqrt.pop %v1022
      %v1024 = vmul.f32 %v1016, %v1023
      %v1025 = vlaneseq
      %v1026 = vshrl.u32 %v1025, 7
      %v1027 = vsub.s32 0, %v1026
      %v1028 = vrot.slane %v1009, %v1027
      %v1029 = vmul.f32 %v1024, %v1028
      %v1030 = vlaneseq
      %v1031 = vshrl.u32 %v1030, 7
      %v1032 = vsub.s32 0, %v1031
      %v1033 = vrot.slane %v1010, %v1032
      %v1034 = vadd.f32 %v1029, %v1033
      %v1035 = vld [vmem:[%s2 + $0xf0] sm:$0xff]
      %v1036 = vld [vmem:[%s2 + $0xf8] sm:$0xff]
      %v1037 = vld [vmem:[%s2 + $0x100] sm:$0xff]
      %v1038 = vld [vmem:[%s2 + $0x108] sm:$0xff]
      %v1040 = vsel %vm343, %v1034, 0
      %1042 = vmatprep.subr.mxu0 0.0
      %1043 = vmatpush1.msra.mxu0 %v1035
      %1044 = vmatprep.subr.mxu0 0.0
      %1045 = vmatpush1.msra.mxu0 %v1036
      %1046 = vmatprep.subr.mxu0 0.0
      %1047 = vmatpush1.msra.mxu0 %v1037
      %1048 = vmatprep.subr.mxu0 0.0
      %1049 = vmatpush1.msra.mxu0 %v1038
      %1050 = vmatprep.subr.mxu0 0.0
      %1051 = vmatpush1.msra.mxu0 0.0
      %1052 = vmatprep.subr.mxu0 0.0
      %1053 = vmatpush1.msra.mxu0 0.0
      %1054 = vmatprep.subr.mxu0 0.0
      %1055 = vmatpush1.msra.mxu0 0.0
      %1056 = vmatprep.subr.mxu0 0.0
      %1057 = vmatpush1.msra.mxu0 0.0
      %1058 = vmatprep.subr.mxu0 0.0
      %1059 = vmatpush1.msra.mxu0 0.0
      %1060 = vmatprep.subr.mxu0 0.0
      %1061 = vmatpush1.msra.mxu0 0.0
      %1062 = vmatprep.subr.mxu0 0.0
      %1063 = vmatpush1.msra.mxu0 0.0
      %1064 = vmatprep.subr.mxu0 0.0
      %1065 = vmatpush1.msra.mxu0 0.0
      %1066 = vmatprep.subr.mxu0 0.0
      %1067 = vmatpush1.msra.mxu0 0.0
      %1068 = vmatprep.subr.mxu0 0.0
      %1069 = vmatpush1.msra.mxu0 0.0
      %1070 = vmatprep.subr.mxu0 0.0
      %1071 = vmatpush1.msra.mxu0 0.0
      %1072 = vmatprep.subr.mxu0 0.0
      %1073 = vmatpush1.msra.mxu0 0.0
      %1074 = vmatprep.subr.mxu0 0.0
      %1075 = vmatpush1.msra.mxu0 0.0
      %1076 = vmatprep.subr.mxu0 0.0
      %1077 = vmatpush1.msra.mxu0 0.0
      %1078 = vmatprep.subr.mxu0 0.0
      %1079 = vmatpush1.msra.mxu0 0.0
      %1080 = vmatprep.subr.mxu0 0.0
      %1081 = vmatpush1.msra.mxu0 0.0
      %1082 = vmatprep.subr.mxu0 0.0
      %1083 = vmatpush1.msra.mxu0 0.0
      %1084 = vmatprep.subr.mxu0 0.0
      %1085 = vmatpush1.msra.mxu0 0.0
      %1086 = vmatprep.subr.mxu0 0.0
      %1087 = vmatpush1.msra.mxu0 0.0
      %1088 = vmatprep.subr.mxu0 0.0
      %1089 = vmatpush1.msra.mxu0 0.0
      %1090 = vmatprep.subr.mxu0 0.0
      %1091 = vmatpush1.msra.mxu0 0.0
      %1092 = vmatprep.subr.mxu0 0.0
      %1093 = vmatpush1.msra.mxu0 0.0
      %1094 = vmatprep.subr.mxu0 0.0
      %1095 = vmatpush1.msra.mxu0 0.0
      %1096 = vmatprep.subr.mxu0 0.0
      %1097 = vmatpush1.msra.mxu0 0.0
      %1098 = vmatprep.subr.mxu0 0.0
      %1099 = vmatpush1.msra.mxu0 0.0
      %1100 = vmatprep.subr.mxu0 0.0
      %1101 = vmatpush1.msra.mxu0 0.0
      %1102 = vmatprep.subr.mxu0 0.0
      %1103 = vmatpush1.msra.mxu0 0.0
      %1104 = vmatprep.subr.mxu0 0.0
      %1105 = vmatpush1.msra.mxu0 0.0
      %1106 = vmatprep.mubr.f32.mxu0 0.0
      %1107 = vmatmul.mubr.f32.gmra.mrb[0].mxu0 %v1040
      %v1108 = vpop.f32.mrb[0].mxu0
      %v1109 = vadd.f32 0.0, %v1108
      %v1110 = vpop.f32.mrb[0].mxu0
      %1111 = vdwg.mxu0
      %v1112 = vadd.f32 %v540, %v542
      %v1113 = vadd.f32 %v541, %v543
      %v1114 = vld [vmem:[%s2 + $0x110] sm:$0xff]
      %v1115 = vld [vmem:[%s2 + $0x118] sm:$0xff]
      %v1116 = vld [vmem:[%s2 + $0x120] sm:$0xff]
      %v1117 = vld [vmem:[%s2 + $0x128] sm:$0xff]
      %v1119 = vsel %vm343, %v1112, 0
      %v1122 = vsel %vm343, %v1113, 0
      %1124 = vmatprep.subr.mxu0 0.0
      %1125 = vmatpush1.msra.mxu0 %v1114
      %1126 = vmatprep.subr.mxu0 0.0
      %1127 = vmatpush1.msra.mxu0 %v1115
      %1128 = vmatprep.subr.mxu0 0.0
      %1129 = vmatpush1.msra.mxu0 %v1116
      %1130 = vmatprep.subr.mxu0 0.0
      %1131 = vmatpush1.msra.mxu0 %v1117
      %1132 = vmatprep.subr.mxu0 0.0
      %1133 = vmatpush1.msra.mxu0 0.0
      %1134 = vmatprep.subr.mxu0 0.0
      %1135 = vmatpush1.msra.mxu0 0.0
      %1136 = vmatprep.subr.mxu0 0.0
      %1137 = vmatpush1.msra.mxu0 0.0
      %1138 = vmatprep.subr.mxu0 0.0
      %1139 = vmatpush1.msra.mxu0 0.0
      %1140 = vmatprep.subr.mxu0 0.0
      %1141 = vmatpush1.msra.mxu0 0.0
      %1142 = vmatprep.subr.mxu0 0.0
      %1143 = vmatpush1.msra.mxu0 0.0
      %1144 = vmatprep.subr.mxu0 0.0
      %1145 = vmatpush1.msra.mxu0 0.0
      %1146 = vmatprep.subr.mxu0 0.0
      %1147 = vmatpush1.msra.mxu0 0.0
      %1148 = vmatprep.subr.mxu0 0.0
      %1149 = vmatpush1.msra.mxu0 0.0
      %1150 = vmatprep.subr.mxu0 0.0
      %1151 = vmatpush1.msra.mxu0 0.0
      %1152 = vmatprep.subr.mxu0 0.0
      %1153 = vmatpush1.msra.mxu0 0.0
      %1154 = vmatprep.subr.mxu0 0.0
      %1155 = vmatpush1.msra.mxu0 0.0
      %1156 = vmatprep.subr.mxu0 0.0
      %1157 = vmatpush1.msra.mxu0 0.0
      %1158 = vmatprep.subr.mxu0 0.0
      %1159 = vmatpush1.msra.mxu0 0.0
      %1160 = vmatprep.subr.mxu0 0.0
      %1161 = vmatpush1.msra.mxu0 0.0
      %1162 = vmatprep.subr.mxu0 0.0
      %1163 = vmatpush1.msra.mxu0 0.0
      %1164 = vmatprep.subr.mxu0 0.0
      %1165 = vmatpush1.msra.mxu0 0.0
      %1166 = vmatprep.subr.mxu0 0.0
      %1167 = vmatpush1.msra.mxu0 0.0
      %1168 = vmatprep.subr.mxu0 0.0
      %1169 = vmatpush1.msra.mxu0 0.0
      %1170 = vmatprep.subr.mxu0 0.0
      %1171 = vmatpush1.msra.mxu0 0.0
      %1172 = vmatprep.subr.mxu0 0.0
      %1173 = vmatpush1.msra.mxu0 0.0
      %1174 = vmatprep.subr.mxu0 0.0
      %1175 = vmatpush1.msra.mxu0 0.0
      %1176 = vmatprep.subr.mxu0 0.0
      %1177 = vmatpush1.msra.mxu0 0.0
      %1178 = vmatprep.subr.mxu0 0.0
      %1179 = vmatpush1.msra.mxu0 0.0
      %1180 = vmatprep.subr.mxu0 0.0
      %1181 = vmatpush1.msra.mxu0 0.0
      %1182 = vmatprep.subr.mxu0 0.0
      %1183 = vmatpush1.msra.mxu0 0.0
      %1184 = vmatprep.subr.mxu0 0.0
      %1185 = vmatpush1.msra.mxu0 0.0
      %1186 = vmatprep.subr.mxu0 0.0
      %1187 = vmatpush1.msra.mxu0 0.0
      %1188 = vmatprep.mubr.f32.mxu0 0.0
      %1189 = vmatmul.mubr.f32.gmra.mrb[0].mxu0 %v1119
      %v1190 = vpop.f32.mrb[0].mxu0
      %v1191 = vadd.f32 0.0, %v1190
      %v1192 = vpop.f32.mrb[0].mxu0
      %1193 = vmatprep.mubr.f32.mxu0 0.0
      %1194 = vmatmul.mubr.f32.gmra.mrb[0].mxu0 %v1122
      %v1195 = vpop.f32.mrb[0].mxu0
      %v1196 = vadd.f32 0.0, %v1195
      %v1197 = vpop.f32.mrb[0].mxu0
      %1198 = vdwg.mxu0
      %v1199 = vld [vmem:[%s2 + $0x130] sm:$0xff]
      %v1200 = vld [vmem:[%s2 + $0x138] sm:$0xff]
      %v1201 = vld [vmem:[%s2 + $0x140] sm:$0xff]
      %v1202 = vld [vmem:[%s2 + $0x148] sm:$0xff]
      %v1204 = vsel %vm343, %v540, 0
      %v1207 = vsel %vm343, %v541, 0
      %1209 = vmatprep.subr.mxu0 0.0
      %1210 = vmatpush1.msra.mxu0 %v1199
      %1211 = vmatprep.subr.mxu0 0.0
      %1212 = vmatpush1.msra.mxu0 %v1200
      %1213 = vmatprep.subr.mxu0 0.0
      %1214 = vmatpush1.msra.mxu0 %v1201
      %1215 = vmatprep.subr.mxu0 0.0
      %1216 = vmatpush1.msra.mxu0 %v1202
      %1217 = vmatprep.subr.mxu0 0.0
      %1218 = vmatpush1.msra.mxu0 0.0
      %1219 = vmatprep.subr.mxu0 0.0
      %1220 = vmatpush1.msra.mxu0 0.0
      %1221 = vmatprep.subr.mxu0 0.0
      %1222 = vmatpush1.msra.mxu0 0.0
      %1223 = vmatprep.subr.mxu0 0.0
      %1224 = vmatpush1.msra.mxu0 0.0
      %1225 = vmatprep.subr.mxu0 0.0
      %1226 = vmatpush1.msra.mxu0 0.0
      %1227 = vmatprep.subr.mxu0 0.0
      %1228 = vmatpush1.msra.mxu0 0.0
      %1229 = vmatprep.subr.mxu0 0.0
      %1230 = vmatpush1.msra.mxu0 0.0
      %1231 = vmatprep.subr.mxu0 0.0
      %1232 = vmatpush1.msra.mxu0 0.0
      %1233 = vmatprep.subr.mxu0 0.0
      %1234 = vmatpush1.msra.mxu0 0.0
      %1235 = vmatprep.subr.mxu0 0.0
      %1236 = vmatpush1.msra.mxu0 0.0
      %1237 = vmatprep.subr.mxu0 0.0
      %1238 = vmatpush1.msra.mxu0 0.0
      %1239 = vmatprep.subr.mxu0 0.0
      %1240 = vmatpush1.msra.mxu0 0.0
      %1241 = vmatprep.subr.mxu0 0.0
      %1242 = vmatpush1.msra.mxu0 0.0
      %1243 = vmatprep.subr.mxu0 0.0
      %1244 = vmatpush1.msra.mxu0 0.0
      %1245 = vmatprep.subr.mxu0 0.0
      %1246 = vmatpush1.msra.mxu0 0.0
      %1247 = vmatprep.subr.mxu0 0.0
      %1248 = vmatpush1.msra.mxu0 0.0
      %1249 = vmatprep.subr.mxu0 0.0
      %1250 = vmatpush1.msra.mxu0 0.0
      %1251 = vmatprep.subr.mxu0 0.0
      %1252 = vmatpush1.msra.mxu0 0.0
      %1253 = vmatprep.subr.mxu0 0.0
      %1254 = vmatpush1.msra.mxu0 0.0
      %1255 = vmatprep.subr.mxu0 0.0
      %1256 = vmatpush1.msra.mxu0 0.0
      %1257 = vmatprep.subr.mxu0 0.0
      %1258 = vmatpush1.msra.mxu0 0.0
      %1259 = vmatprep.subr.mxu0 0.0
      %1260 = vmatpush1.msra.mxu0 0.0
      %1261 = vmatprep.subr.mxu0 0.0
      %1262 = vmatpush1.msra.mxu0 0.0
      %1263 = vmatprep.subr.mxu0 0.0
      %1264 = vmatpush1.msra.mxu0 0.0
      %1265 = vmatprep.subr.mxu0 0.0
      %1266 = vmatpush1.msra.mxu0 0.0
      %1267 = vmatprep.subr.mxu0 0.0
      %1268 = vmatpush1.msra.mxu0 0.0
      %1269 = vmatprep.subr.mxu0 0.0
      %1270 = vmatpush1.msra.mxu0 0.0
      %1271 = vmatprep.subr.mxu0 0.0
      %1272 = vmatpush1.msra.mxu0 0.0
      %1273 = vmatprep.mubr.f32.mxu0 0.0
      %1274 = vmatmul.mubr.f32.gmra.mrb[0].mxu0 %v1204
      %v1275 = vpop.f32.mrb[0].mxu0
      %v1276 = vadd.f32 0.0, %v1275
      %v1277 = vpop.f32.mrb[0].mxu0
      %1278 = vmatprep.mubr.f32.mxu0 0.0
      %1279 = vmatmul.mubr.f32.gmra.mrb[0].mxu0 %v1207
      %v1280 = vpop.f32.mrb[0].mxu0
      %v1281 = vadd.f32 0.0, %v1280
      %v1282 = vpop.f32.mrb[0].mxu0
      %1283 = vdwg.mxu0
      %v1285 = vsel %vm343, %v1109, 0
      %v1288 = vsel %vm343, %v1191, 0
      %v1291 = vsel %vm343, %v1196, 0
      %1293 = vmatprep.subr.mxu0 0.0
      %1294 = vmatpush1.xpose.msra.mxu0 %v1288
      %1295 = vmatprep.subr.mxu0 0.0
      %1296 = vmatpush1.xpose.msra.mxu0 %v1291
      %1297 = vmatprep.subr.mxu0 0.0
      %1298 = vmatpush1.xpose.msra.mxu0 0.0
      %1299 = vmatprep.subr.mxu0 0.0
      %1300 = vmatpush1.xpose.msra.mxu0 0.0
      %1301 = vmatprep.subr.mxu0 0.0
      %1302 = vmatpush1.xpose.msra.mxu0 0.0
      %1303 = vmatprep.subr.mxu0 0.0
      %1304 = vmatpush1.xpose.msra.mxu0 0.0
      %1305 = vmatprep.subr.mxu0 0.0
      %1306 = vmatpush1.xpose.msra.mxu0 0.0
      %1307 = vmatprep.subr.mxu0 0.0
      %1308 = vmatpush1.xpose.msra.mxu0 0.0
      %1309 = vmatprep.subr.mxu0 0.0
      %1310 = vmatpush1.xpose.msra.mxu0 0.0
      %1311 = vmatprep.subr.mxu0 0.0
      %1312 = vmatpush1.xpose.msra.mxu0 0.0
      %1313 = vmatprep.subr.mxu0 0.0
      %1314 = vmatpush1.xpose.msra.mxu0 0.0
      %1315 = vmatprep.subr.mxu0 0.0
      %1316 = vmatpush1.xpose.msra.mxu0 0.0
      %1317 = vmatprep.subr.mxu0 0.0
      %1318 = vmatpush1.xpose.msra.mxu0 0.0
      %1319 = vmatprep.subr.mxu0 0.0
      %1320 = vmatpush1.xpose.msra.mxu0 0.0
      %1321 = vmatprep.subr.mxu0 0.0
      %1322 = vmatpush1.xpose.msra.mxu0 0.0
      %1323 = vmatprep.subr.mxu0 0.0
      %1324 = vmatpush1.xpose.msra.mxu0 0.0
      %1325 = vmatprep.subr.mxu0 0.0
      %1326 = vmatpush1.xpose.msra.mxu0 0.0
      %1327 = vmatprep.subr.mxu0 0.0
      %1328 = vmatpush1.xpose.msra.mxu0 0.0
      %1329 = vmatprep.subr.mxu0 0.0
      %1330 = vmatpush1.xpose.msra.mxu0 0.0
      %1331 = vmatprep.subr.mxu0 0.0
      %1332 = vmatpush1.xpose.msra.mxu0 0.0
      %1333 = vmatprep.subr.mxu0 0.0
      %1334 = vmatpush1.xpose.msra.mxu0 0.0
      %1335 = vmatprep.subr.mxu0 0.0
      %1336 = vmatpush1.xpose.msra.mxu0 0.0
      %1337 = vmatprep.subr.mxu0 0.0
      %1338 = vmatpush1.xpose.msra.mxu0 0.0
      %1339 = vmatprep.subr.mxu0 0.0
      %1340 = vmatpush1.xpose.msra.mxu0 0.0
      %1341 = vmatprep.subr.mxu0 0.0
      %1342 = vmatpush1.xpose.msra.mxu0 0.0
      %1343 = vmatprep.subr.mxu0 0.0
      %1344 = vmatpush1.xpose.msra.mxu0 0.0
      %1345 = vmatprep.subr.mxu0 0.0
      %1346 = vmatpush1.xpose.msra.mxu0 0.0
      %1347 = vmatprep.subr.mxu0 0.0
      %1348 = vmatpush1.xpose.msra.mxu0 0.0
      %1349 = vmatprep.subr.mxu0 0.0
      %1350 = vmatpush1.xpose.msra.mxu0 0.0
      %1351 = vmatprep.subr.mxu0 0.0
      %1352 = vmatpush1.xpose.msra.mxu0 0.0
      %1353 = vmatprep.subr.mxu0 0.0
      %1354 = vmatpush1.xpose.msra.mxu0 0.0
      %1355 = vmatprep.subr.mxu0 0.0
      %1356 = vmatpush1.xpose.msra.mxu0 0.0
      %1357 = vmatprep.mubr.f32.mxu0 0.0
      %1358 = vmatmul.mubr.f32.gmra.mrb[0].mxu0 %v1285
      %v1359 = vpop.f32.mrb[0].mxu0
      %v1360 = vadd.f32 0.0, %v1359
      %v1361 = vpop.f32.mrb[0].mxu0
      %1362 = vdwg.mxu0
      %vm1363 = vcmask 130048
      %v1364 = vsel %vm1363, %v1360, -inf
      %1365 = vmax.xlane.f32.xlu0 %v1364
      %v1366 = vpop.xlane.xlu0 %1365
      %v1367 = vsub.f32 %v1360, %v1366
      %v1368 = vmul.f32 %v1367, 1.442695
      %v1369 = vpow.pop %v1368
      %v1370 = vsel %vm1363, %v1369, 0.0
      %1371 = vadd.xlane.f32.xlu0 %v1370
      %v1372 = vpop.xlane.xlu0 %1371
      %v1374 = vsel %vm1363, %v1369, 0
      %1376 = vmatprep.subr.mxu0 0.0
      %1377 = vmatpush1.msra.mxu0 %v1276
      %1378 = vmatprep.subr.mxu0 0.0
      %1379 = vmatpush1.msra.mxu0 %v1281
      %1380 = vmatprep.subr.mxu0 0.0
      %1381 = vmatpush1.msra.mxu0 0.0
      %1382 = vmatprep.subr.mxu0 0.0
      %1383 = vmatpush1.msra.mxu0 0.0
      %1384 = vmatprep.subr.mxu0 0.0
      %1385 = vmatpush1.msra.mxu0 0.0
      %1386 = vmatprep.subr.mxu0 0.0
      %1387 = vmatpush1.msra.mxu0 0.0
      %1388 = vmatprep.subr.mxu0 0.0
      %1389 = vmatpush1.msra.mxu0 0.0
      %1390 = vmatprep.subr.mxu0 0.0
      %1391 = vmatpush1.msra.mxu0 0.0
      %1392 = vmatprep.subr.mxu0 0.0
      %1393 = vmatpush1.msra.mxu0 0.0
      %1394 = vmatprep.subr.mxu0 0.0
      %1395 = vmatpush1.msra.mxu0 0.0
      %1396 = vmatprep.subr.mxu0 0.0
      %1397 = vmatpush1.msra.mxu0 0.0
      %1398 = vmatprep.subr.mxu0 0.0
      %1399 = vmatpush1.msra.mxu0 0.0
      %1400 = vmatprep.subr.mxu0 0.0
      %1401 = vmatpush1.msra.mxu0 0.0
      %1402 = vmatprep.subr.mxu0 0.0
      %1403 = vmatpush1.msra.mxu0 0.0
      %1404 = vmatprep.subr.mxu0 0.0
      %1405 = vmatpush1.msra.mxu0 0.0
      %1406 = vmatprep.subr.mxu0 0.0
      %1407 = vmatpush1.msra.mxu0 0.0
      %1408 = vmatprep.subr.mxu0 0.0
      %1409 = vmatpush1.msra.mxu0 0.0
      %1410 = vmatprep.subr.mxu0 0.0
      %1411 = vmatpush1.msra.mxu0 0.0
      %1412 = vmatprep.subr.mxu0 0.0
      %1413 = vmatpush1.msra.mxu0 0.0
      %1414 = vmatprep.subr.mxu0 0.0
      %1415 = vmatpush1.msra.mxu0 0.0
      %1416 = vmatprep.subr.mxu0 0.0
      %1417 = vmatpush1.msra.mxu0 0.0
      %1418 = vmatprep.subr.mxu0 0.0
      %1419 = vmatpush1.msra.mxu0 0.0
      %1420 = vmatprep.subr.mxu0 0.0
      %1421 = vmatpush1.msra.mxu0 0.0
      %1422 = vmatprep.subr.mxu0 0.0
      %1423 = vmatpush1.msra.mxu0 0.0
      %1424 = vmatprep.subr.mxu0 0.0
      %1425 = vmatpush1.msra.mxu0 0.0
      %1426 = vmatprep.subr.mxu0 0.0
      %1427 = vmatpush1.msra.mxu0 0.0
      %1428 = vmatprep.subr.mxu0 0.0
      %1429 = vmatpush1.msra.mxu0 0.0
      %1430 = vmatprep.subr.mxu0 0.0
      %1431 = vmatpush1.msra.mxu0 0.0
      %1432 = vmatprep.subr.mxu0 0.0
      %1433 = vmatpush1.msra.mxu0 0.0
      %1434 = vmatprep.subr.mxu0 0.0
      %1435 = vmatpush1.msra.mxu0 0.0
      %1436 = vmatprep.subr.mxu0 0.0
      %1437 = vmatpush1.msra.mxu0 0.0
      %1438 = vmatprep.subr.mxu0 0.0
      %1439 = vmatpush1.msra.mxu0 0.0
      %1440 = vmatprep.mubr.f32.mxu0 0.0
      %1441 = vmatmul.mubr.f32.gmra.mrb[0].mxu0 %v1374
      %v1442 = vpop.f32.mrb[0].mxu0
      %v1443 = vadd.f32 0.0, %v1442
      %v1444 = vpop.f32.mrb[0].mxu0
      %1445 = vdwg.mxu0
      %v1446 = vrcp.pop %v1372
      %v1447 = vmul.f32 %v1443, %v1446
      %v1448 = vld [vmem:[%s2 + $0x150] sm:$0xff]
      %v1449 = vld [vmem:[%s2 + $0x158] sm:$0xff]
      %v1450 = vld [vmem:[%s2 + $0x160] sm:$0xff]
      %v1451 = vld [vmem:[%s2 + $0x168] sm:$0xff]
      %v1453 = vsel %vm343, %v1447, 0
      %1455 = vmatprep.subr.mxu0 0.0
      %1456 = vmatpush1.msra.mxu0 %v1448
      %1457 = vmatprep.subr.mxu0 0.0
      %1458 = vmatpush1.msra.mxu0 %v1449
      %1459 = vmatprep.subr.mxu0 0.0
      %1460 = vmatpush1.msra.mxu0 %v1450
      %1461 = vmatprep.subr.mxu0 0.0
      %1462 = vmatpush1.msra.mxu0 %v1451
      %1463 = vmatprep.subr.mxu0 0.0
      %1464 = vmatpush1.msra.mxu0 0.0
      %1465 = vmatprep.subr.mxu0 0.0
      %1466 = vmatpush1.msra.mxu0 0.0
      %1467 = vmatprep.subr.mxu0 0.0
      %1468 = vmatpush1.msra.mxu0 0.0
      %1469 = vmatprep.subr.mxu0 0.0
      %1470 = vmatpush1.msra.mxu0 0.0
      %1471 = vmatprep.subr.mxu0 0.0
      %1472 = vmatpush1.msra.mxu0 0.0
      %1473 = vmatprep.subr.mxu0 0.0
      %1474 = vmatpush1.msra.mxu0 0.0
      %1475 = vmatprep.subr.mxu0 0.0
      %1476 = vmatpush1.msra.mxu0 0.0
      %1477 = vmatprep.subr.mxu0 0.0
      %1478 = vmatpush1.msra.mxu0 0.0
      %1479 = vmatprep.subr.mxu0 0.0
      %1480 = vmatpush1.msra.mxu0 0.0
      %1481 = vmatprep.subr.mxu0 0.0
      %1482 = vmatpush1.msra.mxu0 0.0
      %1483 = vmatprep.subr.mxu0 0.0
      %1484 = vmatpush1.msra.mxu0 0.0
      %1485 = vmatprep.subr.mxu0 0.0
      %1486 = vmatpush1.msra.mxu0 0.0
      %1487 = vmatprep.subr.mxu0 0.0
      %1488 = vmatpush1.msra.mxu0 0.0
      %1489 = vmatprep.subr.mxu0 0.0
      %1490 = vmatpush1.msra.mxu0 0.0
      %1491 = vmatprep.subr.mxu0 0.0
      %1492 = vmatpush1.msra.mxu0 0.0
      %1493 = vmatprep.subr.mxu0 0.0
      %1494 = vmatpush1.msra.mxu0 0.0
      %1495 = vmatprep.subr.mxu0 0.0
      %1496 = vmatpush1.msra.mxu0 0.0
      %1497 = vmatprep.subr.mxu0 0.0
      %1498 = vmatpush1.msra.mxu0 0.0
      %1499 = vmatprep.subr.mxu0 0.0
      %1500 = vmatpush1.msra.mxu0 0.0
      %1501 = vmatprep.subr.mxu0 0.0
      %1502 = vmatpush1.msra.mxu0 0.0
      %1503 = vmatprep.subr.mxu0 0.0
      %1504 = vmatpush1.msra.mxu0 0.0
      %1505 = vmatprep.subr.mxu0 0.0
      %1506 = vmatpush1.msra.mxu0 0.0
      %1507 = vmatprep.subr.mxu0 0.0
      %1508 = vmatpush1.msra.mxu0 0.0
      %1509 = vmatprep.subr.mxu0 0.0
      %1510 = vmatpush1.msra.mxu0 0.0
      %1511 = vmatprep.subr.mxu0 0.0
      %1512 = vmatpush1.msra.mxu0 0.0
      %1513 = vmatprep.subr.mxu0 0.0
      %1514 = vmatpush1.msra.mxu0 0.0
      %1515 = vmatprep.subr.mxu0 0.0
      %1516 = vmatpush1.msra.mxu0 0.0
      %1517 = vmatprep.subr.mxu0 0.0
      %1518 = vmatpush1.msra.mxu0 0.0
      %1519 = vmatprep.mubr.f32.mxu0 0.0
      %1520 = vmatmul.mubr.f32.gmra.mrb[0].mxu0 %v1453
      %v1521 = vpop.f32.mrb[0].mxu0
      %v1522 = vadd.f32 0.0, %v1521
      %v1523 = vpop.f32.mrb[0].mxu0
      %1524 = vdwg.mxu0
      %v1525 = vadd.f32 %v1034, %v1522
      %v1526 = vld [vmem:[%s2 + $0x261] sm:$0x1]
      %v1527 = vld [vmem:[%s2 + $0x265] sm:$0x1]
      %v1528 = vsel %vm343, %v1525, 0.0
      %1529 = vadd.xlane.f32.xlu0 %v1528
      %v1530 = vpop.xlane.xlu0 %1529
      %v1531 = vmul.f32 %v1530, %v1014
      %v1532 = vsub.f32 %v1525, %v1531
      %v1533 = vmul.f32 %v1532, %v1532
      %v1534 = vsel %vm343, %v1533, 0.0
      %1535 = vadd.xlane.f32.xlu0 %v1534
      %v1536 = vpop.xlane.xlu0 %1535
      %v1537 = vmul.f32 %v1536, %v1014
      %v1538 = vadd.f32 %v1537, 1e-06
      %v1539 = vrsqrt.pop %v1538
      %v1540 = vmul.f32 %v1532, %v1539
      %v1541 = vlaneseq
      %v1542 = vshrl.u32 %v1541, 7
      %v1543 = vsub.s32 0, %v1542
      %v1544 = vrot.slane %v1526, %v1543
      %v1545 = vmul.f32 %v1540, %v1544
      %v1546 = vlaneseq
      %v1547 = vshrl.u32 %v1546, 7
      %v1548 = vsub.s32 0, %v1547
      %v1549 = vrot.slane %v1527, %v1548
      %v1550 = vadd.f32 %v1545, %v1549
      %v1551 = vld [vmem:[%s3 + $0x20] sm:$0xff]
      %v1552 = vld [vmem:[%s3 + $0x28] sm:$0xff]
      %v1553 = vld [vmem:[%s3 + $0x30] sm:$0xff]
      %v1554 = vld [vmem:[%s3 + $0x38] sm:$0xff]
      %v1556 = vsel %vm343, %v1550, 0
      %1558 = vmatprep.subr.mxu0 0.0
      %1559 = vmatpush1.msra.mxu0 %v1551
      %1560 = vmatprep.subr.mxu0 0.0
      %1561 = vmatpush1.msra.mxu0 %v1552
      %1562 = vmatprep.subr.mxu0 0.0
      %1563 = vmatpush1.msra.mxu0 %v1553
      %1564 = vmatprep.subr.mxu0 0.0
      %1565 = vmatpush1.msra.mxu0 %v1554
      %1566 = vmatprep.subr.mxu0 0.0
      %1567 = vmatpush1.msra.mxu0 0.0
      %1568 = vmatprep.subr.mxu0 0.0
      %1569 = vmatpush1.msra.mxu0 0.0
      %1570 = vmatprep.subr.mxu0 0.0
      %1571 = vmatpush1.msra.mxu0 0.0
      %1572 = vmatprep.subr.mxu0 0.0
      %1573 = vmatpush1.msra.mxu0 0.0
      %1574 = vmatprep.subr.mxu0 0.0
      %1575 = vmatpush1.msra.mxu0 0.0
      %1576 = vmatprep.subr.mxu0 0.0
      %1577 = vmatpush1.msra.mxu0 0.0
      %1578 = vmatprep.subr.mxu0 0.0
      %1579 = vmatpush1.msra.mxu0 0.0
      %1580 = vmatprep.subr.mxu0 0.0
      %1581 = vmatpush1.msra.mxu0 0.0
      %1582 = vmatprep.subr.mxu0 0.0
      %1583 = vmatpush1.msra.mxu0 0.0
      %1584 = vmatprep.subr.mxu0 0.0
      %1585 = vmatpush1.msra.mxu0 0.0
      %1586 = vmatprep.subr.mxu0 0.0
      %1587 = vmatpush1.msra.mxu0 0.0
      %1588 = vmatprep.subr.mxu0 0.0
      %1589 = vmatpush1.msra.mxu0 0.0
      %1590 = vmatprep.subr.mxu0 0.0
      %1591 = vmatpush1.msra.mxu0 0.0
      %1592 = vmatprep.subr.mxu0 0.0
      %1593 = vmatpush1.msra.mxu0 0.0
      %1594 = vmatprep.subr.mxu0 0.0
      %1595 = vmatpush1.msra.mxu0 0.0
      %1596 = vmatprep.subr.mxu0 0.0
      %1597 = vmatpush1.msra.mxu0 0.0
      %1598 = vmatprep.subr.mxu0 0.0
      %1599 = vmatpush1.msra.mxu0 0.0
      %1600 = vmatprep.subr.mxu0 0.0
      %1601 = vmatpush1.msra.mxu0 0.0
      %1602 = vmatprep.subr.mxu0 0.0
      %1603 = vmatpush1.msra.mxu0 0.0
      %1604 = vmatprep.subr.mxu0 0.0
      %1605 = vmatpush1.msra.mxu0 0.0
      %1606 = vmatprep.subr.mxu0 0.0
      %1607 = vmatpush1.msra.mxu0 0.0
      %1608 = vmatprep.subr.mxu0 0.0
      %1609 = vmatpush1.msra.mxu0 0.0
      %1610 = vmatprep.subr.mxu0 0.0
      %1611 = vmatpush1.msra.mxu0 0.0
      %1612 = vmatprep.subr.mxu0 0.0
      %1613 = vmatpush1.msra.mxu0 0.0
      %1614 = vmatprep.subr.mxu0 0.0
      %1615 = vmatpush1.msra.mxu0 0.0
      %1616 = vmatprep.subr.mxu0 0.0
      %1617 = vmatpush1.msra.mxu0 0.0
      %1618 = vmatprep.subr.mxu0 0.0
      %1619 = vmatpush1.msra.mxu0 0.0
      %1620 = vmatprep.subr.mxu0 0.0
      %1621 = vmatpush1.msra.mxu0 0.0
      %1622 = vmatprep.mubr.f32.mxu0 0.0
      %1623 = vmatmul.mubr.f32.gmra.mrb[0].mxu0 %v1556
      %v1624 = vpop.f32.mrb[0].mxu0
      %v1625 = vadd.f32 0.0, %v1624
      %v1626 = vpop.f32.mrb[0].mxu0
      %1627 = vdwg.mxu0
      %v1628 = vmul.f32 %v1625, %v1625
      %v1629 = vmul.f32 %v1625, %v1628
      %v1630 = vmul.f32 %v1629, 0.044715
      %v1631 = vadd.f32 %v1625, %v1630
      %v1632 = vmul.f32 %v1631, 0.7978846
      %v1633 = vtanh.pop %v1632
      %v1634 = vadd.f32 %v1633, 1.0
      %v1635 = vmul.f32 %v1634, 0.5
      %v1636 = vmul.f32 %v1625, %v1635
      %v1637 = vld [vmem:[%s2 + $0x1f0] sm:$0xff]
      %v1638 = vld [vmem:[%s2 + $0x1f8] sm:$0xff]
      %v1639 = vld [vmem:[%s2 + $0x200] sm:$0xff]
      %v1640 = vld [vmem:[%s2 + $0x208] sm:$0xff]
      %v1641 = vld [vmem:[%s2 + $0x210] sm:$0xff]
      %v1642 = vld [vmem:[%s2 + $0x218] sm:$0xff]
      %v1643 = vld [vmem:[%s2 + $0x220] sm:$0xff]
      %v1644 = vld [vmem:[%s2 + $0x228] sm:$0xff]
      %v1646 = vsel %vm451, %v1636, 0
      %1648 = vmatprep.subr.mxu0 0.0
      %1649 = vmatpush1.msra.mxu0 %v1637
      %1650 = vmatprep.subr.mxu0 0.0
      %1651 = vmatpush1.msra.mxu0 %v1638
      %1652 = vmatprep.subr.mxu0 0.0
      %1653 = vmatpush1.msra.mxu0 %v1639
      %1654 = vmatprep.subr.mxu0 0.0
      %1655 = vmatpush1.msra.mxu0 %v1640
      %1656 = vmatprep.subr.mxu0 0.0
      %1657 = vmatpush1.msra.mxu0 %v1641
      %1658 = vmatprep.subr.mxu0 0.0
      %1659 = vmatpush1.msra.mxu0 %v1642
      %1660 = vmatprep.subr.mxu0 0.0
      %1661 = vmatpush1.msra.mxu0 %v1643
      %1662 = vmatprep.subr.mxu0 0.0
      %1663 = vmatpush1.msra.mxu0 %v1644
      %1664 = vmatprep.subr.mxu0 0.0
      %1665 = vmatpush1.msra.mxu0 0.0
      %1666 = vmatprep.subr.mxu0 0.0
      %1667 = vmatpush1.msra.mxu0 0.0
      %1668 = vmatprep.subr.mxu0 0.0
      %1669 = vmatpush1.msra.mxu0 0.0
      %1670 = vmatprep.subr.mxu0 0.0
      %1671 = vmatpush1.msra.mxu0 0.0
      %1672 = vmatprep.subr.mxu0 0.0
      %1673 = vmatpush1.msra.mxu0 0.0
      %1674 = vmatprep.subr.mxu0 0.0
      %1675 = vmatpush1.msra.mxu0 0.0
      %1676 = vmatprep.subr.mxu0 0.0
      %1677 = vmatpush1.msra.mxu0 0.0
      %1678 = vmatprep.subr.mxu0 0.0
      %1679 = vmatpush1.msra.mxu0 0.0
      %1680 = vmatprep.subr.mxu0 0.0
      %1681 = vmatpush1.msra.mxu0 0.0
      %1682 = vmatprep.subr.mxu0 0.0
      %1683 = vmatpush1.msra.mxu0 0.0
      %1684 = vmatprep.subr.mxu0 0.0
      %1685 = vmatpush1.msra.mxu0 0.0
      %1686 = vmatprep.subr.mxu0 0.0
      %1687 = vmatpush1.msra.mxu0 0.0
      %1688 = vmatprep.subr.mxu0 0.0
      %1689 = vmatpush1.msra.mxu0 0.0
      %1690 = vmatprep.subr.mxu0 0.0
      %1691 = vmatpush1.msra.mxu0 0.0
      %1692 = vmatprep.subr.mxu0 0.0
      %1693 = vmatpush1.msra.mxu0 0.0
      %1694 = vmatprep.subr.mxu0 0.0
      %1695 = vmatpush1.msra.mxu0 0.0
      %1696 = vmatprep.subr.mxu0 0.0
      %1697 = vmatpush1.msra.mxu0 0.0
      %1698 = vmatprep.subr.mxu0 0.0
      %1699 = vmatpush1.msra.mxu0 0.0
      %1700 = vmatprep.subr.mxu0 0.0
      %1701 = vmatpush1.msra.mxu0 0.0
      %1702 = vmatprep.subr.mxu0 0.0
      %1703 = vmatpush1.msra.mxu0 0.0
      %1704 = vmatprep.subr.mxu0 0.0
      %1705 = vmatpush1.msra.mxu0 0.0
      %1706 = vmatprep.subr.mxu0 0.0
      %1707 = vmatpush1.msra.mxu0 0.0
      %1708 = vmatprep.subr.mxu0 0.0
      %1709 = vmatpush1.msra.mxu0 0.0
      %1710 = vmatprep.subr.mxu0 0.0
      %1711 = vmatpush1.msra.mxu0 0.0
      %1712 = vmatprep.mubr.f32.mxu0 0.0
      %1713 = vmatmul.mubr.f32.gmra.mrb[0].mxu0 %v1646
      %v1714 = vpop.f32.mrb[0].mxu0
      %v1715 = vadd.f32 0.0, %v1714
      %v1716 = vpop.f32.mrb[0].mxu0
      %1717 = vdwg.mxu0
      %v1718 = vadd.f32 %v1550, %v1715
      %v1719 = vld [vmem:[%s2 + $0x262] sm:$0x1]
      %v1720 = vld [vmem:[%s2 + $0x266] sm:$0x1]
      %v1721 = vsel %vm343, %v1718, 0.0
      %1722 = vadd.xlane.f32.xlu0 %v1721
      %v1723 = vpop.xlane.xlu0 %1722
      %v1724 = vmul.f32 %v1723, %v1014
      %v1725 = vsub.f32 %v1718, %v1724
      %v1726 = vmul.f32 %v1725, %v1725
      %v1727 = vsel %vm343, %v1726, 0.0
      %1728 = vadd.xlane.f32.xlu0 %v1727
      %v1729 = vpop.xlane.xlu0 %1728
      %v1730 = vmul.f32 %v1729, %v1014
      %v1731 = vadd.f32 %v1730, 1e-06
      %v1732 = vrsqrt.pop %v1731
      %v1733 = vmul.f32 %v1725, %v1732
      %v1734 = vlaneseq
      %v1735 = vshrl.u32 %v1734, 7
      %v1736 = vsub.s32 0, %v1735
      %v1737 = vrot.slane %v1719, %v1736
      %v1738 = vmul.f32 %v1733, %v1737
      %v1739 = vlaneseq
      %v1740 = vshrl.u32 %v1739, 7
      %v1741 = vsub.s32 0, %v1740
      %v1742 = vrot.slane %v1720, %v1741
      %v1743 = vadd.f32 %v1738, %v1742
      %v1744 = vld [vmem:[%s2 + $0x170] sm:$0xff]
      %v1745 = vld [vmem:[%s2 + $0x178] sm:$0xff]
      %v1746 = vld [vmem:[%s2 + $0x180] sm:$0xff]
      %v1747 = vld [vmem:[%s2 + $0x188] sm:$0xff]
      %1748 = vmatprep.subr.mxu0 0.0
      %1749 = vmatpush1.msra.mxu0 %v1744
      %1750 = vmatprep.subr.mxu0 0.0
      %1751 = vmatpush1.msra.mxu0 %v1745
      %1752 = vmatprep.subr.mxu0 0.0
      %1753 = vmatpush1.msra.mxu0 %v1746
      %1754 = vmatprep.subr.mxu0 0.0
      %1755 = vmatpush1.msra.mxu0 %v1747
      %1756 = vmatprep.subr.mxu0 0.0
      %1757 = vmatpush1.msra.mxu0 0.0
      %1758 = vmatprep.subr.mxu0 0.0
      %1759 = vmatpush1.msra.mxu0 0.0
      %1760 = vmatprep.subr.mxu0 0.0
      %1761 = vmatpush1.msra.mxu0 0.0
      %1762 = vmatprep.subr.mxu0 0.0
      %1763 = vmatpush1.msra.mxu0 0.0
      %1764 = vmatprep.subr.mxu0 0.0
      %1765 = vmatpush1.msra.mxu0 0.0
      %1766 = vmatprep.subr.mxu0 0.0
      %1767 = vmatpush1.msra.mxu0 0.0
      %1768 = vmatprep.subr.mxu0 0.0
      %1769 = vmatpush1.msra.mxu0 0.0
      %1770 = vmatprep.subr.mxu0 0.0
      %1771 = vmatpush1.msra.mxu0 0.0
      %1772 = vmatprep.subr.mxu0 0.0
      %1773 = vmatpush1.msra.mxu0 0.0
      %1774 = vmatprep.subr.mxu0 0.0
      %1775 = vmatpush1.msra.mxu0 0.0
      %1776 = vmatprep.subr.mxu0 0.0
      %1777 = vmatpush1.msra.mxu0 0.0
      %1778 = vmatprep.subr.mxu0 0.0
      %1779 = vmatpush1.msra.mxu0 0.0
      %1780 = vmatprep.subr.mxu0 0.0
      %1781 = vmatpush1.msra.mxu0 0.0
      %1782 = vmatprep.subr.mxu0 0.0
      %1783 = vmatpush1.msra.mxu0 0.0
      %1784 = vmatprep.subr.mxu0 0.0
      %1785 = vmatpush1.msra.mxu0 0.0
      %1786 = vmatprep.subr.mxu0 0.0
      %1787 = vmatpush1.msra.mxu0 0.0
      %1788 = vmatprep.subr.mxu0 0.0
      %1789 = vmatpush1.msra.mxu0 0.0
      %1790 = vmatprep.subr.mxu0 0.0
      %1791 = vmatpush1.msra.mxu0 0.0
      %1792 = vmatprep.subr.mxu0 0.0
      %1793 = vmatpush1.msra.mxu0 0.0
      %1794 = vmatprep.subr.mxu0 0.0
      %1795 = vmatpush1.msra.mxu0 0.0
      %1796 = vmatprep.subr.mxu0 0.0
      %1797 = vmatpush1.msra.mxu0 0.0
      %1798 = vmatprep.subr.mxu0 0.0
      %1799 = vmatpush1.msra.mxu0 0.0
      %1800 = vmatprep.subr.mxu0 0.0
      %1801 = vmatpush1.msra.mxu0 0.0
      %1802 = vmatprep.subr.mxu0 0.0
      %1803 = vmatpush1.msra.mxu0 0.0
      %1804 = vmatprep.subr.mxu0 0.0
      %1805 = vmatpush1.msra.mxu0 0.0
      %1806 = vmatprep.subr.mxu0 0.0
      %1807 = vmatpush1.msra.mxu0 0.0
      %1808 = vmatprep.subr.mxu0 0.0
      %1809 = vmatpush1.msra.mxu0 0.0
      %1810 = vmatprep.subr.mxu0 0.0
      %1811 = vmatpush1.msra.mxu0 0.0
      %1812 = vmatprep.mubr.f32.mxu0 0.0
      %1813 = vmatmul.mubr.f32.gmra.mrb[0].mxu0 %v1119
      %v1814 = vpop.f32.mrb[0].mxu0
      %v1815 = vadd.f32 0.0, %v1814
      %v1816 = vpop.f32.mrb[0].mxu0
      %1817 = vmatprep.mubr.f32.mxu0 0.0
      %1818 = vmatmul.mubr.f32.gmra.mrb[0].mxu0 %v1122
      %v1819 = vpop.f32.mrb[0].mxu0
      %v1820 = vadd.f32 0.0, %v1819
      %v1821 = vpop.f32.mrb[0].mxu0
      %1822 = vdwg.mxu0
      %v1823 = vld [vmem:[%s2 + $0x190] sm:$0xff]
      %v1824 = vld [vmem:[%s2 + $0x198] sm:$0xff]
      %v1825 = vld [vmem:[%s2 + $0x1a0] sm:$0xff]
      %v1826 = vld [vmem:[%s2 + $0x1a8] sm:$0xff]
      %v1828 = vsel %vm343, %v1743, 0
      %1830 = vmatprep.subr.mxu0 0.0
      %1831 = vmatpush1.msra.mxu0 %v1823
      %1832 = vmatprep.subr.mxu0 0.0
      %1833 = vmatpush1.msra.mxu0 %v1824
      %1834 = vmatprep.subr.mxu0 0.0
      %1835 = vmatpush1.msra.mxu0 %v1825
      %1836 = vmatprep.subr.mxu0 0.0
      %1837 = vmatpush1.msra.mxu0 %v1826
      %1838 = vmatprep.subr.mxu0 0.0
      %1839 = vmatpush1.msra.mxu0 0.0
      %1840 = vmatprep.subr.mxu0 0.0
      %1841 = vmatpush1.msra.mxu0 0.0
      %1842 = vmatprep.subr.mxu0 0.0
      %1843 = vmatpush1.msra.mxu0 0.0
      %1844 = vmatprep.subr.mxu0 0.0
      %1845 = vmatpush1.msra.mxu0 0.0
      %1846 = vmatprep.subr.mxu0 0.0
      %1847 = vmatpush1.msra.mxu0 0.0
      %1848 = vmatprep.subr.mxu0 0.0
      %1849 = vmatpush1.msra.mxu0 0.0
      %1850 = vmatprep.subr.mxu0 0.0
      %1851 = vmatpush1.msra.mxu0 0.0
      %1852 = vmatprep.subr.mxu0 0.0
      %1853 = vmatpush1.msra.mxu0 0.0
      %1854 = vmatprep.subr.mxu0 0.0
      %1855 = vmatpush1.msra.mxu0 0.0
      %1856 = vmatprep.subr.mxu0 0.0
      %1857 = vmatpush1.msra.mxu0 0.0
      %1858 = vmatprep.subr.mxu0 0.0
      %1859 = vmatpush1.msra.mxu0 0.0
      %1860 = vmatprep.subr.mxu0 0.0
      %1861 = vmatpush1.msra.mxu0 0.0
      %1862 = vmatprep.subr.mxu0 0.0
      %1863 = vmatpush1.msra.mxu0 0.0
      %1864 = vmatprep.subr.mxu0 0.0
      %1865 = vmatpush1.msra.mxu0 0.0
      %1866 = vmatprep.subr.mxu0 0.0
      %1867 = vmatpush1.msra.mxu0 0.0
      %1868 = vmatprep.subr.mxu0 0.0
      %1869 = vmatpush1.msra.mxu0 0.0
      %1870 = vmatprep.subr.mxu0 0.0
      %1871 = vmatpush1.msra.mxu0 0.0
      %1872 = vmatprep.subr.mxu0 0.0
      %1873 = vmatpush1.msra.mxu0 0.0
      %1874 = vmatprep.subr.mxu0 0.0
      %1875 = vmatpush1.msra.mxu0 0.0
      %1876 = vmatprep.subr.mxu0 0.0
      %1877 = vmatpush1.msra.mxu0 0.0
      %1878 = vmatprep.subr.mxu0 0.0
      %1879 = vmatpush1.msra.mxu0 0.0
      %1880 = vmatprep.subr.mxu0 0.0
      %1881 = vmatpush1.msra.mxu0 0.0
      %1882 = vmatprep.subr.mxu0 0.0
      %1883 = vmatpush1.msra.mxu0 0.0
      %1884 = vmatprep.subr.mxu0 0.0
      %1885 = vmatpush1.msra.mxu0 0.0
      %1886 = vmatprep.subr.mxu0 0.0
      %1887 = vmatpush1.msra.mxu0 0.0
      %1888 = vmatprep.subr.mxu0 0.0
      %1889 = vmatpush1.msra.mxu0 0.0
      %1890 = vmatprep.subr.mxu0 0.0
      %1891 = vmatpush1.msra.mxu0 0.0
      %1892 = vmatprep.subr.mxu0 0.0
      %1893 = vmatpush1.msra.mxu0 0.0
      %1894 = vmatprep.mubr.f32.mxu0 0.0
      %1895 = vmatmul.mubr.f32.gmra.mrb[0].mxu0 %v1828
      %v1896 = vpop.f32.mrb[0].mxu0
      %v1897 = vadd.f32 0.0, %v1896
      %v1898 = vpop.f32.mrb[0].mxu0
      %1899 = vdwg.mxu0
      %v1900 = vld [vmem:[%s2 + $0x1b0] sm:$0xff]
      %v1901 = vld [vmem:[%s2 + $0x1b8] sm:$0xff]
      %v1902 = vld [vmem:[%s2 + $0x1c0] sm:$0xff]
      %v1903 = vld [vmem:[%s2 + $0x1c8] sm:$0xff]
      %1904 = vmatprep.subr.mxu0 0.0
      %1905 = vmatpush1.msra.mxu0 %v1900
      %1906 = vmatprep.subr.mxu0 0.0
      %1907 = vmatpush1.msra.mxu0 %v1901
      %1908 = vmatprep.subr.mxu0 0.0
      %1909 = vmatpush1.msra.mxu0 %v1902
      %1910 = vmatprep.subr.mxu0 0.0
      %1911 = vmatpush1.msra.mxu0 %v1903
      %1912 = vmatprep.subr.mxu0 0.0
      %1913 = vmatpush1.msra.mxu0 0.0
      %1914 = vmatprep.subr.mxu0 0.0
      %1915 = vmatpush1.msra.mxu0 0.0
      %1916 = vmatprep.subr.mxu0 0.0
      %1917 = vmatpush1.msra.mxu0 0.0
      %1918 = vmatprep.subr.mxu0 0.0
      %1919 = vmatpush1.msra.mxu0 0.0
      %1920 = vmatprep.subr.mxu0 0.0
      %1921 = vmatpush1.msra.mxu0 0.0
      %1922 = vmatprep.subr.mxu0 0.0
      %1923 = vmatpush1.msra.mxu0 0.0
      %1924 = vmatprep.subr.mxu0 0.0
      %1925 = vmatpush1.msra.mxu0 0.0
      %1926 = vmatprep.subr.mxu0 0.0
      %1927 = vmatpush1.msra.mxu0 0.0
      %1928 = vmatprep.subr.mxu0 0.0
      %1929 = vmatpush1.msra.mxu0 0.0
      %1930 = vmatprep.subr.mxu0 0.0
      %1931 = vmatpush1.msra.mxu0 0.0
      %1932 = vmatprep.subr.mxu0 0.0
      %1933 = vmatpush1.msra.mxu0 0.0
      %1934 = vmatprep.subr.mxu0 0.0
      %1935 = vmatpush1.msra.mxu0 0.0
      %1936 = vmatprep.subr.mxu0 0.0
      %1937 = vmatpush1.msra.mxu0 0.0
      %1938 = vmatprep.subr.mxu0 0.0
      %1939 = vmatpush1.msra.mxu0 0.0
      %1940 = vmatprep.subr.mxu0 0.0
      %1941 = vmatpush1.msra.mxu0 0.0
      %1942 = vmatprep.subr.mxu0 0.0
      %1943 = vmatpush1.msra.mxu0 0.0
      %1944 = vmatprep.subr.mxu0 0.0
      %1945 = vmatpush1.msra.mxu0 0.0
      %1946 = vmatprep.subr.mxu0 0.0
      %1947 = vmatpush1.msra.mxu0 0.0
      %1948 = vmatprep.subr.mxu0 0.0
      %1949 = vmatpush1.msra.mxu0 0.0
      %1950 = vmatprep.subr.mxu0 0.0
      %1951 = vmatpush1.msra.mxu0 0.0
      %1952 = vmatprep.subr.mxu0 0.0
      %1953 = vmatpush1.msra.mxu0 0.0
      %1954 = vmatprep.subr.mxu0 0.0
      %1955 = vmatpush1.msra.mxu0 0.0
      %1956 = vmatprep.subr.mxu0 0.0
      %1957 = vmatpush1.msra.mxu0 0.0
      %1958 = vmatprep.subr.mxu0 0.0
      %1959 = vmatpush1.msra.mxu0 0.0
      %1960 = vmatprep.subr.mxu0 0.0
      %1961 = vmatpush1.msra.mxu0 0.0
      %1962 = vmatprep.subr.mxu0 0.0
      %1963 = vmatpush1.msra.mxu0 0.0
      %1964 = vmatprep.subr.mxu0 0.0
      %1965 = vmatpush1.msra.mxu0 0.0
      %1966 = vmatprep.subr.mxu0 0.0
      %1967 = vmatpush1.msra.mxu0 0.0
      %1968 = vmatprep.mubr.f32.mxu0 0.0
      %1969 = vmatmul.mubr.f32.gmra.mrb[0].mxu0 %v1828
      %v1970 = vpop.f32.mrb[0].mxu0
      %v1971 = vadd.f32 0.0, %v1970
      %v1972 = vpop.f32.mrb[0].mxu0
      %1973 = vdwg.mxu0
      %v1975 = vsel %vm343, %v1815, 0
      %v1978 = vsel %vm343, %v1820, 0
      %v1981 = vsel %vm343, %v1897, 0
      %1983 = vmatprep.subr.mxu0 0.0
      %1984 = vmatpush1.xpose.msra.mxu0 %v1981
      %1985 = vmatprep.subr.mxu0 0.0
      %1986 = vmatpush1.xpose.msra.mxu0 0.0
      %1987 = vmatprep.subr.mxu0 0.0
      %1988 = vmatpush1.xpose.msra.mxu0 0.0
      %1989 = vmatprep.subr.mxu0 0.0
      %1990 = vmatpush1.xpose.msra.mxu0 0.0
      %1991 = vmatprep.subr.mxu0 0.0
      %1992 = vmatpush1.xpose.msra.mxu0 0.0
      %1993 = vmatprep.subr.mxu0 0.0
      %1994 = vmatpush1.xpose.msra.mxu0 0.0
      %1995 = vmatprep.subr.mxu0 0.0
      %1996 = vmatpush1.xpose.msra.mxu0 0.0
      %1997 = vmatprep.subr.mxu0 0.0
      %1998 = vmatpush1.xpose.msra.mxu0 0.0
      %1999 = vmatprep.subr.mxu0 0.0
      %2000 = vmatpush1.xpose.msra.mxu0 0.0
      %2001 = vmatprep.subr.mxu0 0.0
      %2002 = vmatpush1.xpose.msra.mxu0 0.0
      %2003 = vmatprep.subr.mxu0 0.0
      %2004 = vmatpush1.xpose.msra.mxu0 0.0
      %2005 = vmatprep.subr.mxu0 0.0
      %2006 = vmatpush1.xpose.msra.mxu0 0.0
      %2007 = vmatprep.subr.mxu0 0.0
      %2008 = vmatpush1.xpose.msra.mxu0 0.0
      %2009 = vmatprep.subr.mxu0 0.0
      %2010 = vmatpush1.xpose.msra.mxu0 0.0
      %2011 = vmatprep.subr.mxu0 0.0
      %2012 = vmatpush1.xpose.msra.mxu0 0.0
      %2013 = vmatprep.subr.mxu0 0.0
      %2014 = vmatpush1.xpose.msra.mxu0 0.0
      %2015 = vmatprep.subr.mxu0 0.0
      %2016 = vmatpush1.xpose.msra.mxu0 0.0
      %2017 = vmatprep.subr.mxu0 0.0
      %2018 = vmatpush1.xpose.msra.mxu0 0.0
      %2019 = vmatprep.subr.mxu0 0.0
      %2020 = vmatpush1.xpose.msra.mxu0 0.0
      %2021 = vmatprep.subr.mxu0 0.0
      %2022 = vmatpush1.xpose.msra.mxu0 0.0
      %2023 = vmatprep.subr.mxu0 0.0
      %2024 = vmatpush1.xpose.msra.mxu0 0.0
      %2025 = vmatprep.subr.mxu0 0.0
      %2026 = vmatpush1.xpose.msra.mxu0 0.0
      %2027 = vmatprep.subr.mxu0 0.0
      %2028 = vmatpush1.xpose.msra.mxu0 0.0
      %2029 = vmatprep.subr.mxu0 0.0
      %2030 = vmatpush1.xpose.msra.mxu0 0.0
      %2031 = vmatprep.subr.mxu0 0.0
      %2032 = vmatpush1.xpose.msra.mxu0 0.0
      %2033 = vmatprep.subr.mxu0 0.0
      %2034 = vmatpush1.xpose.msra.mxu0 0.0
      %2035 = vmatprep.subr.mxu0 0.0
      %2036 = vmatpush1.xpose.msra.mxu0 0.0
      %2037 = vmatprep.subr.mxu0 0.0
      %2038 = vmatpush1.xpose.msra.mxu0 0.0
      %2039 = vmatprep.subr.mxu0 0.0
      %2040 = vmatpush1.xpose.msra.mxu0 0.0
      %2041 = vmatprep.subr.mxu0 0.0
      %2042 = vmatpush1.xpose.msra.mxu0 0.0
      %2043 = vmatprep.subr.mxu0 0.0
      %2044 = vmatpush1.xpose.msra.mxu0 0.0
      %2045 = vmatprep.subr.mxu0 0.0
      %2046 = vmatpush1.xpose.msra.mxu0 0.0
      %2047 = vmatprep.mubr.f32.mxu0 0.0
      %2048 = vmatmul.mubr.f32.gmra.mrb[0].mxu0 %v1975
      %v2049 = vpop.f32.mrb[0].mxu0
      %v2050 = vadd.f32 %v248, %v2049
      %v2051 = vpop.f32.mrb[0].mxu0
      %2052 = vmatprep.mubr.f32.mxu0 0.0
      %2053 = vmatmul.mubr.f32.gmra.mrb[0].mxu0 %v1978
      %v2054 = vpop.f32.mrb[0].mxu0
      %v2055 = vadd.f32 %v248, %v2054
      %v2056 = vpop.f32.mrb[0].mxu0
      %2057 = vdwg.mxu0
      %v2058 = vsel %vm846, %v2050, -inf
      %2059 = vmax.xlane.f32.xlu0 %v2058
      %v2060 = vpop.xlane.xlu0 %2059
      %v2061 = vsel %vm846, %v2055, -inf
      %2062 = vmax.xlane.f32.xlu0 %v2061
      %v2063 = vpop.xlane.xlu0 %2062
      %v2064 = vsub.f32 %v2050, %v2060
      %v2065 = vsub.f32 %v2055, %v2063
      %v2066 = vmul.f32 %v2064, 1.442695
      %v2067 = vpow.pop %v2066
      %v2068 = vmul.f32 %v2065, 1.442695
      %v2069 = vpow.pop %v2068
      %v2070 = vsel %vm846, %v2067, 0.0
      %2071 = vadd.xlane.f32.xlu0 %v2070
      %v2072 = vpop.xlane.xlu0 %2071
      %v2073 = vsel %vm846, %v2069, 0.0
      %2074 = vadd.xlane.f32.xlu0 %v2073
      %v2075 = vpop.xlane.xlu0 %2074
      %v2077 = vsel %vm846, %v2067, 0
      %v2080 = vsel %vm846, %v2069, 0
      %2082 = vmatprep.subr.mxu0 0.0
      %2083 = vmatpush1.msra.mxu0 %v1971
      %2084 = vmatprep.subr.mxu0 0.0
      %2085 = vmatpush1.msra.mxu0 0.0
      %2086 = vmatprep.subr.mxu0 0.0
      %2087 = vmatpush1.msra.mxu0 0.0
      %2088 = vmatprep.subr.mxu0 0.0
      %2089 = vmatpush1.msra.mxu0 0.0
      %2090 = vmatprep.subr.mxu0 0.0
      %2091 = vmatpush1.msra.mxu0 0.0
      %2092 = vmatprep.subr.mxu0 0.0
      %2093 = vmatpush1.msra.mxu0 0.0
      %2094 = vmatprep.subr.mxu0 0.0
      %2095 = vmatpush1.msra.mxu0 0.0
      %2096 = vmatprep.subr.mxu0 0.0
      %2097 = vmatpush1.msra.mxu0 0.0
      %2098 = vmatprep.subr.mxu0 0.0
      %2099 = vmatpush1.msra.mxu0 0.0
      %2100 = vmatprep.subr.mxu0 0.0
      %2101 = vmatpush1.msra.mxu0 0.0
      %2102 = vmatprep.subr.mxu0 0.0
      %2103 = vmatpush1.msra.mxu0 0.0
      %2104 = vmatprep.subr.mxu0 0.0
      %2105 = vmatpush1.msra.mxu0 0.0
      %2106 = vmatprep.subr.mxu0 0.0
      %2107 = vmatpush1.msra.mxu0 0.0
      %2108 = vmatprep.subr.mxu0 0.0
      %2109 = vmatpush1.msra.mxu0 0.0
      %2110 = vmatprep.subr.mxu0 0.0
      %2111 = vmatpush1.msra.mxu0 0.0
      %2112 = vmatprep.subr.mxu0 0.0
      %2113 = vmatpush1.msra.mxu0 0.0
      %2114 = vmatprep.subr.mxu0 0.0
      %2115 = vmatpush1.msra.mxu0 0.0
      %2116 = vmatprep.subr.mxu0 0.0
      %2117 = vmatpush1.msra.mxu0 0.0
      %2118 = vmatprep.subr.mxu0 0.0
      %2119 = vmatpush1.msra.mxu0 0.0
      %2120 = vmatprep.subr.mxu0 0.0
      %2121 = vmatpush1.msra.mxu0 0.0
      %2122 = vmatprep.subr.mxu0 0.0
      %2123 = vmatpush1.msra.mxu0 0.0
      %2124 = vmatprep.subr.mxu0 0.0
      %2125 = vmatpush1.msra.mxu0 0.0
      %2126 = vmatprep.subr.mxu0 0.0
      %2127 = vmatpush1.msra.mxu0 0.0
      %2128 = vmatprep.subr.mxu0 0.0
      %2129 = vmatpush1.msra.mxu0 0.0
      %2130 = vmatprep.subr.mxu0 0.0
      %2131 = vmatpush1.msra.mxu0 0.0
      %2132 = vmatprep.subr.mxu0 0.0
      %2133 = vmatpush1.msra.mxu0 0.0
      %2134 = vmatprep.subr.mxu0 0.0
      %2135 = vmatpush1.msra.mxu0 0.0
      %2136 = vmatprep.subr.mxu0 0.0
      %2137 = vmatpush1.msra.mxu0 0.0
      %2138 = vmatprep.subr.mxu0 0.0
      %2139 = vmatpush1.msra.mxu0 0.0
      %2140 = vmatprep.subr.mxu0 0.0
      %2141 = vmatpush1.msra.mxu0 0.0
      %2142 = vmatprep.subr.mxu0 0.0
      %2143 = vmatpush1.msra.mxu0 0.0
      %2144 = vmatprep.subr.mxu0 0.0
      %2145 = vmatpush1.msra.mxu0 0.0
      %2146 = vmatprep.mubr.f32.mxu0 0.0
      %2147 = vmatmul.mubr.f32.gmra.mrb[0].mxu0 %v2077
      %v2148 = vpop.f32.mrb[0].mxu0
      %v2149 = vadd.f32 0.0, %v2148
      %v2150 = vpop.f32.mrb[0].mxu0
      %2151 = vmatprep.mubr.f32.mxu0 0.0
      %2152 = vmatmul.mubr.f32.gmra.mrb[0].mxu0 %v2080
      %v2153 = vpop.f32.mrb[0].mxu0
      %v2154 = vadd.f32 0.0, %v2153
      %v2155 = vpop.f32.mrb[0].mxu0
      %2156 = vdwg.mxu0
      %v2157 = vrcp.pop %v2072
      %v2158 = vrcp.pop %v2075
      %v2159 = vmul.f32 %v2149, %v2157
      %v2160 = vmul.f32 %v2154, %v2158
      %v2161 = vld [vmem:[%s2 + $0x1d0] sm:$0xff]
      %v2162 = vld [vmem:[%s2 + $0x1d8] sm:$0xff]
      %v2163 = vld [vmem:[%s2 + $0x1e0] sm:$0xff]
      %v2164 = vld [vmem:[%s2 + $0x1e8] sm:$0xff]
      %v2166 = vsel %vm343, %v2159, 0
      %v2169 = vsel %vm343, %v2160, 0
      %2171 = vmatprep.subr.mxu0 0.0
      %2172 = vmatpush1.msra.mxu0 %v2161
      %2173 = vmatprep.subr.mxu0 0.0
      %2174 = vmatpush1.msra.mxu0 %v2162
      %2175 = vmatprep.subr.mxu0 0.0
      %2176 = vmatpush1.msra.mxu0 %v2163
      %2177 = vmatprep.subr.mxu0 0.0
      %2178 = vmatpush1.msra.mxu0 %v2164
      %2179 = vmatprep.subr.mxu0 0.0
      %2180 = vmatpush1.msra.mxu0 0.0
      %2181 = vmatprep.subr.mxu0 0.0
      %2182 = vmatpush1.msra.mxu0 0.0
      %2183 = vmatprep.subr.mxu0 0.0
      %2184 = vmatpush1.msra.mxu0 0.0
      %2185 = vmatprep.subr.mxu0 0.0
      %2186 = vmatpush1.msra.mxu0 0.0
      %2187 = vmatprep.subr.mxu0 0.0
      %2188 = vmatpush1.msra.mxu0 0.0
      %2189 = vmatprep.subr.mxu0 0.0
      %2190 = vmatpush1.msra.mxu0 0.0
      %2191 = vmatprep.subr.mxu0 0.0
      %2192 = vmatpush1.msra.mxu0 0.0
      %2193 = vmatprep.subr.mxu0 0.0
      %2194 = vmatpush1.msra.mxu0 0.0
      %2195 = vmatprep.subr.mxu0 0.0
      %2196 = vmatpush1.msra.mxu0 0.0
      %2197 = vmatprep.subr.mxu0 0.0
      %2198 = vmatpush1.msra.mxu0 0.0
      %2199 = vmatprep.subr.mxu0 0.0
      %2200 = vmatpush1.msra.mxu0 0.0
      %2201 = vmatprep.subr.mxu0 0.0
      %2202 = vmatpush1.msra.mxu0 0.0
      %2203 = vmatprep.subr.mxu0 0.0
      %2204 = vmatpush1.msra.mxu0 0.0
      %2205 = vmatprep.subr.mxu0 0.0
      %2206 = vmatpush1.msra.mxu0 0.0
      %2207 = vmatprep.subr.mxu0 0.0
      %2208 = vmatpush1.msra.mxu0 0.0
      %2209 = vmatprep.subr.mxu0 0.0
      %2210 = vmatpush1.msra.mxu0 0.0
      %2211 = vmatprep.subr.mxu0 0.0
      %2212 = vmatpush1.msra.mxu0 0.0
      %2213 = vmatprep.subr.mxu0 0.0
      %2214 = vmatpush1.msra.mxu0 0.0
      %2215 = vmatprep.subr.mxu0 0.0
      %2216 = vmatpush1.msra.mxu0 0.0
      %2217 = vmatprep.subr.mxu0 0.0
      %2218 = vmatpush1.msra.mxu0 0.0
      %2219 = vmatprep.subr.mxu0 0.0
      %2220 = vmatpush1.msra.mxu0 0.0
      %2221 = vmatprep.subr.mxu0 0.0
      %2222 = vmatpush1.msra.mxu0 0.0
      %2223 = vmatprep.subr.mxu0 0.0
      %2224 = vmatpush1.msra.mxu0 0.0
      %2225 = vmatprep.subr.mxu0 0.0
      %2226 = vmatpush1.msra.mxu0 0.0
      %2227 = vmatprep.subr.mxu0 0.0
      %2228 = vmatpush1.msra.mxu0 0.0
      %2229 = vmatprep.subr.mxu0 0.0
      %2230 = vmatpush1.msra.mxu0 0.0
      %2231 = vmatprep.subr.mxu0 0.0
      %2232 = vmatpush1.msra.mxu0 0.0
      %2233 = vmatprep.subr.mxu0 0.0
      %2234 = vmatpush1.msra.mxu0 0.0
      %2235 = vmatprep.mubr.f32.mxu0 0.0
      %2236 = vmatmul.mubr.f32.gmra.mrb[0].mxu0 %v2166
      %v2237 = vpop.f32.mrb[0].mxu0
      %v2238 = vadd.f32 0.0, %v2237
      %v2239 = vpop.f32.mrb[0].mxu0
      %2240 = vmatprep.mubr.f32.mxu0 0.0
      %2241 = vmatmul.mubr.f32.gmra.mrb[0].mxu0 %v2169
      %v2242 = vpop.f32.mrb[0].mxu0
      %v2243 = vadd.f32 0.0, %v2242
      %v2244 = vpop.f32.mrb[0].mxu0
      %2245 = vdwg.mxu0
      %v2246 = vadd.f32 %v540, %v2238
      %v2247 = vadd.f32 %v541, %v2243
      %v2248 = vld [vmem:[%s2 + $0x263] sm:$0x1]
      %v2249 = vld [vmem:[%s2 + $0x267] sm:$0x1]
      %v2250 = vsel %vm343, %v2246, 0.0
      %2251 = vadd.xlane.f32.xlu0 %v2250
      %v2252 = vpop.xlane.xlu0 %2251
      %v2253 = vsel %vm343, %v2247, 0.0
      %2254 = vadd.xlane.f32.xlu0 %v2253
      %v2255 = vpop.xlane.xlu0 %2254
      %v2256 = vmul.f32 %v2252, %v1014
      %v2257 = vmul.f32 %v2255, %v1014
      %v2258 = vsub.f32 %v2246, %v2256
      %v2259 = vsub.f32 %v2247, %v2257
      %v2260 = vmul.f32 %v2258, %v2258
      %v2261 = vmul.f32 %v2259, %v2259
      %v2262 = vsel %vm343, %v2260, 0.0
      %2263 = vadd.xlane.f32.xlu0 %v2262
      %v2264 = vpop.xlane.xlu0 %2263
      %v2265 = vsel %vm343, %v2261, 0.0
      %2266 = vadd.xlane.f32.xlu0 %v2265
      %v2267 = vpop.xlane.xlu0 %2266
      %v2268 = vmul.f32 %v2264, %v1014
      %v2269 = vmul.f32 %v2267, %v1014
      %v2270 = vadd.f32 %v2268, 1e-06
      %v2271 = vadd.f32 %v2269, 1e-06
      %v2272 = vrsqrt.pop %v2270
      %v2273 = vrsqrt.pop %v2271
      %v2274 = vmul.f32 %v2258, %v2272
      %v2275 = vmul.f32 %v2259, %v2273
      %v2276 = vlaneseq
      %v2277 = vshrl.u32 %v2276, 7
      %v2278 = vsub.s32 0, %v2277
      %v2279 = vrot.slane %v2248, %v2278
      %v2280 = vmul.f32 %v2274, %v2279
      %v2281 = vmul.f32 %v2275, %v2279
      %v2282 = vlaneseq
      %v2283 = vshrl.u32 %v2282, 7
      %v2284 = vsub.s32 0, %v2283
      %v2285 = vrot.slane %v2249, %v2284
      %v2286 = vadd.f32 %v2280, %v2285
      %v2287 = vadd.f32 %v2281, %v2285
      %v2288 = vld [vmem:[%s2 + $0x230] sm:$0xff]
      %v2289 = vld [vmem:[%s2 + $0x238] sm:$0xff]
      %v2290 = vld [vmem:[%s2 + $0x240] sm:$0xff]
      %v2291 = vld [vmem:[%s2 + $0x248] sm:$0xff]
      %v2292 = vrot.slane %v1743, 1
      %v2293 = vsel %vm343, %v2292, 0
      %2295 = vmatprep.subr.mxu0 0.0
      %2296 = vmatpush1.msra.mxu0 %v2288
      %2297 = vmatprep.subr.mxu0 0.0
      %2298 = vmatpush1.msra.mxu0 %v2289
      %2299 = vmatprep.subr.mxu0 0.0
      %2300 = vmatpush1.msra.mxu0 %v2290
      %2301 = vmatprep.subr.mxu0 0.0
      %2302 = vmatpush1.msra.mxu0 %v2291
      %2303 = vmatprep.subr.mxu0 0.0
      %2304 = vmatpush1.msra.mxu0 0.0
      %2305 = vmatprep.subr.mxu0 0.0
      %2306 = vmatpush1.msra.mxu0 0.0
      %2307 = vmatprep.subr.mxu0 0.0
      %2308 = vmatpush1.msra.mxu0 0.0
      %2309 = vmatprep.subr.mxu0 0.0
      %2310 = vmatpush1.msra.mxu0 0.0
      %2311 = vmatprep.subr.mxu0 0.0
      %2312 = vmatpush1.msra.mxu0 0.0
      %2313 = vmatprep.subr.mxu0 0.0
      %2314 = vmatpush1.msra.mxu0 0.0
      %2315 = vmatprep.subr.mxu0 0.0
      %2316 = vmatpush1.msra.mxu0 0.0
      %2317 = vmatprep.subr.mxu0 0.0
      %2318 = vmatpush1.msra.mxu0 0.0
      %2319 = vmatprep.subr.mxu0 0.0
      %2320 = vmatpush1.msra.mxu0 0.0
      %2321 = vmatprep.subr.mxu0 0.0
      %2322 = vmatpush1.msra.mxu0 0.0
      %2323 = vmatprep.subr.mxu0 0.0
      %2324 = vmatpush1.msra.mxu0 0.0
      %2325 = vmatprep.subr.mxu0 0.0
      %2326 = vmatpush1.msra.mxu0 0.0
      %2327 = vmatprep.subr.mxu0 0.0
      %2328 = vmatpush1.msra.mxu0 0.0
      %2329 = vmatprep.subr.mxu0 0.0
      %2330 = vmatpush1.msra.mxu0 0.0
      %2331 = vmatprep.subr.mxu0 0.0
      %2332 = vmatpush1.msra.mxu0 0.0
      %2333 = vmatprep.subr.mxu0 0.0
      %2334 = vmatpush1.msra.mxu0 0.0
      %2335 = vmatprep.subr.mxu0 0.0
      %2336 = vmatpush1.msra.mxu0 0.0
      %2337 = vmatprep.subr.mxu0 0.0
      %2338 = vmatpush1.msra.mxu0 0.0
      %2339 = vmatprep.subr.mxu0 0.0
      %2340 = vmatpush1.msra.mxu0 0.0
      %2341 = vmatprep.subr.mxu0 0.0
      %2342 = vmatpush1.msra.mxu0 0.0
      %2343 = vmatprep.subr.mxu0 0.0
      %2344 = vmatpush1.msra.mxu0 0.0
      %2345 = vmatprep.subr.mxu0 0.0
      %2346 = vmatpush1.msra.mxu0 0.0
      %2347 = vmatprep.subr.mxu0 0.0
      %2348 = vmatpush1.msra.mxu0 0.0
      %2349 = vmatprep.subr.mxu0 0.0
      %2350 = vmatpush1.msra.mxu0 0.0
      %2351 = vmatprep.subr.mxu0 0.0
      %2352 = vmatpush1.msra.mxu0 0.0
      %2353 = vmatprep.subr.mxu0 0.0
      %2354 = vmatpush1.msra.mxu0 0.0
      %2355 = vmatprep.subr.mxu0 0.0
      %2356 = vmatpush1.msra.mxu0 0.0
      %2357 = vmatprep.subr.mxu0 0.0
      %2358 = vmatpush1.msra.mxu0 0.0
      %2359 = vmatprep.mubr.f32.mxu0 0.0
      %2360 = vmatmul.mubr.f32.gmra.mrb[0].mxu0 %v2293
      %v2361 = vpop.f32.mrb[0].mxu0
      %v2362 = vadd.f32 0.0, %v2361
      %v2363 = vpop.f32.mrb[0].mxu0
      %2364 = vdwg.mxu0
      %v2365 = vmax.f32 %v2362, 0.0
      %v2366 = vld [vmem:[%s4 + $0x40] sm:$0xff]
      %v2367 = vld [vmem:[%s4 + $0x48] sm:$0xff]
      %v2368 = vld [vmem:[%s4 + $0x50] sm:$0xff]
      %v2369 = vld [vmem:[%s4 + $0x58] sm:$0xff]
      %v2371 = vsel %vm343, %v2365, 0
      %2373 = vmatprep.subr.mxu0 0.0
      %2374 = vmatpush1.msra.mxu0 %v2366
      %2375 = vmatprep.subr.mxu0 0.0
      %2376 = vmatpush1.msra.mxu0 %v2367
      %2377 = vmatprep.subr.mxu0 0.0
      %2378 = vmatpush1.msra.mxu0 %v2368
      %2379 = vmatprep.subr.mxu0 0.0
      %2380 = vmatpush1.msra.mxu0 %v2369
      %2381 = vmatprep.subr.mxu0 0.0
      %2382 = vmatpush1.msra.mxu0 0.0
      %2383 = vmatprep.subr.mxu0 0.0
      %2384 = vmatpush1.msra.mxu0 0.0
      %2385 = vmatprep.subr.mxu0 0.0
      %2386 = vmatpush1.msra.mxu0 0.0
      %2387 = vmatprep.subr.mxu0 0.0
      %2388 = vmatpush1.msra.mxu0 0.0
      %2389 = vmatprep.subr.mxu0 0.0
      %2390 = vmatpush1.msra.mxu0 0.0
      %2391 = vmatprep.subr.mxu0 0.0
      %2392 = vmatpush1.msra.mxu0 0.0
      %2393 = vmatprep.subr.mxu0 0.0
      %2394 = vmatpush1.msra.mxu0 0.0
      %2395 = vmatprep.subr.mxu0 0.0
      %2396 = vmatpush1.msra.mxu0 0.0
      %2397 = vmatprep.subr.mxu0 0.0
      %2398 = vmatpush1.msra.mxu0 0.0
      %2399 = vmatprep.subr.mxu0 0.0
      %2400 = vmatpush1.msra.mxu0 0.0
      %2401 = vmatprep.subr.mxu0 0.0
      %2402 = vmatpush1.msra.mxu0 0.0
      %2403 = vmatprep.subr.mxu0 0.0
      %2404 = vmatpush1.msra.mxu0 0.0
      %2405 = vmatprep.subr.mxu0 0.0
      %2406 = vmatpush1.msra.mxu0 0.0
      %2407 = vmatprep.subr.mxu0 0.0
      %2408 = vmatpush1.msra.mxu0 0.0
      %2409 = vmatprep.subr.mxu0 0.0
      %2410 = vmatpush1.msra.mxu0 0.0
      %2411 = vmatprep.subr.mxu0 0.0
      %2412 = vmatpush1.msra.mxu0 0.0
      %2413 = vmatprep.subr.mxu0 0.0
      %2414 = vmatpush1.msra.mxu0 0.0
      %2415 = vmatprep.subr.mxu0 0.0
      %2416 = vmatpush1.msra.mxu0 0.0
      %2417 = vmatprep.subr.mxu0 0.0
      %2418 = vmatpush1.msra.mxu0 0.0
      %2419 = vmatprep.subr.mxu0 0.0
      %2420 = vmatpush1.msra.mxu0 0.0
      %2421 = vmatprep.subr.mxu0 0.0
      %2422 = vmatpush1.msra.mxu0 0.0
      %2423 = vmatprep.subr.mxu0 0.0
      %2424 = vmatpush1.msra.mxu0 0.0
      %2425 = vmatprep.subr.mxu0 0.0
      %2426 = vmatpush1.msra.mxu0 0.0
      %2427 = vmatprep.subr.mxu0 0.0
      %2428 = vmatpush1.msra.mxu0 0.0
      %2429 = vmatprep.subr.mxu0 0.0
      %2430 = vmatpush1.msra.mxu0 0.0
      %2431 = vmatprep.subr.mxu0 0.0
      %2432 = vmatpush1.msra.mxu0 0.0
      %2433 = vmatprep.subr.mxu0 0.0
      %2434 = vmatpush1.msra.mxu0 0.0
      %2435 = vmatprep.subr.mxu0 0.0
      %2436 = vmatpush1.msra.mxu0 0.0
      %2437 = vmatprep.mubr.f32.mxu0 0.0
      %2438 = vmatmul.mubr.f32.gmra.mrb[0].mxu0 %v2371
      %v2439 = vpop.f32.mrb[0].mxu0
      %v2440 = vadd.f32 0.0, %v2439
      %v2441 = vpop.f32.mrb[0].mxu0
      %2442 = vdwg.mxu0
      %v2443 = vld [vmem:[%s3 + $0x40] sm:$0xff]
      %v2444 = vld [vmem:[%s3 + $0x48] sm:$0xff]
      %v2445 = vld [vmem:[%s3 + $0x50] sm:$0xff]
      %v2446 = vld [vmem:[%s3 + $0x58] sm:$0xff]
      %v2448 = vsel %vm343, %v2286, 0
      %v2451 = vsel %vm343, %v2287, 0
      %2453 = vmatprep.subr.mxu0 0.0
      %2454 = vmatpush1.msra.mxu0 %v2443
      %2455 = vmatprep.subr.mxu0 0.0
      %2456 = vmatpush1.msra.mxu0 %v2444
      %2457 = vmatprep.subr.mxu0 0.0
      %2458 = vmatpush1.msra.mxu0 %v2445
      %2459 = vmatprep.subr.mxu0 0.0
      %2460 = vmatpush1.msra.mxu0 %v2446
      %2461 = vmatprep.subr.mxu0 0.0
      %2462 = vmatpush1.msra.mxu0 0.0
      %2463 = vmatprep.subr.mxu0 0.0
      %2464 = vmatpush1.msra.mxu0 0.0
      %2465 = vmatprep.subr.mxu0 0.0
      %2466 = vmatpush1.msra.mxu0 0.0
      %2467 = vmatprep.subr.mxu0 0.0
      %2468 = vmatpush1.msra.mxu0 0.0
      %2469 = vmatprep.subr.mxu0 0.0
      %2470 = vmatpush1.msra.mxu0 0.0
      %2471 = vmatprep.subr.mxu0 0.0
      %2472 = vmatpush1.msra.mxu0 0.0
      %2473 = vmatprep.subr.mxu0 0.0
      %2474 = vmatpush1.msra.mxu0 0.0
      %2475 = vmatprep.subr.mxu0 0.0
      %2476 = vmatpush1.msra.mxu0 0.0
      %2477 = vmatprep.subr.mxu0 0.0
      %2478 = vmatpush1.msra.mxu0 0.0
      %2479 = vmatprep.subr.mxu0 0.0
      %2480 = vmatpush1.msra.mxu0 0.0
      %2481 = vmatprep.subr.mxu0 0.0
      %2482 = vmatpush1.msra.mxu0 0.0
      %2483 = vmatprep.subr.mxu0 0.0
      %2484 = vmatpush1.msra.mxu0 0.0
      %2485 = vmatprep.subr.mxu0 0.0
      %2486 = vmatpush1.msra.mxu0 0.0
      %2487 = vmatprep.subr.mxu0 0.0
      %2488 = vmatpush1.msra.mxu0 0.0
      %2489 = vmatprep.subr.mxu0 0.0
      %2490 = vmatpush1.msra.mxu0 0.0
      %2491 = vmatprep.subr.mxu0 0.0
      %2492 = vmatpush1.msra.mxu0 0.0
      %2493 = vmatprep.subr.mxu0 0.0
      %2494 = vmatpush1.msra.mxu0 0.0
      %2495 = vmatprep.subr.mxu0 0.0
      %2496 = vmatpush1.msra.mxu0 0.0
      %2497 = vmatprep.subr.mxu0 0.0
      %2498 = vmatpush1.msra.mxu0 0.0
      %2499 = vmatprep.subr.mxu0 0.0
      %2500 = vmatpush1.msra.mxu0 0.0
      %2501 = vmatprep.subr.mxu0 0.0
      %2502 = vmatpush1.msra.mxu0 0.0
      %2503 = vmatprep.subr.mxu0 0.0
      %2504 = vmatpush1.msra.mxu0 0.0
      %2505 = vmatprep.subr.mxu0 0.0
      %2506 = vmatpush1.msra.mxu0 0.0
      %2507 = vmatprep.subr.mxu0 0.0
      %2508 = vmatpush1.msra.mxu0 0.0
      %2509 = vmatprep.subr.mxu0 0.0
      %2510 = vmatpush1.msra.mxu0 0.0
      %2511 = vmatprep.subr.mxu0 0.0
      %2512 = vmatpush1.msra.mxu0 0.0
      %2513 = vmatprep.subr.mxu0 0.0
      %2514 = vmatpush1.msra.mxu0 0.0
      %2515 = vmatprep.subr.mxu0 0.0
      %2516 = vmatpush1.msra.mxu0 0.0
      %2517 = vmatprep.mubr.f32.mxu0 0.0
      %2518 = vmatmul.mubr.f32.gmra.mrb[0].mxu0 %v2448
      %v2519 = vpop.f32.mrb[0].mxu0
      %v2520 = vadd.f32 0.0, %v2519
      %v2521 = vpop.f32.mrb[0].mxu0
      %2522 = vmatprep.mubr.f32.mxu0 0.0
      %2523 = vmatmul.mubr.f32.gmra.mrb[0].mxu0 %v2451
      %v2524 = vpop.f32.mrb[0].mxu0
      %v2525 = vadd.f32 0.0, %v2524
      %v2526 = vpop.f32.mrb[0].mxu0
      %2527 = vdwg.mxu0
      %v2528 = vld [vmem:[%s3 + $0x60] sm:$0xff]
      %v2529 = vld [vmem:[%s3 + $0x68] sm:$0xff]
      %v2530 = vld [vmem:[%s3 + $0x70] sm:$0xff]
      %v2531 = vld [vmem:[%s3 + $0x78] sm:$0xff]
      %v2532 = vld [vmem:[%s3 + $0x80] sm:$0xff]
      %v2533 = vld [vmem:[%s3 + $0x88] sm:$0xff]
      %v2534 = vld [vmem:[%s3 + $0x90] sm:$0xff]
      %v2535 = vld [vmem:[%s3 + $0x98] sm:$0xff]
      %v2537 = vsel %vm451, %v2520, 0
      %v2540 = vsel %vm451, %v2525, 0
      %2542 = vmatprep.subr.mxu0 0.0
      %2543 = vmatpush1.msra.mxu0 %v2528
      %2544 = vmatprep.subr.mxu0 0.0
      %2545 = vmatpush1.msra.mxu0 %v2529
      %2546 = vmatprep.subr.mxu0 0.0
      %2547 = vmatpush1.msra.mxu0 %v2530
      %2548 = vmatprep.subr.mxu0 0.0
      %2549 = vmatpush1.msra.mxu0 %v2531
      %2550 = vmatprep.subr.mxu0 0.0
      %2551 = vmatpush1.msra.mxu0 %v2532
      %2552 = vmatprep.subr.mxu0 0.0
      %2553 = vmatpush1.msra.mxu0 %v2533
      %2554 = vmatprep.subr.mxu0 0.0
      %2555 = vmatpush1.msra.mxu0 %v2534
      %2556 = vmatprep.subr.mxu0 0.0
      %2557 = vmatpush1.msra.mxu0 %v2535
      %2558 = vmatprep.subr.mxu0 0.0
      %2559 = vmatpush1.msra.mxu0 0.0
      %2560 = vmatprep.subr.mxu0 0.0
      %2561 = vmatpush1.msra.mxu0 0.0
      %2562 = vmatprep.subr.mxu0 0.0
      %2563 = vmatpush1.msra.mxu0 0.0
      %2564 = vmatprep.subr.mxu0 0.0
      %2565 = vmatpush1.msra.mxu0 0.0
      %2566 = vmatprep.subr.mxu0 0.0
      %2567 = vmatpush1.msra.mxu0 0.0
      %2568 = vmatprep.subr.mxu0 0.0
      %2569 = vmatpush1.msra.mxu0 0.0
      %2570 = vmatprep.subr.mxu0 0.0
      %2571 = vmatpush1.msra.mxu0 0.0
      %2572 = vmatprep.subr.mxu0 0.0
      %2573 = vmatpush1.msra.mxu0 0.0
      %2574 = vmatprep.subr.mxu0 0.0
      %2575 = vmatpush1.msra.mxu0 0.0
      %2576 = vmatprep.subr.mxu0 0.0
      %2577 = vmatpush1.msra.mxu0 0.0
      %2578 = vmatprep.subr.mxu0 0.0
      %2579 = vmatpush1.msra.mxu0 0.0
      %2580 = vmatprep.subr.mxu0 0.0
      %2581 = vmatpush1.msra.mxu0 0.0
      %2582 = vmatprep.subr.mxu0 0.0
      %2583 = vmatpush1.msra.mxu0 0.0
      %2584 = vmatprep.subr.mxu0 0.0
      %2585 = vmatpush1.msra.mxu0 0.0
      %2586 = vmatprep.subr.mxu0 0.0
      %2587 = vmatpush1.msra.mxu0 0.0
      %2588 = vmatprep.subr.mxu0 0.0
      %2589 = vmatpush1.msra.mxu0 0.0
      %2590 = vmatprep.subr.mxu0 0.0
      %2591 = vmatpush1.msra.mxu0 0.0
      %2592 = vmatprep.subr.mxu0 0.0
      %2593 = vmatpush1.msra.mxu0 0.0
      %2594 = vmatprep.subr.mxu0 0.0
      %2595 = vmatpush1.msra.mxu0 0.0
      %2596 = vmatprep.subr.mxu0 0.0
      %2597 = vmatpush1.msra.mxu0 0.0
      %2598 = vmatprep.subr.mxu0 0.0
      %2599 = vmatpush1.msra.mxu0 0.0
      %2600 = vmatprep.subr.mxu0 0.0
      %2601 = vmatpush1.msra.mxu0 0.0
      %2602 = vmatprep.subr.mxu0 0.0
      %2603 = vmatpush1.msra.mxu0 0.0
      %2604 = vmatprep.subr.mxu0 0.0
      %2605 = vmatpush1.msra.mxu0 0.0
      %2606 = vmatprep.mubr.f32.mxu0 0.0
      %2607 = vmatmul.mubr.f32.gmra.mrb[0].mxu0 %v2537
      %v2608 = vpop.f32.mrb[0].mxu0
      %v2609 = vadd.f32 0.0, %v2608
      %v2610 = vpop.f32.mrb[0].mxu0
      %2611 = vmatprep.mubr.f32.mxu0 0.0
      %2612 = vmatmul.mubr.f32.gmra.mrb[0].mxu0 %v2540
      %v2613 = vpop.f32.mrb[0].mxu0
      %v2614 = vadd.f32 0.0, %v2613
      %v2615 = vpop.f32.mrb[0].mxu0
      %2616 = vdwg.mxu0
      %v2617 = vsub.f32 %v2520, %v2609
      %v2618 = vsub.f32 %v2525, %v2614
      %v2619 = vmul.f32 %v2617, %v2617
      %v2620 = vmul.f32 %v2618, %v2618
      %v2622 = vsel %vm451, %v2619, 0
      %v2625 = vsel %vm451, %v2620, 0
      %2627 = vmatprep.subr.mxu0 0.0
      %2628 = vmatpush1.msra.mxu0 %v2528
      %2629 = vmatprep.subr.mxu0 0.0
      %2630 = vmatpush1.msra.mxu0 %v2529
      %2631 = vmatprep.subr.mxu0 0.0
      %2632 = vmatpush1.msra.mxu0 %v2530
      %2633 = vmatprep.subr.mxu0 0.0
      %2634 = vmatpush1.msra.mxu0 %v2531
      %2635 = vmatprep.subr.mxu0 0.0
      %2636 = vmatpush1.msra.mxu0 %v2532
      %2637 = vmatprep.subr.mxu0 0.0
      %2638 = vmatpush1.msra.mxu0 %v2533
      %2639 = vmatprep.subr.mxu0 0.0
      %2640 = vmatpush1.msra.mxu0 %v2534
      %2641 = vmatprep.subr.mxu0 0.0
      %2642 = vmatpush1.msra.mxu0 %v2535
      %2643 = vmatprep.subr.mxu0 0.0
      %2644 = vmatpush1.msra.mxu0 0.0
      %2645 = vmatprep.subr.mxu0 0.0
      %2646 = vmatpush1.msra.mxu0 0.0
      %2647 = vmatprep.subr.mxu0 0.0
      %2648 = vmatpush1.msra.mxu0 0.0
      %2649 = vmatprep.subr.mxu0 0.0
      %2650 = vmatpush1.msra.mxu0 0.0
      %2651 = vmatprep.subr.mxu0 0.0
      %2652 = vmatpush1.msra.mxu0 0.0
      %2653 = vmatprep.subr.mxu0 0.0
      %2654 = vmatpush1.msra.mxu0 0.0
      %2655 = vmatprep.subr.mxu0 0.0
      %2656 = vmatpush1.msra.mxu0 0.0
      %2657 = vmatprep.subr.mxu0 0.0
      %2658 = vmatpush1.msra.mxu0 0.0
      %2659 = vmatprep.subr.mxu0 0.0
      %2660 = vmatpush1.msra.mxu0 0.0
      %2661 = vmatprep.subr.mxu0 0.0
      %2662 = vmatpush1.msra.mxu0 0.0
      %2663 = vmatprep.subr.mxu0 0.0
      %2664 = vmatpush1.msra.mxu0 0.0
      %2665 = vmatprep.subr.mxu0 0.0
      %2666 = vmatpush1.msra.mxu0 0.0
      %2667 = vmatprep.subr.mxu0 0.0
      %2668 = vmatpush1.msra.mxu0 0.0
      %2669 = vmatprep.subr.mxu0 0.0
      %2670 = vmatpush1.msra.mxu0 0.0
      %2671 = vmatprep.subr.mxu0 0.0
      %2672 = vmatpush1.msra.mxu0 0.0
      %2673 = vmatprep.subr.mxu0 0.0
      %2674 = vmatpush1.msra.mxu0 0.0
      %2675 = vmatprep.subr.mxu0 0.0
      %2676 = vmatpush1.msra.mxu0 0.0
      %2677 = vmatprep.subr.mxu0 0.0
      %2678 = vmatpush1.msra.mxu0 0.0
      %2679 = vmatprep.subr.mxu0 0.0
      %2680 = vmatpush1.msra.mxu0 0.0
      %2681 = vmatprep.subr.mxu0 0.0
      %2682 = vmatpush1.msra.mxu0 0.0
      %2683 = vmatprep.subr.mxu0 0.0
      %2684 = vmatpush1.msra.mxu0 0.0
      %2685 = vmatprep.subr.mxu0 0.0
      %2686 = vmatpush1.msra.mxu0 0.0
      %2687 = vmatprep.subr.mxu0 0.0
      %2688 = vmatpush1.msra.mxu0 0.0
      %2689 = vmatprep.subr.mxu0 0.0
      %2690 = vmatpush1.msra.mxu0 0.0
      %2691 = vmatprep.mubr.f32.mxu0 0.0
      %2692 = vmatmul.mubr.f32.gmra.mrb[0].mxu0 %v2622
      %v2693 = vpop.f32.mrb[0].mxu0
      %v2694 = vadd.f32 1e-06, %v2693
      %v2695 = vpop.f32.mrb[0].mxu0
      %2696 = vmatprep.mubr.f32.mxu0 0.0
      %2697 = vmatmul.mubr.f32.gmra.mrb[0].mxu0 %v2625
      %v2698 = vpop.f32.mrb[0].mxu0
      %v2699 = vadd.f32 1e-06, %v2698
      %v2700 = vpop.f32.mrb[0].mxu0
      %2701 = vdwg.mxu0
      %v2702 = vrsqrt.pop %v2694
      %v2703 = vrsqrt.pop %v2699
      %v2704 = vmul.f32 %v2617, %v2702
      %v2705 = vmul.f32 %v2618, %v2703
      %v2706 = vld [vmem:[%s3 + $0xa0] sm:$0x1]
      %v2707 = vlaneseq
      %v2708 = vshrl.u32 %v2707, 7
      %v2709 = vsub.s32 0, %v2708
      %v2710 = vrot.slane %v2706, %v2709
      %v2711 = vmul.f32 %v2704, %v2710
      %v2712 = vmul.f32 %v2705, %v2710
      %v2713 = vld [vmem:[%s3 + $0xa1] sm:$0x1]
      %v2714 = vlaneseq
      %v2715 = vshrl.u32 %v2714, 7
      %v2716 = vsub.s32 0, %v2715
      %v2717 = vrot.slane %v2713, %v2716
      %v2718 = vadd.f32 %v2711, %v2717
      %v2719 = vadd.f32 %v2712, %v2717
      %v2720 = vmul.f32 %v2718, %v2718
      %v2721 = vmul.f32 %v2719, %v2719
      %v2722 = vmul.f32 %v2718, %v2720
      %v2723 = vmul.f32 %v2719, %v2721
      %v2724 = vmul.f32 %v2722, 0.044715
      %v2725 = vmul.f32 %v2723, 0.044715
      %v2726 = vadd.f32 %v2718, %v2724
      %v2727 = vadd.f32 %v2719, %v2725
      %v2728 = vmul.f32 %v2726, 0.7978846
      %v2729 = vmul.f32 %v2727, 0.7978846
      %v2730 = vtanh.pop %v2728
      %v2731 = vtanh.pop %v2729
      %v2732 = vadd.f32 %v2730, 1.0
      %v2733 = vadd.f32 %v2731, 1.0
      %v2734 = vmul.f32 %v2732, 0.5
      %v2735 = vmul.f32 %v2733, 0.5
      %v2736 = vmul.f32 %v2718, %v2734
      %v2737 = vmul.f32 %v2719, %v2735
      %v2738 = vld [vmem:[%s4] sm:$0xff]
      %v2739 = vld [vmem:[%s4 + $0x8] sm:$0xff]
      %v2740 = vld [vmem:[%s4 + $0x10] sm:$0xff]
      %v2741 = vld [vmem:[%s4 + $0x18] sm:$0xff]
      %v2742 = vld [vmem:[%s4 + $0x20] sm:$0xff]
      %v2743 = vld [vmem:[%s4 + $0x28] sm:$0xff]
      %v2744 = vld [vmem:[%s4 + $0x30] sm:$0xff]
      %v2745 = vld [vmem:[%s4 + $0x38] sm:$0xff]
      %v2747 = vsel %vm451, %v2736, 0
      %v2750 = vsel %vm451, %v2737, 0
      %2752 = vmatprep.subr.mxu0 0.0
      %2753 = vmatpush1.msra.mxu0 %v2738
      %2754 = vmatprep.subr.mxu0 0.0
      %2755 = vmatpush1.msra.mxu0 %v2739
      %2756 = vmatprep.subr.mxu0 0.0
      %2757 = vmatpush1.msra.mxu0 %v2740
      %2758 = vmatprep.subr.mxu0 0.0
      %2759 = vmatpush1.msra.mxu0 %v2741
      %2760 = vmatprep.subr.mxu0 0.0
      %2761 = vmatpush1.msra.mxu0 %v2742
      %2762 = vmatprep.subr.mxu0 0.0
      %2763 = vmatpush1.msra.mxu0 %v2743
      %2764 = vmatprep.subr.mxu0 0.0
      %2765 = vmatpush1.msra.mxu0 %v2744
      %2766 = vmatprep.subr.mxu0 0.0
      %2767 = vmatpush1.msra.mxu0 %v2745
      %2768 = vmatprep.subr.mxu0 0.0
      %2769 = vmatpush1.msra.mxu0 0.0
      %2770 = vmatprep.subr.mxu0 0.0
      %2771 = vmatpush1.msra.mxu0 0.0
      %2772 = vmatprep.subr.mxu0 0.0
      %2773 = vmatpush1.msra.mxu0 0.0
      %2774 = vmatprep.subr.mxu0 0.0
      %2775 = vmatpush1.msra.mxu0 0.0
      %2776 = vmatprep.subr.mxu0 0.0
      %2777 = vmatpush1.msra.mxu0 0.0
      %2778 = vmatprep.subr.mxu0 0.0
      %2779 = vmatpush1.msra.mxu0 0.0
      %2780 = vmatprep.subr.mxu0 0.0
      %2781 = vmatpush1.msra.mxu0 0.0
      %2782 = vmatprep.subr.mxu0 0.0
      %2783 = vmatpush1.msra.mxu0 0.0
      %2784 = vmatprep.subr.mxu0 0.0
      %2785 = vmatpush1.msra.mxu0 0.0
      %2786 = vmatprep.subr.mxu0 0.0
      %2787 = vmatpush1.msra.mxu0 0.0
      %2788 = vmatprep.subr.mxu0 0.0
      %2789 = vmatpush1.msra.mxu0 0.0
      %2790 = vmatprep.subr.mxu0 0.0
      %2791 = vmatpush1.msra.mxu0 0.0
      %2792 = vmatprep.subr.mxu0 0.0
      %2793 = vmatpush1.msra.mxu0 0.0
      %2794 = vmatprep.subr.mxu0 0.0
      %2795 = vmatpush1.msra.mxu0 0.0
      %2796 = vmatprep.subr.mxu0 0.0
      %2797 = vmatpush1.msra.mxu0 0.0
      %2798 = vmatprep.subr.mxu0 0.0
      %2799 = vmatpush1.msra.mxu0 0.0
      %2800 = vmatprep.subr.mxu0 0.0
      %2801 = vmatpush1.msra.mxu0 0.0
      %2802 = vmatprep.subr.mxu0 0.0
      %2803 = vmatpush1.msra.mxu0 0.0
      %2804 = vmatprep.subr.mxu0 0.0
      %2805 = vmatpush1.msra.mxu0 0.0
      %2806 = vmatprep.subr.mxu0 0.0
      %2807 = vmatpush1.msra.mxu0 0.0
      %2808 = vmatprep.subr.mxu0 0.0
      %2809 = vmatpush1.msra.mxu0 0.0
      %2810 = vmatprep.subr.mxu0 0.0
      %2811 = vmatpush1.msra.mxu0 0.0
      %2812 = vmatprep.subr.mxu0 0.0
      %2813 = vmatpush1.msra.mxu0 0.0
      %2814 = vmatprep.subr.mxu0 0.0
      %2815 = vmatpush1.msra.mxu0 0.0
      %2816 = vmatprep.mubr.f32.mxu0 0.0
      %2817 = vmatmul.mubr.f32.gmra.mrb[0].mxu0 %v2747
      %v2818 = vpop.f32.mrb[0].mxu0
      %v2819 = vadd.f32 0.0, %v2818
      %v2820 = vpop.f32.mrb[0].mxu0
      %2821 = vmatprep.mubr.f32.mxu0 0.0
      %2822 = vmatmul.mubr.f32.gmra.mrb[0].mxu0 %v2750
      %v2823 = vpop.f32.mrb[0].mxu0
      %v2824 = vadd.f32 0.0, %v2823
      %v2825 = vpop.f32.mrb[0].mxu0
      %2826 = vdwg.mxu0
      %v2827 = vmul.f32 %v2819, %v2819
      %v2828 = vmul.f32 %v2824, %v2824
      %v2829 = vmul.f32 %v2819, %v2827
      %v2830 = vmul.f32 %v2824, %v2828
      %v2831 = vmul.f32 %v2829, 0.044715
      %v2832 = vmul.f32 %v2830, 0.044715
      %v2833 = vadd.f32 %v2819, %v2831
      %v2834 = vadd.f32 %v2824, %v2832
      %v2835 = vmul.f32 %v2833, 0.7978846
      %v2836 = vmul.f32 %v2834, 0.7978846
      %v2837 = vtanh.pop %v2835
      %v2838 = vtanh.pop %v2836
      %v2839 = vadd.f32 %v2837, 1.0
      %v2840 = vadd.f32 %v2838, 1.0
      %v2841 = vmul.f32 %v2839, 0.5
      %v2842 = vmul.f32 %v2840, 0.5
      %v2843 = vmul.f32 %v2819, %v2841
      %v2844 = vmul.f32 %v2824, %v2842
      %v2845 = vlaneseq
      %v2846 = vshrl.u32 %v2845, 7
      %v2847 = vsub.s32 0, %v2846
      %v2848 = vrot.slane %v2440, %v2847
      %v2849 = vmul.f32 %v2843, %v2848
      %v2850 = vmul.f32 %v2844, %v2848
      %v2851 = vld [vmem:[%s4 + $0x60] sm:$0xff]
      %v2852 = vld [vmem:[%s4 + $0x68] sm:$0xff]
      %v2853 = vld [vmem:[%s4 + $0x70] sm:$0xff]
      %v2854 = vld [vmem:[%s4 + $0x78] sm:$0xff]
      %v2855 = vld [vmem:[%s4 + $0x80] sm:$0xff]
      %v2856 = vld [vmem:[%s4 + $0x88] sm:$0xff]
      %v2857 = vld [vmem:[%s4 + $0x90] sm:$0xff]
      %v2858 = vld [vmem:[%s4 + $0x98] sm:$0xff]
      %v2859 = vld [vmem:[%s4 + $0xa0] sm:$0xff]
      %v2860 = vld [vmem:[%s4 + $0xa8] sm:$0xff]
      %v2861 = vld [vmem:[%s4 + $0xb0] sm:$0xff]
      %v2862 = vld [vmem:[%s4 + $0xb8] sm:$0xff]
      %v2863 = vld [vmem:[%s4 + $0xc0] sm:$0xff]
      %v2864 = vld [vmem:[%s4 + $0xc8] sm:$0xff]
      %v2865 = vld [vmem:[%s4 + $0xd0] sm:$0xff]
      %v2866 = vld [vmem:[%s4 + $0xd8] sm:$0xff]
      %2867 = vmatprep.subr.mxu0 0.0
      %2868 = vmatpush1.msra.mxu0 %v2851
      %2869 = vmatprep.subr.mxu0 0.0
      %2870 = vmatpush1.msra.mxu0 %v2852
      %2871 = vmatprep.subr.mxu0 0.0
      %2872 = vmatpush1.msra.mxu0 %v2853
      %2873 = vmatprep.subr.mxu0 0.0
      %2874 = vmatpush1.msra.mxu0 %v2854
      %2875 = vmatprep.subr.mxu0 0.0
      %2876 = vmatpush1.msra.mxu0 %v2855
      %2877 = vmatprep.subr.mxu0 0.0
      %2878 = vmatpush1.msra.mxu0 %v2856
      %2879 = vmatprep.subr.mxu0 0.0
      %2880 = vmatpush1.msra.mxu0 %v2857
      %2881 = vmatprep.subr.mxu0 0.0
      %2882 = vmatpush1.msra.mxu0 %v2858
      %2883 = vmatprep.subr.mxu0 0.0
      %2884 = vmatpush1.msra.mxu0 %v2859
      %2885 = vmatprep.subr.mxu0 0.0
      %2886 = vmatpush1.msra.mxu0 %v2860
      %2887 = vmatprep.subr.mxu0 0.0
      %2888 = vmatpush1.msra.mxu0 %v2861
      %2889 = vmatprep.subr.mxu0 0.0
      %2890 = vmatpush1.msra.mxu0 %v2862
      %2891 = vmatprep.subr.mxu0 0.0
      %2892 = vmatpush1.msra.mxu0 %v2863
      %2893 = vmatprep.subr.mxu0 0.0
      %2894 = vmatpush1.msra.mxu0 %v2864
      %2895 = vmatprep.subr.mxu0 0.0
      %2896 = vmatpush1.msra.mxu0 %v2865
      %2897 = vmatprep.subr.mxu0 0.0
      %2898 = vmatpush1.msra.mxu0 %v2866
      %2899 = vmatprep.subr.mxu0 0.0
      %2900 = vmatpush1.msra.mxu0 0.0
      %2901 = vmatprep.subr.mxu0 0.0
      %2902 = vmatpush1.msra.mxu0 0.0
      %2903 = vmatprep.subr.mxu0 0.0
      %2904 = vmatpush1.msra.mxu0 0.0
      %2905 = vmatprep.subr.mxu0 0.0
      %2906 = vmatpush1.msra.mxu0 0.0
      %2907 = vmatprep.subr.mxu0 0.0
      %2908 = vmatpush1.msra.mxu0 0.0
      %2909 = vmatprep.subr.mxu0 0.0
      %2910 = vmatpush1.msra.mxu0 0.0
      %2911 = vmatprep.subr.mxu0 0.0
      %2912 = vmatpush1.msra.mxu0 0.0
      %2913 = vmatprep.subr.mxu0 0.0
      %2914 = vmatpush1.msra.mxu0 0.0
      %2915 = vmatprep.subr.mxu0 0.0
      %2916 = vmatpush1.msra.mxu0 0.0
      %2917 = vmatprep.subr.mxu0 0.0
      %2918 = vmatpush1.msra.mxu0 0.0
      %2919 = vmatprep.subr.mxu0 0.0
      %2920 = vmatpush1.msra.mxu0 0.0
      %2921 = vmatprep.subr.mxu0 0.0
      %2922 = vmatpush1.msra.mxu0 0.0
      %2923 = vmatprep.subr.mxu0 0.0
      %2924 = vmatpush1.msra.mxu0 0.0
      %2925 = vmatprep.subr.mxu0 0.0
      %2926 = vmatpush1.msra.mxu0 0.0
      %2927 = vmatprep.subr.mxu0 0.0
      %2928 = vmatpush1.msra.mxu0 0.0
      %2929 = vmatprep.subr.mxu0 0.0
      %2930 = vmatpush1.msra.mxu0 0.0
      %2931 = vmatprep.mubr.f32.mxu0 0.0
      %2932 = vmatmul.mubr.f32.gmra.mrb[0].mxu0 %v2849
      %v2933 = vpop.f32.mrb[0].mxu0
      %v2934 = vadd.f32 0.0, %v2933
      %v2935 = vpop.f32.mrb[0].mxu0
      %2936 = vmatprep.mubr.f32.mxu0 0.0
      %2937 = vmatmul.mubr.f32.gmra.mrb[0].mxu0 %v2850
      %v2938 = vpop.f32.mrb[0].mxu0
      %v2939 = vadd.f32 0.0, %v2938
      %v2940 = vpop.f32.mrb[0].mxu0
      %2941 = vdwg.mxu0
      %2942 = vst [vmem:[%s243] sm:$0xff] %v2934
      %2943 = vst [vmem:[%s243 + $0x8] sm:$0xff] %v2939
      %s2944 = smul.u32 2, %s16
      %p2945 = scmp.lt.s32.totalorder %s2944, 3
      %s2946 = scalar_select %p2945, %s2944, 3
      %s2947 = smul.addr %s2946, 8
      %s2948 = scalar_lea.vmem %s5, %s2947
      // Predicated region
      $region41: #{medsam_lite_forward.1} parent=39 // pred_check
        %p2949 = pneg %p149
      $region42: #{medsam_lite_forward.1} parent=39 // pred_check_branch
        %2951 = sbr.rel (%p2949) target = $region44
      $region43: #{medsam_lite_forward.1} parent=39 // pred_region
        %s2952 = smul.u32 2, %s16
      $region44: #{medsam_lite_forward.1} parent=39 // pred_fallthru
        _
    $region40: #{medsam_lite_forward.1} parent=5 // pred_fallthru
      _
    %p2953 = scmp.le.s32.totalorder 2, %s11
    // Predicated region
    $region45: #{medsam_lite_forward.1} parent=5 // pred_check
      %p2954 = pneg %p2953
    $region46: #{medsam_lite_forward.1} parent=5 // pred_check_branch
      %2956 = sbr.rel (%p2954) target = $region48
    $region47: #{medsam_lite_forward.1} parent=5 // pred_region
      %s2957 = ssub.s32 %s11, 2
      // Predicated region
      $region49: #{medsam_lite_forward.1} parent=47 // pred_check
        %p2958 = pneg %p155
      $region50: #{medsam_lite_forward.1} parent=47 // pred_check_branch
        %2960 = sbr.rel (%p2958) target = $region52
      $region51: #{medsam_lite_forward.1} parent=47 // pred_region
        %s2961 = smul.u32 2, %s17
        %p2962 = scmp.lt.s32.totalorder %s2961, 3
        %s2963 = scalar_select %p2962, %s2961, 3
        %s2964 = smul.addr %s2963, 8
        %s2965 = scalar_lea.vmem %s5, %s2964
      $region52: #{medsam_lite_forward.1} parent=47 // pred_fallthru
        _
    $region48: #{medsam_lite_forward.1} parent=5 // pred_fallthru
      _
  $region6: #{medsam_lite_forward.1} parent=0 // loop_footer
    %s15 = sadd.s32 1, %s11
  $region7: #{medsam_lite_forward.1} parent=0 // loop_footer_branch
    %10 = sbr.rel target = $region3
  $region8: #{medsam_lite_forward.1} parent=0 // loop_exit
    _

</llo_original>
